<compile_context>
chip_gen: v7x
topology: tpu7x:2x2x1
jax: 0.10.0
libtpu: 0.0.40
codegen_flags: <defaults>
</compile_context>

<pallas_src>
import numpy as np
import jax
import jax.numpy as jnp
from jax.experimental import pallas as pl
from jax.experimental.pallas import tpu as pltpu


BRANCH_DILATIONS = (
    (1, 2, 4, 8, 16),  # dil1
    (1, 2, 4, 8),      # dil2
    (1, 2, 4),         # dil3
    (1, 2),            # dil4
    (1,),              # dil5
)


# ----------------------------------------------------------------------------
# Static schedule shared by the host-side weight packer and the kernel
# ----------------------------------------------------------------------------
def _build_plan(H):
    """For every conv, the ky row-offsets that touch at least one in-range row
    (offsets |o| >= H lie entirely inside the zero padding and are dropped),
    plus a flat pack index for its (L, L) block weight, plus the halo size."""
    plan, pk, Dy = [], 0, 0
    for dils in BRANCH_DILATIONS:
        bplan = []
        for d in dils:
            offs = [o for o in (-d, 0, d) if abs(o) < H]
            entries = []
            for o in offs:
                entries.append((o, pk))
                pk += 1
                Dy = max(Dy, abs(o))
            bplan.append((d, entries))
        plan.append(bplan)
    return plan, pk, Dy


# ----------------------------------------------------------------------------
# Host-side weight packing: 3x3 dilated convs -> banded (W*Cact, W*Cact) mats
# ----------------------------------------------------------------------------
def pack_params(params, H, W):
    """Build the block-banded per-(conv, ky) weights and per-branch fuse
    weights.  M[xin*Cact+ci, xout*Cact+co] = sum_kx [xin == xout+(kx-1)*d] *
    w[ky, kx, ci, co]; out-of-range xin blocks are simply absent, which
    implements the 'same' x-padding inside the matrix."""
    Cout = int(params["fuse"].shape[-1])
    Cin0 = int(params["branches"][0][0].shape[2])
    Cact = max(Cin0, Cout)
    L = W * Cact
    Lout = W * Cout
    plan, n_pack, _ = _build_plan(H)

    w_all = np.zeros((n_pack, L, L), np.float32)
    for bplan, branch_ws in zip(plan, params["branches"]):
        for (d, entries), w in zip(bplan, branch_ws):
            w = np.asarray(w, np.float32)                 # (3, 3, cin, Cout) HWIO
            cin = w.shape[2]
            wp = np.zeros((3, 3, Cact, Cact), np.float32)  # cin/cout padded to Cact
            wp[:, :, :cin, :Cout] = w
            for (off, pidx) in entries:
                ky = (off // d) + 1                        # -d -> 0, 0 -> 1, d -> 2
                M = np.zeros((L, L), np.float32)
                for kx in range(3):
                    s = (kx - 1) * d
                    if abs(s) < W:
                        S = np.eye(W, W, k=-s, dtype=np.float32)  # xin = xout + s
                        M += np.kron(S, wp[ky, kx])
                w_all[pidx] = M

    wf = np.asarray(params["fuse"], np.float32)            # (5*Cout, Cout)
    wf_all = np.zeros((5, L, Lout), np.float32)
    I = np.eye(W, dtype=np.float32)
    for b in range(5):
        blk = np.zeros((Cact, Cout), np.float32)
        blk[:Cout, :] = wf[b * Cout:(b + 1) * Cout, :]
        wf_all[b] = np.kron(I, blk)

    return {"w_all": jnp.asarray(w_all), "wf_all": jnp.asarray(wf_all)}


# ----------------------------------------------------------------------------
# Fused Pallas kernel (whole module for one batch element per grid step)
# ----------------------------------------------------------------------------
def _make_kernel(H, L, Lout, Dy, plan):
    Hp = H + 2 * Dy

    def kernel(x_ref, w_ref, wf_ref, o_ref, pad_ref):
        # x_ref  : (1, H, L)        input row-major (W, Cact) flattened to lanes
        # w_ref  : (n_pack, L, L)   banded per-(conv, ky) weights
        # wf_ref : (5, L, Lout)     block-diagonal per-branch 1x1 fuse weights
        # o_ref  : (1, H, Lout)     lane-dense output
        # pad_ref: (Hp, L) f32      y-halo scratch; halo rows stay zero

        # Zero only the 2*Dy halo rows (cheap, and done every step so a
        # megacore "parallel" split never sees an uninitialized halo).
        if Dy > 0:
            pad_ref[0:Dy, :] = jnp.zeros((Dy, L), jnp.float32)
            pad_ref[Dy + H:Hp, :] = jnp.zeros((Dy, L), jnp.float32)

        x = x_ref[0].astype(jnp.float32)                    # (H, L)
        facc = jnp.zeros((H, Lout), jnp.float32)            # fuse acc (registers)

        for b, bplan in enumerate(plan):
            cur = x                                          # branch restarts from input
            for (d, entries) in bplan:
                pad_ref[Dy:Dy + H, :] = cur
                acc = jnp.zeros((H, L), jnp.float32)
                for (off, pidx) in entries:                  # <= 3 MXU dots, K = L
                    acc = acc + jnp.dot(
                        pad_ref[Dy + off:Dy + off + H, :], w_ref[pidx],
                        preferred_element_type=jnp.float32)
                cur = acc
            # fused concat + 1x1: branch b hits its own block-diag fuse matrix
            facc = facc + jnp.dot(cur, wf_ref[b],
                                  preferred_element_type=jnp.float32)

        o_ref[0] = facc.astype(o_ref.dtype)

    return kernel


@jax.jit
def dilated_forward(packed, x_nhwc):
    """x_nhwc: (N, H, W, Cin) -> (N, H, W, Cout). Entire module in one kernel."""
    w_all, wf_all = packed["w_all"], packed["wf_all"]
    N, H, W, Cin = x_nhwc.shape
    n_pack, L, _ = w_all.shape
    Cact = L // W
    Lout = wf_all.shape[-1]
    Cout = Lout // W

    plan, n_pack2, Dy = _build_plan(H)
    assert n_pack2 == n_pack, "packed weights built for a different H"
    Hp = H + 2 * Dy

    # channel-pad to Cact and flatten (W, Cact) into lanes -> (N, H, W*Cact)
    x = jnp.pad(x_nhwc, ((0, 0), (0, 0), (0, 0), (0, Cact - Cin))).reshape(N, H, L)

    kernel = _make_kernel(H, L, Lout, Dy, plan)
    out = pl.pallas_call(
        kernel,
        out_shape=jax.ShapeDtypeStruct((N, H, Lout), x_nhwc.dtype),
        grid=(N,),
        in_specs=[
            pl.BlockSpec((1, H, L), lambda n: (n, 0, 0)),
            pl.BlockSpec(w_all.shape, lambda n: (0, 0, 0)),
            pl.BlockSpec(wf_all.shape, lambda n: (0, 0, 0)),
        ],
        out_specs=pl.BlockSpec((1, H, Lout), lambda n: (n, 0, 0)),
        scratch_shapes=[pltpu.VMEM((Hp, L), jnp.float32)],
        compiler_params=pltpu.CompilerParams(
            dimension_semantics=("parallel",),               # batch across TCs
        ),
    )(x, w_all, wf_all)

    return out.reshape(N, H, W, Cout)


# ----------------------------------------------------------------------------
# Parameters (deterministic synthetic weights, PyTorch-equivalent shapes)
# ----------------------------------------------------------------------------
def init_params(key, in_channels, out_channels):
    params = {"branches": [], "fuse": None}
    for dils in BRANCH_DILATIONS:
        ws = []
        for i, _ in enumerate(dils):
            cin = in_channels if i == 0 else out_channels
            key, sub = jax.random.split(key)
            fan_in = cin * 9
            w = jax.random.normal(sub, (3, 3, cin, out_channels), jnp.float32)
            ws.append(w * (1.0 / jnp.sqrt(fan_in)))
        params["branches"].append(ws)
    key, sub = jax.random.split(key)
    wf = jax.random.normal(sub, (5 * out_channels, out_channels), jnp.float32)
    params["fuse"] = wf * (1.0 / jnp.sqrt(5 * out_channels))
    return params


# ----------------------------------------------------------------------------
# Plain-JAX reference (full-precision) for the correctness check
# ----------------------------------------------------------------------------
def _ref_conv3x3(x, w, d):
    return jax.lax.conv_general_dilated(
        x, w, window_strides=(1, 1), padding=((d, d), (d, d)),
        rhs_dilation=(d, d),
        dimension_numbers=("NHWC", "HWIO", "NHWC"),
        precision=jax.lax.Precision.HIGHEST)


def dilated_forward_ref(params, x_nhwc):
    outs = []
    for ws, dils in zip(params["branches"], BRANCH_DILATIONS):
        h = x_nhwc
        for w, d in zip(ws, dils):
            h = _ref_conv3x3(h, w, d)
        outs.append(h)
    cat = jnp.concatenate(outs, axis=-1)
    Cout = params["fuse"].shape[-1]
    wf = params["fuse"].reshape(1, 1, 5 * Cout, Cout)
    return jax.lax.conv_general_dilated(
        cat, wf, (1, 1), "SAME",
        dimension_numbers=("NHWC", "HWIO", "NHWC"),
        precision=jax.lax.Precision.HIGHEST)


# ----------------------------------------------------------------------------
if __name__ == "__main__":
    key = jax.random.PRNGKey(0)
    N, Cin, H, W = 2, 4, 16, 16
    Cout = 8

    key, kx_, kp = jax.random.split(key, 3)
    # PyTorch-convention input is NCHW; transpose to kernel layout NHWC.
    x_nchw = jax.random.normal(kx_, (N, Cin, H, W), jnp.float32)
    x_nhwc = jnp.transpose(x_nchw, (0, 2, 3, 1))

    params = init_params(kp, Cin, Cout)
    packed = pack_params(params, H, W)

    out = jax.block_until_ready(dilated_forward(packed, x_nhwc))
    assert out.shape == (N, H, W, Cout)

    ref = jax.block_until_ready(dilated_forward_ref(params, x_nhwc))
    max_err = float(jnp.max(jnp.abs(out - ref)))
    assert jnp.allclose(out, ref, rtol=1e-4, atol=1e-4), f"mismatch, max_err={max_err}"

    print("KERNEL_OK")
</pallas_src>

<mosaic_0001>
module attributes {stable_mosaic.version = 11 : i64} {
  func.func @kernel(%arg0: i32, %arg1: memref<1x16x128xf32, #tpu.memory_space<vmem>>, %arg2: memref<43x128x128xf32, #tpu.memory_space<vmem>>, %arg3: memref<5x128x128xf32, #tpu.memory_space<vmem>>, %arg4: memref<1x16x128xf32, #tpu.memory_space<vmem>>, %arg5: memref<32x128xf32, #tpu.memory_space<vmem>>) attributes {dimension_semantics = [#tpu.dimension_semantics<parallel>], iteration_bounds = array<i64: 2>, scalar_prefetch = 0 : i64, scratch_operands = 1 : i64, tpu.core_type = #tpu.core_type<tc>, window_params = [{transform_indices = @transform_0, window_bounds = array<i64: 1, 16, 128>}, {pipeline_mode = #tpu.pipeline_mode<synchronous>, transform_indices = @transform_1, window_bounds = array<i64: 43, 128, 128>}, {pipeline_mode = #tpu.pipeline_mode<synchronous>, transform_indices = @transform_2, window_bounds = array<i64: 5, 128, 128>}, {transform_indices = @transform_3, window_bounds = array<i64: 1, 16, 128>}]} {
    %cst = arith.constant 0.000000e+00 : f32
    %0 = vector.broadcast %cst : f32 to vector<8x128xf32>
    %c0 = arith.constant 0 : index
    %c0_0 = arith.constant 0 : index
    %1 = vector.load %arg5[%c0, %c0_0] : memref<32x128xf32, #tpu.memory_space<vmem>>, vector<8x128xf32>
    tpu.vector_store %arg5[%c0, %c0_0], %0 {strides = array<i32>} : memref<32x128xf32, #tpu.memory_space<vmem>>, vector<8x128xf32>,
    %cst_1 = arith.constant 0.000000e+00 : f32
    %2 = vector.broadcast %cst_1 : f32 to vector<8x128xf32>
    %c24 = arith.constant 24 : index
    %c0_2 = arith.constant 0 : index
    %3 = vector.load %arg5[%c24, %c0_2] : memref<32x128xf32, #tpu.memory_space<vmem>>, vector<8x128xf32>
    tpu.vector_store %arg5[%c24, %c0_2], %2 {strides = array<i32>} : memref<32x128xf32, #tpu.memory_space<vmem>>, vector<8x128xf32>,
    %c0_3 = arith.constant 0 : index
    %c0_4 = arith.constant 0 : index
    %c0_5 = arith.constant 0 : index
    %4 = vector.load %arg1[%c0_3, %c0_4, %c0_5] : memref<1x16x128xf32, #tpu.memory_space<vmem>>, vector<1x16x128xf32>
    %5 = vector.shape_cast %4 : vector<1x16x128xf32> to vector<16x128xf32>
    %cst_6 = arith.constant 0.000000e+00 : f32
    %6 = vector.broadcast %cst_6 : f32 to vector<16x128xf32>
    %c8 = arith.constant 8 : index
    %c0_7 = arith.constant 0 : index
    %7 = vector.load %arg5[%c8, %c0_7] : memref<32x128xf32, #tpu.memory_space<vmem>>, vector<16x128xf32>
    tpu.vector_store %arg5[%c8, %c0_7], %5 {strides = array<i32>} : memref<32x128xf32, #tpu.memory_space<vmem>>, vector<16x128xf32>,
    %cst_8 = arith.constant 0.000000e+00 : f32
    %8 = vector.broadcast %cst_8 : f32 to vector<16x128xf32>
    %c7 = arith.constant 7 : index
    %c0_9 = arith.constant 0 : index
    %9 = vector.load %arg5[%c7, %c0_9] : memref<32x128xf32, #tpu.memory_space<vmem>>, vector<16x128xf32>
    %c0_10 = arith.constant 0 : index
    %c0_11 = arith.constant 0 : index
    %c0_12 = arith.constant 0 : index
    %10 = vector.load %arg2[%c0_10, %c0_11, %c0_12] : memref<43x128x128xf32, #tpu.memory_space<vmem>>, vector<1x128x128xf32>
    %11 = vector.shape_cast %10 : vector<1x128x128xf32> to vector<128x128xf32>
    %cst_13 = arith.constant dense<0.000000e+00> : vector<16x128xf32>
    %12 = tpu.matmul %9, %11, %cst_13 {dimension_numbers = #tpu.dot_dimension_numbers<[1], [0], [0], [1], [0, 0, 1, 1], [], []>} : vector<16x128xf32>, vector<128x128xf32>, vector<16x128xf32> -> vector<16x128xf32>
    %13 = arith.addf %8, %12 : vector<16x128xf32>
    %c8_14 = arith.constant 8 : index
    %c0_15 = arith.constant 0 : index
    %14 = vector.load %arg5[%c8_14, %c0_15] : memref<32x128xf32, #tpu.memory_space<vmem>>, vector<16x128xf32>
    %c1 = arith.constant 1 : index
    %c0_16 = arith.constant 0 : index
    %c0_17 = arith.constant 0 : index
    %15 = vector.load %arg2[%c1, %c0_16, %c0_17] : memref<43x128x128xf32, #tpu.memory_space<vmem>>, vector<1x128x128xf32>
    %16 = vector.shape_cast %15 : vector<1x128x128xf32> to vector<128x128xf32>
    %cst_18 = arith.constant dense<0.000000e+00> : vector<16x128xf32>
    %17 = tpu.matmul %14, %16, %cst_18 {dimension_numbers = #tpu.dot_dimension_numbers<[1], [0], [0], [1], [0, 0, 1, 1], [], []>} : vector<16x128xf32>, vector<128x128xf32>, vector<16x128xf32> -> vector<16x128xf32>
    %18 = arith.addf %13, %17 : vector<16x128xf32>
    %c9 = arith.constant 9 : index
    %c0_19 = arith.constant 0 : index
    %19 = vector.load %arg5[%c9, %c0_19] : memref<32x128xf32, #tpu.memory_space<vmem>>, vector<16x128xf32>
    %c2 = arith.constant 2 : index
    %c0_20 = arith.constant 0 : index
    %c0_21 = arith.constant 0 : index
    %20 = vector.load %arg2[%c2, %c0_20, %c0_21] : memref<43x128x128xf32, #tpu.memory_space<vmem>>, vector<1x128x128xf32>
    %21 = vector.shape_cast %20 : vector<1x128x128xf32> to vector<128x128xf32>
    %cst_22 = arith.constant dense<0.000000e+00> : vector<16x128xf32>
    %22 = tpu.matmul %19, %21, %cst_22 {dimension_numbers = #tpu.dot_dimension_numbers<[1], [0], [0], [1], [0, 0, 1, 1], [], []>} : vector<16x128xf32>, vector<128x128xf32>, vector<16x128xf32> -> vector<16x128xf32>
    %23 = arith.addf %18, %22 : vector<16x128xf32>
    %c8_23 = arith.constant 8 : index
    %c0_24 = arith.constant 0 : index
    %24 = vector.load %arg5[%c8_23, %c0_24] : memref<32x128xf32, #tpu.memory_space<vmem>>, vector<16x128xf32>
    tpu.vector_store %arg5[%c8_23, %c0_24], %23 {strides = array<i32>} : memref<32x128xf32, #tpu.memory_space<vmem>>, vector<16x128xf32>,
    %cst_25 = arith.constant 0.000000e+00 : f32
    %25 = vector.broadcast %cst_25 : f32 to vector<16x128xf32>
    %c6 = arith.constant 6 : index
    %c0_26 = arith.constant 0 : index
    %26 = vector.load %arg5[%c6, %c0_26] : memref<32x128xf32, #tpu.memory_space<vmem>>, vector<16x128xf32>
    %c3 = arith.constant 3 : index
    %c0_27 = arith.constant 0 : index
    %c0_28 = arith.constant 0 : index
    %27 = vector.load %arg2[%c3, %c0_27, %c0_28] : memref<43x128x128xf32, #tpu.memory_space<vmem>>, vector<1x128x128xf32>
    %28 = vector.shape_cast %27 : vector<1x128x128xf32> to vector<128x128xf32>
    %cst_29 = arith.constant dense<0.000000e+00> : vector<16x128xf32>
    %29 = tpu.matmul %26, %28, %cst_29 {dimension_numbers = #tpu.dot_dimension_numbers<[1], [0], [0], [1], [0, 0, 1, 1], [], []>} : vector<16x128xf32>, vector<128x128xf32>, vector<16x128xf32> -> vector<16x128xf32>
    %30 = arith.addf %25, %29 : vector<16x128xf32>
    %c8_30 = arith.constant 8 : index
    %c0_31 = arith.constant 0 : index
    %31 = vector.load %arg5[%c8_30, %c0_31] : memref<32x128xf32, #tpu.memory_space<vmem>>, vector<16x128xf32>
    %c4 = arith.constant 4 : index
    %c0_32 = arith.constant 0 : index
    %c0_33 = arith.constant 0 : index
    %32 = vector.load %arg2[%c4, %c0_32, %c0_33] : memref<43x128x128xf32, #tpu.memory_space<vmem>>, vector<1x128x128xf32>
    %33 = vector.shape_cast %32 : vector<1x128x128xf32> to vector<128x128xf32>
    %cst_34 = arith.constant dense<0.000000e+00> : vector<16x128xf32>
    %34 = tpu.matmul %31, %33, %cst_34 {dimension_numbers = #tpu.dot_dimension_numbers<[1], [0], [0], [1], [0, 0, 1, 1], [], []>} : vector<16x128xf32>, vector<128x128xf32>, vector<16x128xf32> -> vector<16x128xf32>
    %35 = arith.addf %30, %34 : vector<16x128xf32>
    %c10 = arith.constant 10 : index
    %c0_35 = arith.constant 0 : index
    %36 = vector.load %arg5[%c10, %c0_35] : memref<32x128xf32, #tpu.memory_space<vmem>>, vector<16x128xf32>
    %c5 = arith.constant 5 : index
    %c0_36 = arith.constant 0 : index
    %c0_37 = arith.constant 0 : index
    %37 = vector.load %arg2[%c5, %c0_36, %c0_37] : memref<43x128x128xf32, #tpu.memory_space<vmem>>, vector<1x128x128xf32>
    %38 = vector.shape_cast %37 : vector<1x128x128xf32> to vector<128x128xf32>
    %cst_38 = arith.constant dense<0.000000e+00> : vector<16x128xf32>
    %39 = tpu.matmul %36, %38, %cst_38 {dimension_numbers = #tpu.dot_dimension_numbers<[1], [0], [0], [1], [0, 0, 1, 1], [], []>} : vector<16x128xf32>, vector<128x128xf32>, vector<16x128xf32> -> vector<16x128xf32>
    %40 = arith.addf %35, %39 : vector<16x128xf32>
    %c8_39 = arith.constant 8 : index
    %c0_40 = arith.constant 0 : index
    %41 = vector.load %arg5[%c8_39, %c0_40] : memref<32x128xf32, #tpu.memory_space<vmem>>, vector<16x128xf32>
    tpu.vector_store %arg5[%c8_39, %c0_40], %40 {strides = array<i32>} : memref<32x128xf32, #tpu.memory_space<vmem>>, vector<16x128xf32>,
    %cst_41 = arith.constant 0.000000e+00 : f32
    %42 = vector.broadcast %cst_41 : f32 to vector<16x128xf32>
    %c4_42 = arith.constant 4 : index
    %c0_43 = arith.constant 0 : index
    %43 = vector.load %arg5[%c4_42, %c0_43] : memref<32x128xf32, #tpu.memory_space<vmem>>, vector<16x128xf32>
    %c6_44 = arith.constant 6 : index
    %c0_45 = arith.constant 0 : index
    %c0_46 = arith.constant 0 : index
    %44 = vector.load %arg2[%c6_44, %c0_45, %c0_46] : memref<43x128x128xf32, #tpu.memory_space<vmem>>, vector<1x128x128xf32>
    %45 = vector.shape_cast %44 : vector<1x128x128xf32> to vector<128x128xf32>
    %cst_47 = arith.constant dense<0.000000e+00> : vector<16x128xf32>
    %46 = tpu.matmul %43, %45, %cst_47 {dimension_numbers = #tpu.dot_dimension_numbers<[1], [0], [0], [1], [0, 0, 1, 1], [], []>} : vector<16x128xf32>, vector<128x128xf32>, vector<16x128xf32> -> vector<16x128xf32>
    %47 = arith.addf %42, %46 : vector<16x128xf32>
    %c8_48 = arith.constant 8 : index
    %c0_49 = arith.constant 0 : index
    %48 = vector.load %arg5[%c8_48, %c0_49] : memref<32x128xf32, #tpu.memory_space<vmem>>, vector<16x128xf32>
    %c7_50 = arith.constant 7 : index
    %c0_51 = arith.constant 0 : index
    %c0_52 = arith.constant 0 : index
    %49 = vector.load %arg2[%c7_50, %c0_51, %c0_52] : memref<43x128x128xf32, #tpu.memory_space<vmem>>, vector<1x128x128xf32>
    %50 = vector.shape_cast %49 : vector<1x128x128xf32> to vector<128x128xf32>
    %cst_53 = arith.constant dense<0.000000e+00> : vector<16x128xf32>
    %51 = tpu.matmul %48, %50, %cst_53 {dimension_numbers = #tpu.dot_dimension_numbers<[1], [0], [0], [1], [0, 0, 1, 1], [], []>} : vector<16x128xf32>, vector<128x128xf32>, vector<16x128xf32> -> vector<16x128xf32>
    %52 = arith.addf %47, %51 : vector<16x128xf32>
    %c12 = arith.constant 12 : index
    %c0_54 = arith.constant 0 : index
    %53 = vector.load %arg5[%c12, %c0_54] : memref<32x128xf32, #tpu.memory_space<vmem>>, vector<16x128xf32>
    %c8_55 = arith.constant 8 : index
    %c0_56 = arith.constant 0 : index
    %c0_57 = arith.constant 0 : index
    %54 = vector.load %arg2[%c8_55, %c0_56, %c0_57] : memref<43x128x128xf32, #tpu.memory_space<vmem>>, vector<1x128x128xf32>
    %55 = vector.shape_cast %54 : vector<1x128x128xf32> to vector<128x128xf32>
    %cst_58 = arith.constant dense<0.000000e+00> : vector<16x128xf32>
    %56 = tpu.matmul %53, %55, %cst_58 {dimension_numbers = #tpu.dot_dimension_numbers<[1], [0], [0], [1], [0, 0, 1, 1], [], []>} : vector<16x128xf32>, vector<128x128xf32>, vector<16x128xf32> -> vector<16x128xf32>
    %57 = arith.addf %52, %56 : vector<16x128xf32>
    %c8_59 = arith.constant 8 : index
    %c0_60 = arith.constant 0 : index
    %58 = vector.load %arg5[%c8_59, %c0_60] : memref<32x128xf32, #tpu.memory_space<vmem>>, vector<16x128xf32>
    tpu.vector_store %arg5[%c8_59, %c0_60], %57 {strides = array<i32>} : memref<32x128xf32, #tpu.memory_space<vmem>>, vector<16x128xf32>,
    %cst_61 = arith.constant 0.000000e+00 : f32
    %59 = vector.broadcast %cst_61 : f32 to vector<16x128xf32>
    %c0_62 = arith.constant 0 : index
    %c0_63 = arith.constant 0 : index
    %60 = vector.load %arg5[%c0_62, %c0_63] : memref<32x128xf32, #tpu.memory_space<vmem>>, vector<16x128xf32>
    %c9_64 = arith.constant 9 : index
    %c0_65 = arith.constant 0 : index
    %c0_66 = arith.constant 0 : index
    %61 = vector.load %arg2[%c9_64, %c0_65, %c0_66] : memref<43x128x128xf32, #tpu.memory_space<vmem>>, vector<1x128x128xf32>
    %62 = vector.shape_cast %61 : vector<1x128x128xf32> to vector<128x128xf32>
    %cst_67 = arith.constant dense<0.000000e+00> : vector<16x128xf32>
    %63 = tpu.matmul %60, %62, %cst_67 {dimension_numbers = #tpu.dot_dimension_numbers<[1], [0], [0], [1], [0, 0, 1, 1], [], []>} : vector<16x128xf32>, vector<128x128xf32>, vector<16x128xf32> -> vector<16x128xf32>
    %64 = arith.addf %59, %63 : vector<16x128xf32>
    %c8_68 = arith.constant 8 : index
    %c0_69 = arith.constant 0 : index
    %65 = vector.load %arg5[%c8_68, %c0_69] : memref<32x128xf32, #tpu.memory_space<vmem>>, vector<16x128xf32>
    %c10_70 = arith.constant 10 : index
    %c0_71 = arith.constant 0 : index
    %c0_72 = arith.constant 0 : index
    %66 = vector.load %arg2[%c10_70, %c0_71, %c0_72] : memref<43x128x128xf32, #tpu.memory_space<vmem>>, vector<1x128x128xf32>
    %67 = vector.shape_cast %66 : vector<1x128x128xf32> to vector<128x128xf32>
    %cst_73 = arith.constant dense<0.000000e+00> : vector<16x128xf32>
    %68 = tpu.matmul %65, %67, %cst_73 {dimension_numbers = #tpu.dot_dimension_numbers<[1], [0], [0], [1], [0, 0, 1, 1], [], []>} : vector<16x128xf32>, vector<128x128xf32>, vector<16x128xf32> -> vector<16x128xf32>
    %69 = arith.addf %64, %68 : vector<16x128xf32>
    %c16 = arith.constant 16 : index
    %c0_74 = arith.constant 0 : index
    %70 = vector.load %arg5[%c16, %c0_74] : memref<32x128xf32, #tpu.memory_space<vmem>>, vector<16x128xf32>
    %c11 = arith.constant 11 : index
    %c0_75 = arith.constant 0 : index
    %c0_76 = arith.constant 0 : index
    %71 = vector.load %arg2[%c11, %c0_75, %c0_76] : memref<43x128x128xf32, #tpu.memory_space<vmem>>, vector<1x128x128xf32>
    %72 = vector.shape_cast %71 : vector<1x128x128xf32> to vector<128x128xf32>
    %cst_77 = arith.constant dense<0.000000e+00> : vector<16x128xf32>
    %73 = tpu.matmul %70, %72, %cst_77 {dimension_numbers = #tpu.dot_dimension_numbers<[1], [0], [0], [1], [0, 0, 1, 1], [], []>} : vector<16x128xf32>, vector<128x128xf32>, vector<16x128xf32> -> vector<16x128xf32>
    %74 = arith.addf %69, %73 : vector<16x128xf32>
    %c8_78 = arith.constant 8 : index
    %c0_79 = arith.constant 0 : index
    %75 = vector.load %arg5[%c8_78, %c0_79] : memref<32x128xf32, #tpu.memory_space<vmem>>, vector<16x128xf32>
    tpu.vector_store %arg5[%c8_78, %c0_79], %74 {strides = array<i32>} : memref<32x128xf32, #tpu.memory_space<vmem>>, vector<16x128xf32>,
    %cst_80 = arith.constant 0.000000e+00 : f32
    %76 = vector.broadcast %cst_80 : f32 to vector<16x128xf32>
    %c8_81 = arith.constant 8 : index
    %c0_82 = arith.constant 0 : index
    %77 = vector.load %arg5[%c8_81, %c0_82] : memref<32x128xf32, #tpu.memory_space<vmem>>, vector<16x128xf32>
    %c12_83 = arith.constant 12 : index
    %c0_84 = arith.constant 0 : index
    %c0_85 = arith.constant 0 : index
    %78 = vector.load %arg2[%c12_83, %c0_84, %c0_85] : memref<43x128x128xf32, #tpu.memory_space<vmem>>, vector<1x128x128xf32>
    %79 = vector.shape_cast %78 : vector<1x128x128xf32> to vector<128x128xf32>
    %cst_86 = arith.constant dense<0.000000e+00> : vector<16x128xf32>
    %80 = tpu.matmul %77, %79, %cst_86 {dimension_numbers = #tpu.dot_dimension_numbers<[1], [0], [0], [1], [0, 0, 1, 1], [], []>} : vector<16x128xf32>, vector<128x128xf32>, vector<16x128xf32> -> vector<16x128xf32>
    %81 = arith.addf %76, %80 : vector<16x128xf32>
    %c0_87 = arith.constant 0 : index
    %c0_88 = arith.constant 0 : index
    %c0_89 = arith.constant 0 : index
    %82 = vector.load %arg3[%c0_87, %c0_88, %c0_89] : memref<5x128x128xf32, #tpu.memory_space<vmem>>, vector<1x128x128xf32>
    %83 = vector.shape_cast %82 : vector<1x128x128xf32> to vector<128x128xf32>
    %cst_90 = arith.constant dense<0.000000e+00> : vector<16x128xf32>
    %84 = tpu.matmul %81, %83, %cst_90 {dimension_numbers = #tpu.dot_dimension_numbers<[1], [0], [0], [1], [0, 0, 1, 1], [], []>} : vector<16x128xf32>, vector<128x128xf32>, vector<16x128xf32> -> vector<16x128xf32>
    %85 = arith.addf %6, %84 : vector<16x128xf32>
    %c8_91 = arith.constant 8 : index
    %c0_92 = arith.constant 0 : index
    %86 = vector.load %arg5[%c8_91, %c0_92] : memref<32x128xf32, #tpu.memory_space<vmem>>, vector<16x128xf32>
    tpu.vector_store %arg5[%c8_91, %c0_92], %5 {strides = array<i32>} : memref<32x128xf32, #tpu.memory_space<vmem>>, vector<16x128xf32>,
    %cst_93 = arith.constant 0.000000e+00 : f32
    %87 = vector.broadcast %cst_93 : f32 to vector<16x128xf32>
    %c7_94 = arith.constant 7 : index
    %c0_95 = arith.constant 0 : index
    %88 = vector.load %arg5[%c7_94, %c0_95] : memref<32x128xf32, #tpu.memory_space<vmem>>, vector<16x128xf32>
    %c13 = arith.constant 13 : index
    %c0_96 = arith.constant 0 : index
    %c0_97 = arith.constant 0 : index
    %89 = vector.load %arg2[%c13, %c0_96, %c0_97] : memref<43x128x128xf32, #tpu.memory_space<vmem>>, vector<1x128x128xf32>
    %90 = vector.shape_cast %89 : vector<1x128x128xf32> to vector<128x128xf32>
    %cst_98 = arith.constant dense<0.000000e+00> : vector<16x128xf32>
    %91 = tpu.matmul %88, %90, %cst_98 {dimension_numbers = #tpu.dot_dimension_numbers<[1], [0], [0], [1], [0, 0, 1, 1], [], []>} : vector<16x128xf32>, vector<128x128xf32>, vector<16x128xf32> -> vector<16x128xf32>
    %92 = arith.addf %87, %91 : vector<16x128xf32>
    %c8_99 = arith.constant 8 : index
    %c0_100 = arith.constant 0 : index
    %93 = vector.load %arg5[%c8_99, %c0_100] : memref<32x128xf32, #tpu.memory_space<vmem>>, vector<16x128xf32>
    %c14 = arith.constant 14 : index
    %c0_101 = arith.constant 0 : index
    %c0_102 = arith.constant 0 : index
    %94 = vector.load %arg2[%c14, %c0_101, %c0_102] : memref<43x128x128xf32, #tpu.memory_space<vmem>>, vector<1x128x128xf32>
    %95 = vector.shape_cast %94 : vector<1x128x128xf32> to vector<128x128xf32>
    %cst_103 = arith.constant dense<0.000000e+00> : vector<16x128xf32>
    %96 = tpu.matmul %93, %95, %cst_103 {dimension_numbers = #tpu.dot_dimension_numbers<[1], [0], [0], [1], [0, 0, 1, 1], [], []>} : vector<16x128xf32>, vector<128x128xf32>, vector<16x128xf32> -> vector<16x128xf32>
    %97 = arith.addf %92, %96 : vector<16x128xf32>
    %c9_104 = arith.constant 9 : index
    %c0_105 = arith.constant 0 : index
    %98 = vector.load %arg5[%c9_104, %c0_105] : memref<32x128xf32, #tpu.memory_space<vmem>>, vector<16x128xf32>
    %c15 = arith.constant 15 : index
    %c0_106 = arith.constant 0 : index
    %c0_107 = arith.constant 0 : index
    %99 = vector.load %arg2[%c15, %c0_106, %c0_107] : memref<43x128x128xf32, #tpu.memory_space<vmem>>, vector<1x128x128xf32>
    %100 = vector.shape_cast %99 : vector<1x128x128xf32> to vector<128x128xf32>
    %cst_108 = arith.constant dense<0.000000e+00> : vector<16x128xf32>
    %101 = tpu.matmul %98, %100, %cst_108 {dimension_numbers = #tpu.dot_dimension_numbers<[1], [0], [0], [1], [0, 0, 1, 1], [], []>} : vector<16x128xf32>, vector<128x128xf32>, vector<16x128xf32> -> vector<16x128xf32>
    %102 = arith.addf %97, %101 : vector<16x128xf32>
    %c8_109 = arith.constant 8 : index
    %c0_110 = arith.constant 0 : index
    %103 = vector.load %arg5[%c8_109, %c0_110] : memref<32x128xf32, #tpu.memory_space<vmem>>, vector<16x128xf32>
    tpu.vector_store %arg5[%c8_109, %c0_110], %102 {strides = array<i32>} : memref<32x128xf32, #tpu.memory_space<vmem>>, vector<16x128xf32>,
    %cst_111 = arith.constant 0.000000e+00 : f32
    %104 = vector.broadcast %cst_111 : f32 to vector<16x128xf32>
    %c6_112 = arith.constant 6 : index
    %c0_113 = arith.constant 0 : index
    %105 = vector.load %arg5[%c6_112, %c0_113] : memref<32x128xf32, #tpu.memory_space<vmem>>, vector<16x128xf32>
    %c16_114 = arith.constant 16 : index
    %c0_115 = arith.constant 0 : index
    %c0_116 = arith.constant 0 : index
    %106 = vector.load %arg2[%c16_114, %c0_115, %c0_116] : memref<43x128x128xf32, #tpu.memory_space<vmem>>, vector<1x128x128xf32>
    %107 = vector.shape_cast %106 : vector<1x128x128xf32> to vector<128x128xf32>
    %cst_117 = arith.constant dense<0.000000e+00> : vector<16x128xf32>
    %108 = tpu.matmul %105, %107, %cst_117 {dimension_numbers = #tpu.dot_dimension_numbers<[1], [0], [0], [1], [0, 0, 1, 1], [], []>} : vector<16x128xf32>, vector<128x128xf32>, vector<16x128xf32> -> vector<16x128xf32>
    %109 = arith.addf %104, %108 : vector<16x128xf32>
    %c8_118 = arith.constant 8 : index
    %c0_119 = arith.constant 0 : index
    %110 = vector.load %arg5[%c8_118, %c0_119] : memref<32x128xf32, #tpu.memory_space<vmem>>, vector<16x128xf32>
    %c17 = arith.constant 17 : index
    %c0_120 = arith.constant 0 : index
    %c0_121 = arith.constant 0 : index
    %111 = vector.load %arg2[%c17, %c0_120, %c0_121] : memref<43x128x128xf32, #tpu.memory_space<vmem>>, vector<1x128x128xf32>
    %112 = vector.shape_cast %111 : vector<1x128x128xf32> to vector<128x128xf32>
    %cst_122 = arith.constant dense<0.000000e+00> : vector<16x128xf32>
    %113 = tpu.matmul %110, %112, %cst_122 {dimension_numbers = #tpu.dot_dimension_numbers<[1], [0], [0], [1], [0, 0, 1, 1], [], []>} : vector<16x128xf32>, vector<128x128xf32>, vector<16x128xf32> -> vector<16x128xf32>
    %114 = arith.addf %109, %113 : vector<16x128xf32>
    %c10_123 = arith.constant 10 : index
    %c0_124 = arith.constant 0 : index
    %115 = vector.load %arg5[%c10_123, %c0_124] : memref<32x128xf32, #tpu.memory_space<vmem>>, vector<16x128xf32>
    %c18 = arith.constant 18 : index
    %c0_125 = arith.constant 0 : index
    %c0_126 = arith.constant 0 : index
    %116 = vector.load %arg2[%c18, %c0_125, %c0_126] : memref<43x128x128xf32, #tpu.memory_space<vmem>>, vector<1x128x128xf32>
    %117 = vector.shape_cast %116 : vector<1x128x128xf32> to vector<128x128xf32>
    %cst_127 = arith.constant dense<0.000000e+00> : vector<16x128xf32>
    %118 = tpu.matmul %115, %117, %cst_127 {dimension_numbers = #tpu.dot_dimension_numbers<[1], [0], [0], [1], [0, 0, 1, 1], [], []>} : vector<16x128xf32>, vector<128x128xf32>, vector<16x128xf32> -> vector<16x128xf32>
    %119 = arith.addf %114, %118 : vector<16x128xf32>
    %c8_128 = arith.constant 8 : index
    %c0_129 = arith.constant 0 : index
    %120 = vector.load %arg5[%c8_128, %c0_129] : memref<32x128xf32, #tpu.memory_space<vmem>>, vector<16x128xf32>
    tpu.vector_store %arg5[%c8_128, %c0_129], %119 {strides = array<i32>} : memref<32x128xf32, #tpu.memory_space<vmem>>, vector<16x128xf32>,
    %cst_130 = arith.constant 0.000000e+00 : f32
    %121 = vector.broadcast %cst_130 : f32 to vector<16x128xf32>
    %c4_131 = arith.constant 4 : index
    %c0_132 = arith.constant 0 : index
    %122 = vector.load %arg5[%c4_131, %c0_132] : memref<32x128xf32, #tpu.memory_space<vmem>>, vector<16x128xf32>
    %c19 = arith.constant 19 : index
    %c0_133 = arith.constant 0 : index
    %c0_134 = arith.constant 0 : index
    %123 = vector.load %arg2[%c19, %c0_133, %c0_134] : memref<43x128x128xf32, #tpu.memory_space<vmem>>, vector<1x128x128xf32>
    %124 = vector.shape_cast %123 : vector<1x128x128xf32> to vector<128x128xf32>
    %cst_135 = arith.constant dense<0.000000e+00> : vector<16x128xf32>
    %125 = tpu.matmul %122, %124, %cst_135 {dimension_numbers = #tpu.dot_dimension_numbers<[1], [0], [0], [1], [0, 0, 1, 1], [], []>} : vector<16x128xf32>, vector<128x128xf32>, vector<16x128xf32> -> vector<16x128xf32>
    %126 = arith.addf %121, %125 : vector<16x128xf32>
    %c8_136 = arith.constant 8 : index
    %c0_137 = arith.constant 0 : index
    %127 = vector.load %arg5[%c8_136, %c0_137] : memref<32x128xf32, #tpu.memory_space<vmem>>, vector<16x128xf32>
    %c20 = arith.constant 20 : index
    %c0_138 = arith.constant 0 : index
    %c0_139 = arith.constant 0 : index
    %128 = vector.load %arg2[%c20, %c0_138, %c0_139] : memref<43x128x128xf32, #tpu.memory_space<vmem>>, vector<1x128x128xf32>
    %129 = vector.shape_cast %128 : vector<1x128x128xf32> to vector<128x128xf32>
    %cst_140 = arith.constant dense<0.000000e+00> : vector<16x128xf32>
    %130 = tpu.matmul %127, %129, %cst_140 {dimension_numbers = #tpu.dot_dimension_numbers<[1], [0], [0], [1], [0, 0, 1, 1], [], []>} : vector<16x128xf32>, vector<128x128xf32>, vector<16x128xf32> -> vector<16x128xf32>
    %131 = arith.addf %126, %130 : vector<16x128xf32>
    %c12_141 = arith.constant 12 : index
    %c0_142 = arith.constant 0 : index
    %132 = vector.load %arg5[%c12_141, %c0_142] : memref<32x128xf32, #tpu.memory_space<vmem>>, vector<16x128xf32>
    %c21 = arith.constant 21 : index
    %c0_143 = arith.constant 0 : index
    %c0_144 = arith.constant 0 : index
    %133 = vector.load %arg2[%c21, %c0_143, %c0_144] : memref<43x128x128xf32, #tpu.memory_space<vmem>>, vector<1x128x128xf32>
    %134 = vector.shape_cast %133 : vector<1x128x128xf32> to vector<128x128xf32>
    %cst_145 = arith.constant dense<0.000000e+00> : vector<16x128xf32>
    %135 = tpu.matmul %132, %134, %cst_145 {dimension_numbers = #tpu.dot_dimension_numbers<[1], [0], [0], [1], [0, 0, 1, 1], [], []>} : vector<16x128xf32>, vector<128x128xf32>, vector<16x128xf32> -> vector<16x128xf32>
    %136 = arith.addf %131, %135 : vector<16x128xf32>
    %c8_146 = arith.constant 8 : index
    %c0_147 = arith.constant 0 : index
    %137 = vector.load %arg5[%c8_146, %c0_147] : memref<32x128xf32, #tpu.memory_space<vmem>>, vector<16x128xf32>
    tpu.vector_store %arg5[%c8_146, %c0_147], %136 {strides = array<i32>} : memref<32x128xf32, #tpu.memory_space<vmem>>, vector<16x128xf32>,
    %cst_148 = arith.constant 0.000000e+00 : f32
    %138 = vector.broadcast %cst_148 : f32 to vector<16x128xf32>
    %c0_149 = arith.constant 0 : index
    %c0_150 = arith.constant 0 : index
    %139 = vector.load %arg5[%c0_149, %c0_150] : memref<32x128xf32, #tpu.memory_space<vmem>>, vector<16x128xf32>
    %c22 = arith.constant 22 : index
    %c0_151 = arith.constant 0 : index
    %c0_152 = arith.constant 0 : index
    %140 = vector.load %arg2[%c22, %c0_151, %c0_152] : memref<43x128x128xf32, #tpu.memory_space<vmem>>, vector<1x128x128xf32>
    %141 = vector.shape_cast %140 : vector<1x128x128xf32> to vector<128x128xf32>
    %cst_153 = arith.constant dense<0.000000e+00> : vector<16x128xf32>
    %142 = tpu.matmul %139, %141, %cst_153 {dimension_numbers = #tpu.dot_dimension_numbers<[1], [0], [0], [1], [0, 0, 1, 1], [], []>} : vector<16x128xf32>, vector<128x128xf32>, vector<16x128xf32> -> vector<16x128xf32>
    %143 = arith.addf %138, %142 : vector<16x128xf32>
    %c8_154 = arith.constant 8 : index
    %c0_155 = arith.constant 0 : index
    %144 = vector.load %arg5[%c8_154, %c0_155] : memref<32x128xf32, #tpu.memory_space<vmem>>, vector<16x128xf32>
    %c23 = arith.constant 23 : index
    %c0_156 = arith.constant 0 : index
    %c0_157 = arith.constant 0 : index
    %145 = vector.load %arg2[%c23, %c0_156, %c0_157] : memref<43x128x128xf32, #tpu.memory_space<vmem>>, vector<1x128x128xf32>
    %146 = vector.shape_cast %145 : vector<1x128x128xf32> to vector<128x128xf32>
    %cst_158 = arith.constant dense<0.000000e+00> : vector<16x128xf32>
    %147 = tpu.matmul %144, %146, %cst_158 {dimension_numbers = #tpu.dot_dimension_numbers<[1], [0], [0], [1], [0, 0, 1, 1], [], []>} : vector<16x128xf32>, vector<128x128xf32>, vector<16x128xf32> -> vector<16x128xf32>
    %148 = arith.addf %143, %147 : vector<16x128xf32>
    %c16_159 = arith.constant 16 : index
    %c0_160 = arith.constant 0 : index
    %149 = vector.load %arg5[%c16_159, %c0_160] : memref<32x128xf32, #tpu.memory_space<vmem>>, vector<16x128xf32>
    %c24_161 = arith.constant 24 : index
    %c0_162 = arith.constant 0 : index
    %c0_163 = arith.constant 0 : index
    %150 = vector.load %arg2[%c24_161, %c0_162, %c0_163] : memref<43x128x128xf32, #tpu.memory_space<vmem>>, vector<1x128x128xf32>
    %151 = vector.shape_cast %150 : vector<1x128x128xf32> to vector<128x128xf32>
    %cst_164 = arith.constant dense<0.000000e+00> : vector<16x128xf32>
    %152 = tpu.matmul %149, %151, %cst_164 {dimension_numbers = #tpu.dot_dimension_numbers<[1], [0], [0], [1], [0, 0, 1, 1], [], []>} : vector<16x128xf32>, vector<128x128xf32>, vector<16x128xf32> -> vector<16x128xf32>
    %153 = arith.addf %148, %152 : vector<16x128xf32>
    %c1_165 = arith.constant 1 : index
    %c0_166 = arith.constant 0 : index
    %c0_167 = arith.constant 0 : index
    %154 = vector.load %arg3[%c1_165, %c0_166, %c0_167] : memref<5x128x128xf32, #tpu.memory_space<vmem>>, vector<1x128x128xf32>
    %155 = vector.shape_cast %154 : vector<1x128x128xf32> to vector<128x128xf32>
    %cst_168 = arith.constant dense<0.000000e+00> : vector<16x128xf32>
    %156 = tpu.matmul %153, %155, %cst_168 {dimension_numbers = #tpu.dot_dimension_numbers<[1], [0], [0], [1], [0, 0, 1, 1], [], []>} : vector<16x128xf32>, vector<128x128xf32>, vector<16x128xf32> -> vector<16x128xf32>
    %157 = arith.addf %85, %156 : vector<16x128xf32>
    %c8_169 = arith.constant 8 : index
    %c0_170 = arith.constant 0 : index
    %158 = vector.load %arg5[%c8_169, %c0_170] : memref<32x128xf32, #tpu.memory_space<vmem>>, vector<16x128xf32>
    tpu.vector_store %arg5[%c8_169, %c0_170], %5 {strides = array<i32>} : memref<32x128xf32, #tpu.memory_space<vmem>>, vector<16x128xf32>,
    %cst_171 = arith.constant 0.000000e+00 : f32
    %159 = vector.broadcast %cst_171 : f32 to vector<16x128xf32>
    %c7_172 = arith.constant 7 : index
    %c0_173 = arith.constant 0 : index
    %160 = vector.load %arg5[%c7_172, %c0_173] : memref<32x128xf32, #tpu.memory_space<vmem>>, vector<16x128xf32>
    %c25 = arith.constant 25 : index
    %c0_174 = arith.constant 0 : index
    %c0_175 = arith.constant 0 : index
    %161 = vector.load %arg2[%c25, %c0_174, %c0_175] : memref<43x128x128xf32, #tpu.memory_space<vmem>>, vector<1x128x128xf32>
    %162 = vector.shape_cast %161 : vector<1x128x128xf32> to vector<128x128xf32>
    %cst_176 = arith.constant dense<0.000000e+00> : vector<16x128xf32>
    %163 = tpu.matmul %160, %162, %cst_176 {dimension_numbers = #tpu.dot_dimension_numbers<[1], [0], [0], [1], [0, 0, 1, 1], [], []>} : vector<16x128xf32>, vector<128x128xf32>, vector<16x128xf32> -> vector<16x128xf32>
    %164 = arith.addf %159, %163 : vector<16x128xf32>
    %c8_177 = arith.constant 8 : index
    %c0_178 = arith.constant 0 : index
    %165 = vector.load %arg5[%c8_177, %c0_178] : memref<32x128xf32, #tpu.memory_space<vmem>>, vector<16x128xf32>
    %c26 = arith.constant 26 : index
    %c0_179 = arith.constant 0 : index
    %c0_180 = arith.constant 0 : index
    %166 = vector.load %arg2[%c26, %c0_179, %c0_180] : memref<43x128x128xf32, #tpu.memory_space<vmem>>, vector<1x128x128xf32>
    %167 = vector.shape_cast %166 : vector<1x128x128xf32> to vector<128x128xf32>
    %cst_181 = arith.constant dense<0.000000e+00> : vector<16x128xf32>
    %168 = tpu.matmul %165, %167, %cst_181 {dimension_numbers = #tpu.dot_dimension_numbers<[1], [0], [0], [1], [0, 0, 1, 1], [], []>} : vector<16x128xf32>, vector<128x128xf32>, vector<16x128xf32> -> vector<16x128xf32>
    %169 = arith.addf %164, %168 : vector<16x128xf32>
    %c9_182 = arith.constant 9 : index
    %c0_183 = arith.constant 0 : index
    %170 = vector.load %arg5[%c9_182, %c0_183] : memref<32x128xf32, #tpu.memory_space<vmem>>, vector<16x128xf32>
    %c27 = arith.constant 27 : index
    %c0_184 = arith.constant 0 : index
    %c0_185 = arith.constant 0 : index
    %171 = vector.load %arg2[%c27, %c0_184, %c0_185] : memref<43x128x128xf32, #tpu.memory_space<vmem>>, vector<1x128x128xf32>
    %172 = vector.shape_cast %171 : vector<1x128x128xf32> to vector<128x128xf32>
    %cst_186 = arith.constant dense<0.000000e+00> : vector<16x128xf32>
    %173 = tpu.matmul %170, %172, %cst_186 {dimension_numbers = #tpu.dot_dimension_numbers<[1], [0], [0], [1], [0, 0, 1, 1], [], []>} : vector<16x128xf32>, vector<128x128xf32>, vector<16x128xf32> -> vector<16x128xf32>
    %174 = arith.addf %169, %173 : vector<16x128xf32>
    %c8_187 = arith.constant 8 : index
    %c0_188 = arith.constant 0 : index
    %175 = vector.load %arg5[%c8_187, %c0_188] : memref<32x128xf32, #tpu.memory_space<vmem>>, vector<16x128xf32>
    tpu.vector_store %arg5[%c8_187, %c0_188], %174 {strides = array<i32>} : memref<32x128xf32, #tpu.memory_space<vmem>>, vector<16x128xf32>,
    %cst_189 = arith.constant 0.000000e+00 : f32
    %176 = vector.broadcast %cst_189 : f32 to vector<16x128xf32>
    %c6_190 = arith.constant 6 : index
    %c0_191 = arith.constant 0 : index
    %177 = vector.load %arg5[%c6_190, %c0_191] : memref<32x128xf32, #tpu.memory_space<vmem>>, vector<16x128xf32>
    %c28 = arith.constant 28 : index
    %c0_192 = arith.constant 0 : index
    %c0_193 = arith.constant 0 : index
    %178 = vector.load %arg2[%c28, %c0_192, %c0_193] : memref<43x128x128xf32, #tpu.memory_space<vmem>>, vector<1x128x128xf32>
    %179 = vector.shape_cast %178 : vector<1x128x128xf32> to vector<128x128xf32>
    %cst_194 = arith.constant dense<0.000000e+00> : vector<16x128xf32>
    %180 = tpu.matmul %177, %179, %cst_194 {dimension_numbers = #tpu.dot_dimension_numbers<[1], [0], [0], [1], [0, 0, 1, 1], [], []>} : vector<16x128xf32>, vector<128x128xf32>, vector<16x128xf32> -> vector<16x128xf32>
    %181 = arith.addf %176, %180 : vector<16x128xf32>
    %c8_195 = arith.constant 8 : index
    %c0_196 = arith.constant 0 : index
    %182 = vector.load %arg5[%c8_195, %c0_196] : memref<32x128xf32, #tpu.memory_space<vmem>>, vector<16x128xf32>
    %c29 = arith.constant 29 : index
    %c0_197 = arith.constant 0 : index
    %c0_198 = arith.constant 0 : index
    %183 = vector.load %arg2[%c29, %c0_197, %c0_198] : memref<43x128x128xf32, #tpu.memory_space<vmem>>, vector<1x128x128xf32>
    %184 = vector.shape_cast %183 : vector<1x128x128xf32> to vector<128x128xf32>
    %cst_199 = arith.constant dense<0.000000e+00> : vector<16x128xf32>
    %185 = tpu.matmul %182, %184, %cst_199 {dimension_numbers = #tpu.dot_dimension_numbers<[1], [0], [0], [1], [0, 0, 1, 1], [], []>} : vector<16x128xf32>, vector<128x128xf32>, vector<16x128xf32> -> vector<16x128xf32>
    %186 = arith.addf %181, %185 : vector<16x128xf32>
    %c10_200 = arith.constant 10 : index
    %c0_201 = arith.constant 0 : index
    %187 = vector.load %arg5[%c10_200, %c0_201] : memref<32x128xf32, #tpu.memory_space<vmem>>, vector<16x128xf32>
    %c30 = arith.constant 30 : index
    %c0_202 = arith.constant 0 : index
    %c0_203 = arith.constant 0 : index
    %188 = vector.load %arg2[%c30, %c0_202, %c0_203] : memref<43x128x128xf32, #tpu.memory_space<vmem>>, vector<1x128x128xf32>
    %189 = vector.shape_cast %188 : vector<1x128x128xf32> to vector<128x128xf32>
    %cst_204 = arith.constant dense<0.000000e+00> : vector<16x128xf32>
    %190 = tpu.matmul %187, %189, %cst_204 {dimension_numbers = #tpu.dot_dimension_numbers<[1], [0], [0], [1], [0, 0, 1, 1], [], []>} : vector<16x128xf32>, vector<128x128xf32>, vector<16x128xf32> -> vector<16x128xf32>
    %191 = arith.addf %186, %190 : vector<16x128xf32>
    %c8_205 = arith.constant 8 : index
    %c0_206 = arith.constant 0 : index
    %192 = vector.load %arg5[%c8_205, %c0_206] : memref<32x128xf32, #tpu.memory_space<vmem>>, vector<16x128xf32>
    tpu.vector_store %arg5[%c8_205, %c0_206], %191 {strides = array<i32>} : memref<32x128xf32, #tpu.memory_space<vmem>>, vector<16x128xf32>,
    %cst_207 = arith.constant 0.000000e+00 : f32
    %193 = vector.broadcast %cst_207 : f32 to vector<16x128xf32>
    %c4_208 = arith.constant 4 : index
    %c0_209 = arith.constant 0 : index
    %194 = vector.load %arg5[%c4_208, %c0_209] : memref<32x128xf32, #tpu.memory_space<vmem>>, vector<16x128xf32>
    %c31 = arith.constant 31 : index
    %c0_210 = arith.constant 0 : index
    %c0_211 = arith.constant 0 : index
    %195 = vector.load %arg2[%c31, %c0_210, %c0_211] : memref<43x128x128xf32, #tpu.memory_space<vmem>>, vector<1x128x128xf32>
    %196 = vector.shape_cast %195 : vector<1x128x128xf32> to vector<128x128xf32>
    %cst_212 = arith.constant dense<0.000000e+00> : vector<16x128xf32>
    %197 = tpu.matmul %194, %196, %cst_212 {dimension_numbers = #tpu.dot_dimension_numbers<[1], [0], [0], [1], [0, 0, 1, 1], [], []>} : vector<16x128xf32>, vector<128x128xf32>, vector<16x128xf32> -> vector<16x128xf32>
    %198 = arith.addf %193, %197 : vector<16x128xf32>
    %c8_213 = arith.constant 8 : index
    %c0_214 = arith.constant 0 : index
    %199 = vector.load %arg5[%c8_213, %c0_214] : memref<32x128xf32, #tpu.memory_space<vmem>>, vector<16x128xf32>
    %c32 = arith.constant 32 : index
    %c0_215 = arith.constant 0 : index
    %c0_216 = arith.constant 0 : index
    %200 = vector.load %arg2[%c32, %c0_215, %c0_216] : memref<43x128x128xf32, #tpu.memory_space<vmem>>, vector<1x128x128xf32>
    %201 = vector.shape_cast %200 : vector<1x128x128xf32> to vector<128x128xf32>
    %cst_217 = arith.constant dense<0.000000e+00> : vector<16x128xf32>
    %202 = tpu.matmul %199, %201, %cst_217 {dimension_numbers = #tpu.dot_dimension_numbers<[1], [0], [0], [1], [0, 0, 1, 1], [], []>} : vector<16x128xf32>, vector<128x128xf32>, vector<16x128xf32> -> vector<16x128xf32>
    %203 = arith.addf %198, %202 : vector<16x128xf32>
    %c12_218 = arith.constant 12 : index
    %c0_219 = arith.constant 0 : index
    %204 = vector.load %arg5[%c12_218, %c0_219] : memref<32x128xf32, #tpu.memory_space<vmem>>, vector<16x128xf32>
    %c33 = arith.constant 33 : index
    %c0_220 = arith.constant 0 : index
    %c0_221 = arith.constant 0 : index
    %205 = vector.load %arg2[%c33, %c0_220, %c0_221] : memref<43x128x128xf32, #tpu.memory_space<vmem>>, vector<1x128x128xf32>
    %206 = vector.shape_cast %205 : vector<1x128x128xf32> to vector<128x128xf32>
    %cst_222 = arith.constant dense<0.000000e+00> : vector<16x128xf32>
    %207 = tpu.matmul %204, %206, %cst_222 {dimension_numbers = #tpu.dot_dimension_numbers<[1], [0], [0], [1], [0, 0, 1, 1], [], []>} : vector<16x128xf32>, vector<128x128xf32>, vector<16x128xf32> -> vector<16x128xf32>
    %208 = arith.addf %203, %207 : vector<16x128xf32>
    %c2_223 = arith.constant 2 : index
    %c0_224 = arith.constant 0 : index
    %c0_225 = arith.constant 0 : index
    %209 = vector.load %arg3[%c2_223, %c0_224, %c0_225] : memref<5x128x128xf32, #tpu.memory_space<vmem>>, vector<1x128x128xf32>
    %210 = vector.shape_cast %209 : vector<1x128x128xf32> to vector<128x128xf32>
    %cst_226 = arith.constant dense<0.000000e+00> : vector<16x128xf32>
    %211 = tpu.matmul %208, %210, %cst_226 {dimension_numbers = #tpu.dot_dimension_numbers<[1], [0], [0], [1], [0, 0, 1, 1], [], []>} : vector<16x128xf32>, vector<128x128xf32>, vector<16x128xf32> -> vector<16x128xf32>
    %212 = arith.addf %157, %211 : vector<16x128xf32>
    %c8_227 = arith.constant 8 : index
    %c0_228 = arith.constant 0 : index
    %213 = vector.load %arg5[%c8_227, %c0_228] : memref<32x128xf32, #tpu.memory_space<vmem>>, vector<16x128xf32>
    tpu.vector_store %arg5[%c8_227, %c0_228], %5 {strides = array<i32>} : memref<32x128xf32, #tpu.memory_space<vmem>>, vector<16x128xf32>,
    %cst_229 = arith.constant 0.000000e+00 : f32
    %214 = vector.broadcast %cst_229 : f32 to vector<16x128xf32>
    %c7_230 = arith.constant 7 : index
    %c0_231 = arith.constant 0 : index
    %215 = vector.load %arg5[%c7_230, %c0_231] : memref<32x128xf32, #tpu.memory_space<vmem>>, vector<16x128xf32>
    %c34 = arith.constant 34 : index
    %c0_232 = arith.constant 0 : index
    %c0_233 = arith.constant 0 : index
    %216 = vector.load %arg2[%c34, %c0_232, %c0_233] : memref<43x128x128xf32, #tpu.memory_space<vmem>>, vector<1x128x128xf32>
    %217 = vector.shape_cast %216 : vector<1x128x128xf32> to vector<128x128xf32>
    %cst_234 = arith.constant dense<0.000000e+00> : vector<16x128xf32>
    %218 = tpu.matmul %215, %217, %cst_234 {dimension_numbers = #tpu.dot_dimension_numbers<[1], [0], [0], [1], [0, 0, 1, 1], [], []>} : vector<16x128xf32>, vector<128x128xf32>, vector<16x128xf32> -> vector<16x128xf32>
    %219 = arith.addf %214, %218 : vector<16x128xf32>
    %c8_235 = arith.constant 8 : index
    %c0_236 = arith.constant 0 : index
    %220 = vector.load %arg5[%c8_235, %c0_236] : memref<32x128xf32, #tpu.memory_space<vmem>>, vector<16x128xf32>
    %c35 = arith.constant 35 : index
    %c0_237 = arith.constant 0 : index
    %c0_238 = arith.constant 0 : index
    %221 = vector.load %arg2[%c35, %c0_237, %c0_238] : memref<43x128x128xf32, #tpu.memory_space<vmem>>, vector<1x128x128xf32>
    %222 = vector.shape_cast %221 : vector<1x128x128xf32> to vector<128x128xf32>
    %cst_239 = arith.constant dense<0.000000e+00> : vector<16x128xf32>
    %223 = tpu.matmul %220, %222, %cst_239 {dimension_numbers = #tpu.dot_dimension_numbers<[1], [0], [0], [1], [0, 0, 1, 1], [], []>} : vector<16x128xf32>, vector<128x128xf32>, vector<16x128xf32> -> vector<16x128xf32>
    %224 = arith.addf %219, %223 : vector<16x128xf32>
    %c9_240 = arith.constant 9 : index
    %c0_241 = arith.constant 0 : index
    %225 = vector.load %arg5[%c9_240, %c0_241] : memref<32x128xf32, #tpu.memory_space<vmem>>, vector<16x128xf32>
    %c36 = arith.constant 36 : index
    %c0_242 = arith.constant 0 : index
    %c0_243 = arith.constant 0 : index
    %226 = vector.load %arg2[%c36, %c0_242, %c0_243] : memref<43x128x128xf32, #tpu.memory_space<vmem>>, vector<1x128x128xf32>
    %227 = vector.shape_cast %226 : vector<1x128x128xf32> to vector<128x128xf32>
    %cst_244 = arith.constant dense<0.000000e+00> : vector<16x128xf32>
    %228 = tpu.matmul %225, %227, %cst_244 {dimension_numbers = #tpu.dot_dimension_numbers<[1], [0], [0], [1], [0, 0, 1, 1], [], []>} : vector<16x128xf32>, vector<128x128xf32>, vector<16x128xf32> -> vector<16x128xf32>
    %229 = arith.addf %224, %228 : vector<16x128xf32>
    %c8_245 = arith.constant 8 : index
    %c0_246 = arith.constant 0 : index
    %230 = vector.load %arg5[%c8_245, %c0_246] : memref<32x128xf32, #tpu.memory_space<vmem>>, vector<16x128xf32>
    tpu.vector_store %arg5[%c8_245, %c0_246], %229 {strides = array<i32>} : memref<32x128xf32, #tpu.memory_space<vmem>>, vector<16x128xf32>,
    %cst_247 = arith.constant 0.000000e+00 : f32
    %231 = vector.broadcast %cst_247 : f32 to vector<16x128xf32>
    %c6_248 = arith.constant 6 : index
    %c0_249 = arith.constant 0 : index
    %232 = vector.load %arg5[%c6_248, %c0_249] : memref<32x128xf32, #tpu.memory_space<vmem>>, vector<16x128xf32>
    %c37 = arith.constant 37 : index
    %c0_250 = arith.constant 0 : index
    %c0_251 = arith.constant 0 : index
    %233 = vector.load %arg2[%c37, %c0_250, %c0_251] : memref<43x128x128xf32, #tpu.memory_space<vmem>>, vector<1x128x128xf32>
    %234 = vector.shape_cast %233 : vector<1x128x128xf32> to vector<128x128xf32>
    %cst_252 = arith.constant dense<0.000000e+00> : vector<16x128xf32>
    %235 = tpu.matmul %232, %234, %cst_252 {dimension_numbers = #tpu.dot_dimension_numbers<[1], [0], [0], [1], [0, 0, 1, 1], [], []>} : vector<16x128xf32>, vector<128x128xf32>, vector<16x128xf32> -> vector<16x128xf32>
    %236 = arith.addf %231, %235 : vector<16x128xf32>
    %c8_253 = arith.constant 8 : index
    %c0_254 = arith.constant 0 : index
    %237 = vector.load %arg5[%c8_253, %c0_254] : memref<32x128xf32, #tpu.memory_space<vmem>>, vector<16x128xf32>
    %c38 = arith.constant 38 : index
    %c0_255 = arith.constant 0 : index
    %c0_256 = arith.constant 0 : index
    %238 = vector.load %arg2[%c38, %c0_255, %c0_256] : memref<43x128x128xf32, #tpu.memory_space<vmem>>, vector<1x128x128xf32>
    %239 = vector.shape_cast %238 : vector<1x128x128xf32> to vector<128x128xf32>
    %cst_257 = arith.constant dense<0.000000e+00> : vector<16x128xf32>
    %240 = tpu.matmul %237, %239, %cst_257 {dimension_numbers = #tpu.dot_dimension_numbers<[1], [0], [0], [1], [0, 0, 1, 1], [], []>} : vector<16x128xf32>, vector<128x128xf32>, vector<16x128xf32> -> vector<16x128xf32>
    %241 = arith.addf %236, %240 : vector<16x128xf32>
    %c10_258 = arith.constant 10 : index
    %c0_259 = arith.constant 0 : index
    %242 = vector.load %arg5[%c10_258, %c0_259] : memref<32x128xf32, #tpu.memory_space<vmem>>, vector<16x128xf32>
    %c39 = arith.constant 39 : index
    %c0_260 = arith.constant 0 : index
    %c0_261 = arith.constant 0 : index
    %243 = vector.load %arg2[%c39, %c0_260, %c0_261] : memref<43x128x128xf32, #tpu.memory_space<vmem>>, vector<1x128x128xf32>
    %244 = vector.shape_cast %243 : vector<1x128x128xf32> to vector<128x128xf32>
    %cst_262 = arith.constant dense<0.000000e+00> : vector<16x128xf32>
    %245 = tpu.matmul %242, %244, %cst_262 {dimension_numbers = #tpu.dot_dimension_numbers<[1], [0], [0], [1], [0, 0, 1, 1], [], []>} : vector<16x128xf32>, vector<128x128xf32>, vector<16x128xf32> -> vector<16x128xf32>
    %246 = arith.addf %241, %245 : vector<16x128xf32>
    %c3_263 = arith.constant 3 : index
    %c0_264 = arith.constant 0 : index
    %c0_265 = arith.constant 0 : index
    %247 = vector.load %arg3[%c3_263, %c0_264, %c0_265] : memref<5x128x128xf32, #tpu.memory_space<vmem>>, vector<1x128x128xf32>
    %248 = vector.shape_cast %247 : vector<1x128x128xf32> to vector<128x128xf32>
    %cst_266 = arith.constant dense<0.000000e+00> : vector<16x128xf32>
    %249 = tpu.matmul %246, %248, %cst_266 {dimension_numbers = #tpu.dot_dimension_numbers<[1], [0], [0], [1], [0, 0, 1, 1], [], []>} : vector<16x128xf32>, vector<128x128xf32>, vector<16x128xf32> -> vector<16x128xf32>
    %250 = arith.addf %212, %249 : vector<16x128xf32>
    %c8_267 = arith.constant 8 : index
    %c0_268 = arith.constant 0 : index
    %251 = vector.load %arg5[%c8_267, %c0_268] : memref<32x128xf32, #tpu.memory_space<vmem>>, vector<16x128xf32>
    tpu.vector_store %arg5[%c8_267, %c0_268], %5 {strides = array<i32>} : memref<32x128xf32, #tpu.memory_space<vmem>>, vector<16x128xf32>,
    %cst_269 = arith.constant 0.000000e+00 : f32
    %252 = vector.broadcast %cst_269 : f32 to vector<16x128xf32>
    %c7_270 = arith.constant 7 : index
    %c0_271 = arith.constant 0 : index
    %253 = vector.load %arg5[%c7_270, %c0_271] : memref<32x128xf32, #tpu.memory_space<vmem>>, vector<16x128xf32>
    %c40 = arith.constant 40 : index
    %c0_272 = arith.constant 0 : index
    %c0_273 = arith.constant 0 : index
    %254 = vector.load %arg2[%c40, %c0_272, %c0_273] : memref<43x128x128xf32, #tpu.memory_space<vmem>>, vector<1x128x128xf32>
    %255 = vector.shape_cast %254 : vector<1x128x128xf32> to vector<128x128xf32>
    %cst_274 = arith.constant dense<0.000000e+00> : vector<16x128xf32>
    %256 = tpu.matmul %253, %255, %cst_274 {dimension_numbers = #tpu.dot_dimension_numbers<[1], [0], [0], [1], [0, 0, 1, 1], [], []>} : vector<16x128xf32>, vector<128x128xf32>, vector<16x128xf32> -> vector<16x128xf32>
    %257 = arith.addf %252, %256 : vector<16x128xf32>
    %c8_275 = arith.constant 8 : index
    %c0_276 = arith.constant 0 : index
    %258 = vector.load %arg5[%c8_275, %c0_276] : memref<32x128xf32, #tpu.memory_space<vmem>>, vector<16x128xf32>
    %c41 = arith.constant 41 : index
    %c0_277 = arith.constant 0 : index
    %c0_278 = arith.constant 0 : index
    %259 = vector.load %arg2[%c41, %c0_277, %c0_278] : memref<43x128x128xf32, #tpu.memory_space<vmem>>, vector<1x128x128xf32>
    %260 = vector.shape_cast %259 : vector<1x128x128xf32> to vector<128x128xf32>
    %cst_279 = arith.constant dense<0.000000e+00> : vector<16x128xf32>
    %261 = tpu.matmul %258, %260, %cst_279 {dimension_numbers = #tpu.dot_dimension_numbers<[1], [0], [0], [1], [0, 0, 1, 1], [], []>} : vector<16x128xf32>, vector<128x128xf32>, vector<16x128xf32> -> vector<16x128xf32>
    %262 = arith.addf %257, %261 : vector<16x128xf32>
    %c9_280 = arith.constant 9 : index
    %c0_281 = arith.constant 0 : index
    %263 = vector.load %arg5[%c9_280, %c0_281] : memref<32x128xf32, #tpu.memory_space<vmem>>, vector<16x128xf32>
    %c42 = arith.constant 42 : index
    %c0_282 = arith.constant 0 : index
    %c0_283 = arith.constant 0 : index
    %264 = vector.load %arg2[%c42, %c0_282, %c0_283] : memref<43x128x128xf32, #tpu.memory_space<vmem>>, vector<1x128x128xf32>
    %265 = vector.shape_cast %264 : vector<1x128x128xf32> to vector<128x128xf32>
    %cst_284 = arith.constant dense<0.000000e+00> : vector<16x128xf32>
    %266 = tpu.matmul %263, %265, %cst_284 {dimension_numbers = #tpu.dot_dimension_numbers<[1], [0], [0], [1], [0, 0, 1, 1], [], []>} : vector<16x128xf32>, vector<128x128xf32>, vector<16x128xf32> -> vector<16x128xf32>
    %267 = arith.addf %262, %266 : vector<16x128xf32>
    %c4_285 = arith.constant 4 : index
    %c0_286 = arith.constant 0 : index
    %c0_287 = arith.constant 0 : index
    %268 = vector.load %arg3[%c4_285, %c0_286, %c0_287] : memref<5x128x128xf32, #tpu.memory_space<vmem>>, vector<1x128x128xf32>
    %269 = vector.shape_cast %268 : vector<1x128x128xf32> to vector<128x128xf32>
    %cst_288 = arith.constant dense<0.000000e+00> : vector<16x128xf32>
    %270 = tpu.matmul %267, %269, %cst_288 {dimension_numbers = #tpu.dot_dimension_numbers<[1], [0], [0], [1], [0, 0, 1, 1], [], []>} : vector<16x128xf32>, vector<128x128xf32>, vector<16x128xf32> -> vector<16x128xf32>
    %271 = arith.addf %250, %270 : vector<16x128xf32>
    %c0_289 = arith.constant 0 : index
    %c0_290 = arith.constant 0 : index
    %c0_291 = arith.constant 0 : index
    %272 = vector.load %arg4[%c0_289, %c0_290, %c0_291] : memref<1x16x128xf32, #tpu.memory_space<vmem>>, vector<1x16x128xf32>
    %273 = vector.shape_cast %272 : vector<1x16x128xf32> to vector<16x128xf32>
    %274 = vector.shape_cast %271 : vector<16x128xf32> to vector<1x16x128xf32>
    tpu.vector_store %arg4[%c0_289, %c0_290, %c0_291], %274 {strides = array<i32>} : memref<1x16x128xf32, #tpu.memory_space<vmem>>, vector<1x16x128xf32>,
    return
  }
  func.func @transform_0(%arg0: i32) -> (i32, i32, i32) {
    %c0_i32 = arith.constant 0 : i32
    %c0_i32_0 = arith.constant 0 : i32
    %c0_i32_1 = arith.constant 0 : i32
    return %arg0, %c0_i32, %c0_i32_0 : i32, i32, i32
  }
  func.func @transform_1(%arg0: i32) -> (i32, i32, i32) {
    %c0_i32 = arith.constant 0 : i32
    %c0_i32_0 = arith.constant 0 : i32
    %c0_i32_1 = arith.constant 0 : i32
    %c0_i32_2 = arith.constant 0 : i32
    return %c0_i32, %c0_i32_0, %c0_i32_1 : i32, i32, i32
  }
  func.func @transform_2(%arg0: i32) -> (i32, i32, i32) {
    %c0_i32 = arith.constant 0 : i32
    %c0_i32_0 = arith.constant 0 : i32
    %c0_i32_1 = arith.constant 0 : i32
    %c0_i32_2 = arith.constant 0 : i32
    return %c0_i32, %c0_i32_0, %c0_i32_1 : i32, i32, i32
  }
  func.func @transform_3(%arg0: i32) -> (i32, i32, i32) {
    %c0_i32 = arith.constant 0 : i32
    %c0_i32_0 = arith.constant 0 : i32
    %c0_i32_1 = arith.constant 0 : i32
    return %arg0, %c0_i32, %c0_i32_0 : i32, i32, i32
  }
}

</mosaic_0001>

<llo_original>
// kernel: dilated_forward.1
$region0: #{dilated_forward.1}
  #allocation0 [shape = 'u32[]', space=smem, size = 0x4, offset = 0x4, fixed_abs, tag = 'smem constant byte address 0x4 - core index']
  #allocation1 [shape = 'u32[144,128]{1,0:T(1,128)}', space=vmem, size = 0x12000, scoped, tag = 'internal scratch']
  #allocation2 [shape = 'f32[32,128]{1,0:T(8,128)}', space=vmem, size = 0x4000, scoped, tag = 'scratch operand']
  %s0 = inlined_call_operand.vmem [shape: f32[2,16,128], index: 0, kind: input, shape index: {}]
  %s1 = inlined_call_operand.hbm [shape: f32[43,128,128], index: 1, kind: input, shape index: {}]
  %s2 = inlined_call_operand.hbm [shape: f32[5,128,128], index: 2, kind: input, shape index: {}]
  %s3 = inlined_call_operand.vmem [shape: f32[2,16,128], index: 3, kind: output, shape index: {}]
  %s4 = sld [smem:[#allocation0]]
  $region53: #{dilated_forward.1} parent=0
    _
  %s6 = ssub.s32 1, %s4
  %s7 = scalar_select 0, %s6, %s4
  $region1: #{dilated_forward.1} parent=0
    #allocation3 [shape = 'u8[2818048]{0}', space=vmem, size = 0x2b0000, scoped, tag = 'input window, operand 1, single buffered']
    #allocation4 [shape = 's32[2]{0}', space=sflag, size = 0x8, scoped, tag = 'scoped memory for dilated_forward.1']
    #allocation5 [shape = 'u8[327680]{0}', space=vmem, size = 0x50000, scoped, tag = 'input window, operand 2, single buffered']
    #allocation6 [shape = 's32[1]{0}', space=sflag, size = 0x4, scoped, tag = 'scoped memory for dilated_forward.1']
    %8 = vsyncpa [#allocation4], 0
    %9 = vsyncpa [#allocation6], 0
    loop: start=0, step=1, limit=4
    $region2: #{dilated_forward.1} parent=1 // loop_pre_header
      _
    $region3: #{dilated_forward.1} parent=1 // loop_header
      %s11 = sphi 0, %s15
      %p12 = scmp.ge.s32.totalorder %s11, 4
      %s21 = sphi 0, %s23
      %s24 = sphi 0, %s21
      %s25 = sphi 0, %s24
      %s41 = sphi 0, %s25
      %s45 = sphi 0, %s45
      %s47 = sphi 0, %s45
      %s48 = sphi 0, %s47
      %s62 = sphi 0, %s48
      %s66 = sphi 0, %s66
      %s68 = sphi 0, %s66
      %s69 = sphi 0, %s68
      %s83 = sphi 0, %s69
      %s89 = sphi 0, %s91
      %s92 = sphi 0, %s89
      %s93 = sphi 0, %s92
      %s109 = sphi 0, %s93
    $region4: #{dilated_forward.1} parent=1 // loop_header_branch
      %14 = sbr.rel (%p12) target = $region8
    $region5: #{dilated_forward.1} parent=1 // loop_body
      %s16 = ssub.s32 %s11, 1
      %s17 = ssub.s32 %s11, 2
      %s18 = sadd.s32 %s11, 1
      %s19 = ssub.s32 %s11, %s18
      %p20 = scmp.eq.s32.totalorder %s19, 0
      %s22 = sadd.s32 %s21, 1
      %s23 = scalar_select %p20, %s21, %s22
      %p26 = pneg %p20
      %p27 = scmp.eq.s32.totalorder %s11, 1
      %p28 = por %p26, %p27
      %p29 = scmp.ne.s32.totalorder %s21, %s24
      %p30 = scmp.eq.s32.totalorder %s11, 0
      %p31 = por %p29, %p30
      %p32 = scmp.ne.s32.totalorder %s21, %s24
      %p33 = scmp.eq.s32.totalorder %s16, 1
      %p34 = por %p32, %p33
      %p35 = scmp.ne.s32.totalorder %s24, %s25
      %p36 = scmp.eq.s32.totalorder %s16, 0
      %p37 = por %p35, %p36
      %p38 = scmp.ne.s32.totalorder %s24, %s25
      %p39 = scmp.eq.s32.totalorder %s17, 1
      %p40 = por %p38, %p39
      %p42 = scmp.ne.s32.totalorder %s25, %s41
      %p43 = scmp.eq.s32.totalorder %s17, 0
      %p44 = por %p42, %p43
      %s46 = sadd.s32 %s45, 1
      %p49 = scmp.eq.s32.totalorder %s11, 1
      %p50 = scmp.ne.s32.totalorder %s45, %s47
      %p51 = scmp.eq.s32.totalorder %s11, 0
      %p52 = por %p50, %p51
      %p53 = scmp.ne.s32.totalorder %s45, %s47
      %p54 = scmp.eq.s32.totalorder %s16, 1
      %p55 = por %p53, %p54
      %p56 = scmp.ne.s32.totalorder %s47, %s48
      %p57 = scmp.eq.s32.totalorder %s16, 0
      %p58 = por %p56, %p57
      %p59 = scmp.ne.s32.totalorder %s47, %s48
      %p60 = scmp.eq.s32.totalorder %s17, 1
      %p61 = por %p59, %p60
      %p63 = scmp.ne.s32.totalorder %s48, %s62
      %p64 = scmp.eq.s32.totalorder %s17, 0
      %p65 = por %p63, %p64
      %s67 = sadd.s32 %s66, 1
      %p70 = scmp.eq.s32.totalorder %s11, 1
      %p71 = scmp.ne.s32.totalorder %s66, %s68
      %p72 = scmp.eq.s32.totalorder %s11, 0
      %p73 = por %p71, %p72
      %p74 = scmp.ne.s32.totalorder %s66, %s68
      %p75 = scmp.eq.s32.totalorder %s16, 1
      %p76 = por %p74, %p75
      %p77 = scmp.ne.s32.totalorder %s68, %s69
      %p78 = scmp.eq.s32.totalorder %s16, 0
      %p79 = por %p77, %p78
      %p80 = scmp.ne.s32.totalorder %s68, %s69
      %p81 = scmp.eq.s32.totalorder %s17, 1
      %p82 = por %p80, %p81
      %p84 = scmp.ne.s32.totalorder %s69, %s83
      %p85 = scmp.eq.s32.totalorder %s17, 0
      %p86 = por %p84, %p85
      %s87 = ssub.s32 %s11, %s18
      %p88 = scmp.eq.s32.totalorder %s87, 0
      %s90 = sadd.s32 %s89, 1
      %s91 = scalar_select %p88, %s89, %s90
      %p94 = pneg %p88
      %p95 = scmp.eq.s32.totalorder %s11, 1
      %p96 = por %p94, %p95
      %p97 = scmp.ne.s32.totalorder %s89, %s92
      %p98 = scmp.eq.s32.totalorder %s11, 0
      %p99 = por %p97, %p98
      %p100 = scmp.ne.s32.totalorder %s89, %s92
      %p101 = scmp.eq.s32.totalorder %s16, 1
      %p102 = por %p100, %p101
      %p103 = scmp.ne.s32.totalorder %s92, %s93
      %p104 = scmp.eq.s32.totalorder %s16, 0
      %p105 = por %p103, %p104
      %p106 = scmp.ne.s32.totalorder %s92, %s93
      %p107 = scmp.eq.s32.totalorder %s17, 1
      %p108 = por %p106, %p107
      %p110 = scmp.ne.s32.totalorder %s93, %s109
      %p111 = scmp.eq.s32.totalorder %s17, 0
      %p112 = por %p110, %p111
      %p113 = scmp.le.s32.totalorder 1, %s11
      %p114 = scmp.lt.s32.totalorder %s11, 3
      %p115 = pnand %p113, %p114
      %p116 = pneg %p115
      // Predicated region
      $region9: #{dilated_forward.1} parent=5 // pred_check
        _
      $region10: #{dilated_forward.1} parent=5 // pred_check_branch
        %118 = sbr.rel (%p115) target = $region12
      $region11: #{dilated_forward.1} parent=5 // pred_region
        %s119 = ssub.s32 %s11, 1
        // Predicated region
        $region13: #{dilated_forward.1} parent=11 // pred_check
          %p120 = pneg %p58
        $region14: #{dilated_forward.1} parent=11 // pred_check_branch
          %122 = sbr.rel (%p120) target = $region16
        $region15: #{dilated_forward.1} parent=11 // pred_region
          %s124 = ssub.s32 88064, 88064
          %125 = vsyncadd [#allocation4], %s124
          %s126 = sshll.u32 [#allocation3], 4
          %s127 = int_to_ptr.vmem [resolvable:$true] %s126
          %132 = dma.hbm_to_vmem [thread:$0]  %s1, 88064, %s127, [#allocation4], 128, 128, 8
        $region16: #{dilated_forward.1} parent=11 // pred_fallthru
          _
        // Predicated region
        $region17: #{dilated_forward.1} parent=11 // pred_check
          %p133 = pneg %p79
        $region18: #{dilated_forward.1} parent=11 // pred_check_branch
          %135 = sbr.rel (%p133) target = $region20
        $region19: #{dilated_forward.1} parent=11 // pred_region
          %s137 = ssub.s32 10240, 10240
          %138 = vsyncadd [#allocation6], %s137
          %s139 = sshll.u32 [#allocation5], 4
          %s140 = int_to_ptr.vmem [resolvable:$true] %s139
          %145 = dma.hbm_to_vmem [thread:$0]  %s2, 10240, %s140, [#allocation6], 128, 128, 8
        $region20: #{dilated_forward.1} parent=11 // pred_fallthru
          _
      $region12: #{dilated_forward.1} parent=5 // pred_fallthru
        _
      %p146 = scmp.lt.s32.totalorder %s11, 2
      // Predicated region
      $region21: #{dilated_forward.1} parent=5 // pred_check
        %p147 = pneg %p146
      $region22: #{dilated_forward.1} parent=5 // pred_check_branch
        %149 = sbr.rel (%p147) target = $region24
      $region23: #{dilated_forward.1} parent=5 // pred_region
        // Predicated region
        $region25: #{dilated_forward.1} parent=23 // pred_check
          %p150 = pneg %p31
        $region26: #{dilated_forward.1} parent=23 // pred_check_branch
          %152 = sbr.rel (%p150) target = $region28
        $region27: #{dilated_forward.1} parent=23 // pred_region
          %p153 = scmp.lt.s32.totalorder %s11, 1
          %s154 = scalar_select %p153, %s11, 1
          %s155 = smul.addr %s154, 2
          %s156 = smul.addr %s155, 8
          %s157 = scalar_lea.vmem %s0, %s156
        $region28: #{dilated_forward.1} parent=23 // pred_fallthru
          _
      $region24: #{dilated_forward.1} parent=5 // pred_fallthru
        _
      %p158 = scmp.le.s32.totalorder 1, %s11
      %p159 = scmp.lt.s32.totalorder %s11, 3
      %p160 = pnand %p158, %p159
      %p161 = pneg %p160
      // Predicated region
      $region29: #{dilated_forward.1} parent=5 // pred_check
        _
      $region30: #{dilated_forward.1} parent=5 // pred_check_branch
        %163 = sbr.rel (%p160) target = $region32
      $region31: #{dilated_forward.1} parent=5 // pred_region
        %s164 = ssub.s32 %s11, 1
        // Predicated region
        $region33: #{dilated_forward.1} parent=31 // pred_check
          %p165 = pneg %p58
        $region34: #{dilated_forward.1} parent=31 // pred_check_branch
          %167 = sbr.rel (%p165) target = $region36
        $region35: #{dilated_forward.1} parent=31 // pred_region
          %168 = dma.done [#allocation4], 88064
        $region36: #{dilated_forward.1} parent=31 // pred_fallthru
          _
        // Predicated region
        $region37: #{dilated_forward.1} parent=31 // pred_check
          %p169 = pneg %p79
        $region38: #{dilated_forward.1} parent=31 // pred_check_branch
          %171 = sbr.rel (%p169) target = $region40
        $region39: #{dilated_forward.1} parent=31 // pred_region
          %172 = dma.done [#allocation6], 10240
        $region40: #{dilated_forward.1} parent=31 // pred_fallthru
          _
        %p173 = scmp.lt.s32.totalorder %s16, 1
        %s174 = scalar_select %p173, %s16, 1
        %s175 = smul.addr %s174, 2
        %s176 = smul.addr %s175, 8
        %s177 = scalar_lea.vmem %s0, %s176
        %p178 = pneg %p37
        %p179 = pneg %p34
        %p180 = pneg %p58
        %p181 = pneg %p55
        %p182 = pneg %p79
        %p183 = pneg %p76
        %p184 = pneg %p105
        %p185 = pneg %p102
        %p186 = scmp.lt.s32.totalorder %s16, 1
        %s187 = scalar_select %p186, %s16, 1
        %s188 = smul.addr %s187, 2
        %s189 = smul.addr %s188, 8
        %s190 = scalar_lea.vmem %s3, %s189
        %p191 = scmp.lt.s32.totalorder %s16, 1
        %s192 = scalar_select %p191, %s16, 1
        %s193 = smul.addr %s192, 2
        %s194 = smul.addr %s193, 8
        %s195 = scalar_lea.vmem %s0, %s194
        %p196 = scmp.lt.s32.totalorder %s16, 1
        %s197 = scalar_select %p196, %s16, 1
        %s198 = smul.addr %s197, 2
        %s199 = smul.addr %s198, 8
        %s200 = scalar_lea.vmem %s3, %s199
        %201 = vst [vmem:[#allocation2] sm:$0xff] 0.0
        %202 = vst [vmem:[#allocation2 + $0x18] sm:$0xff] 0.0
        %v203 = vld [vmem:[%s195] sm:$0xff]
        %v204 = vld [vmem:[%s195 + $0x8] sm:$0xff]
        %205 = vst [vmem:[#allocation2 + $0x8] sm:$0xff] %v203
        %206 = vst [vmem:[#allocation2 + $0x10] sm:$0xff] %v204
        %v207 = vld [vmem:[#allocation2 + $0x7] sm:$0xff]
        %v208 = vld [vmem:[#allocation2 + $0xf] sm:$0xff]
        %v209 = vld [vmem:[#allocation3] sm:$0xff]
        %v210 = vld [vmem:[#allocation3 + $0x8] sm:$0xff]
        %v211 = vld [vmem:[#allocation3 + $0x10] sm:$0xff]
        %v212 = vld [vmem:[#allocation3 + $0x18] sm:$0xff]
        %v213 = vld [vmem:[#allocation3 + $0x20] sm:$0xff]
        %v214 = vld [vmem:[#allocation3 + $0x28] sm:$0xff]
        %v215 = vld [vmem:[#allocation3 + $0x30] sm:$0xff]
        %v216 = vld [vmem:[#allocation3 + $0x38] sm:$0xff]
        %v217 = vld [vmem:[#allocation3 + $0x40] sm:$0xff]
        %v218 = vld [vmem:[#allocation3 + $0x48] sm:$0xff]
        %v219 = vld [vmem:[#allocation3 + $0x50] sm:$0xff]
        %v220 = vld [vmem:[#allocation3 + $0x58] sm:$0xff]
        %v221 = vld [vmem:[#allocation3 + $0x60] sm:$0xff]
        %v222 = vld [vmem:[#allocation3 + $0x68] sm:$0xff]
        %v223 = vld [vmem:[#allocation3 + $0x70] sm:$0xff]
        %v224 = vld [vmem:[#allocation3 + $0x78] sm:$0xff]
        %v225 = vld [vmem:[#allocation2 + $0x8] sm:$0xff]
        %v226 = vld [vmem:[#allocation2 + $0x10] sm:$0xff]
        %s227 = scalar_lea.vmem [#allocation3], 128
        %v228 = vld [vmem:[%s227] sm:$0xff]
        %v229 = vld [vmem:[%s227 + $0x8] sm:$0xff]
        %v230 = vld [vmem:[%s227 + $0x10] sm:$0xff]
        %v231 = vld [vmem:[%s227 + $0x18] sm:$0xff]
        %v232 = vld [vmem:[%s227 + $0x20] sm:$0xff]
        %v233 = vld [vmem:[%s227 + $0x28] sm:$0xff]
        %v234 = vld [vmem:[%s227 + $0x30] sm:$0xff]
        %v235 = vld [vmem:[%s227 + $0x38] sm:$0xff]
        %v236 = vld [vmem:[%s227 + $0x40] sm:$0xff]
        %v237 = vld [vmem:[%s227 + $0x48] sm:$0xff]
        %v238 = vld [vmem:[%s227 + $0x50] sm:$0xff]
        %v239 = vld [vmem:[%s227 + $0x58] sm:$0xff]
        %v240 = vld [vmem:[%s227 + $0x60] sm:$0xff]
        %v241 = vld [vmem:[%s227 + $0x68] sm:$0xff]
        %v242 = vld [vmem:[%s227 + $0x70] sm:$0xff]
        %v243 = vld [vmem:[%s227 + $0x78] sm:$0xff]
        %244 = vmatprep.subr.mxu0 0.0
        %245 = vmatpush1.msra.mxu0 %v228
        %246 = vmatprep.subr.mxu0 0.0
        %247 = vmatpush1.msra.mxu0 %v229
        %248 = vmatprep.subr.mxu0 0.0
        %249 = vmatpush1.msra.mxu0 %v230
        %250 = vmatprep.subr.mxu0 0.0
        %251 = vmatpush1.msra.mxu0 %v231
        %252 = vmatprep.subr.mxu0 0.0
        %253 = vmatpush1.msra.mxu0 %v232
        %254 = vmatprep.subr.mxu0 0.0
        %255 = vmatpush1.msra.mxu0 %v233
        %256 = vmatprep.subr.mxu0 0.0
        %257 = vmatpush1.msra.mxu0 %v234
        %258 = vmatprep.subr.mxu0 0.0
        %259 = vmatpush1.msra.mxu0 %v235
        %260 = vmatprep.subr.mxu0 0.0
        %261 = vmatpush1.msra.mxu0 %v236
        %262 = vmatprep.subr.mxu0 0.0
        %263 = vmatpush1.msra.mxu0 %v237
        %264 = vmatprep.subr.mxu0 0.0
        %265 = vmatpush1.msra.mxu0 %v238
        %266 = vmatprep.subr.mxu0 0.0
        %267 = vmatpush1.msra.mxu0 %v239
        %268 = vmatprep.subr.mxu0 0.0
        %269 = vmatpush1.msra.mxu0 %v240
        %270 = vmatprep.subr.mxu0 0.0
        %271 = vmatpush1.msra.mxu0 %v241
        %272 = vmatprep.subr.mxu0 0.0
        %273 = vmatpush1.msra.mxu0 %v242
        %274 = vmatprep.subr.mxu0 0.0
        %275 = vmatpush1.msra.mxu0 %v243
        %276 = vmatprep.subr.mxu0 0.0
        %277 = vmatpush1.msra.mxu0 0.0
        %278 = vmatprep.subr.mxu0 0.0
        %279 = vmatpush1.msra.mxu0 0.0
        %280 = vmatprep.subr.mxu0 0.0
        %281 = vmatpush1.msra.mxu0 0.0
        %282 = vmatprep.subr.mxu0 0.0
        %283 = vmatpush1.msra.mxu0 0.0
        %284 = vmatprep.subr.mxu0 0.0
        %285 = vmatpush1.msra.mxu0 0.0
        %286 = vmatprep.subr.mxu0 0.0
        %287 = vmatpush1.msra.mxu0 0.0
        %288 = vmatprep.subr.mxu0 0.0
        %289 = vmatpush1.msra.mxu0 0.0
        %290 = vmatprep.subr.mxu0 0.0
        %291 = vmatpush1.msra.mxu0 0.0
        %292 = vmatprep.subr.mxu0 0.0
        %293 = vmatpush1.msra.mxu0 0.0
        %294 = vmatprep.subr.mxu0 0.0
        %295 = vmatpush1.msra.mxu0 0.0
        %296 = vmatprep.subr.mxu0 0.0
        %297 = vmatpush1.msra.mxu0 0.0
        %298 = vmatprep.subr.mxu0 0.0
        %299 = vmatpush1.msra.mxu0 0.0
        %300 = vmatprep.subr.mxu0 0.0
        %301 = vmatpush1.msra.mxu0 0.0
        %302 = vmatprep.subr.mxu0 0.0
        %303 = vmatpush1.msra.mxu0 0.0
        %304 = vmatprep.subr.mxu0 0.0
        %305 = vmatpush1.msra.mxu0 0.0
        %306 = vmatprep.subr.mxu0 0.0
        %307 = vmatpush1.msra.mxu0 0.0
        %308 = vmatprep.mubr.f32.mxu0 0.0
        %309 = vmatmul.mubr.f32.gmra.mrb[0].mxu0 %v225
        %v310 = vpop.f32.mrb[0].mxu0
        %v311 = vadd.f32 0.0, %v310
        %v312 = vpop.f32.mrb[0].mxu0
        %313 = vmatprep.mubr.f32.mxu0 0.0
        %314 = vmatmul.mubr.f32.gmra.mrb[0].mxu0 %v226
        %v315 = vpop.f32.mrb[0].mxu0
        %v316 = vadd.f32 0.0, %v315
        %v317 = vpop.f32.mrb[0].mxu0
        %318 = vdwg.mxu0
        %319 = vmatprep.subr.mxu0 0.0
        %320 = vmatpush1.msra.mxu0 %v209
        %321 = vmatprep.subr.mxu0 0.0
        %322 = vmatpush1.msra.mxu0 %v210
        %323 = vmatprep.subr.mxu0 0.0
        %324 = vmatpush1.msra.mxu0 %v211
        %325 = vmatprep.subr.mxu0 0.0
        %326 = vmatpush1.msra.mxu0 %v212
        %327 = vmatprep.subr.mxu0 0.0
        %328 = vmatpush1.msra.mxu0 %v213
        %329 = vmatprep.subr.mxu0 0.0
        %330 = vmatpush1.msra.mxu0 %v214
        %331 = vmatprep.subr.mxu0 0.0
        %332 = vmatpush1.msra.mxu0 %v215
        %333 = vmatprep.subr.mxu0 0.0
        %334 = vmatpush1.msra.mxu0 %v216
        %335 = vmatprep.subr.mxu0 0.0
        %336 = vmatpush1.msra.mxu0 %v217
        %337 = vmatprep.subr.mxu0 0.0
        %338 = vmatpush1.msra.mxu0 %v218
        %339 = vmatprep.subr.mxu0 0.0
        %340 = vmatpush1.msra.mxu0 %v219
        %341 = vmatprep.subr.mxu0 0.0
        %342 = vmatpush1.msra.mxu0 %v220
        %343 = vmatprep.subr.mxu0 0.0
        %344 = vmatpush1.msra.mxu0 %v221
        %345 = vmatprep.subr.mxu0 0.0
        %346 = vmatpush1.msra.mxu0 %v222
        %347 = vmatprep.subr.mxu0 0.0
        %348 = vmatpush1.msra.mxu0 %v223
        %349 = vmatprep.subr.mxu0 0.0
        %350 = vmatpush1.msra.mxu0 %v224
        %351 = vmatprep.subr.mxu0 0.0
        %352 = vmatpush1.msra.mxu0 0.0
        %353 = vmatprep.subr.mxu0 0.0
        %354 = vmatpush1.msra.mxu0 0.0
        %355 = vmatprep.subr.mxu0 0.0
        %356 = vmatpush1.msra.mxu0 0.0
        %357 = vmatprep.subr.mxu0 0.0
        %358 = vmatpush1.msra.mxu0 0.0
        %359 = vmatprep.subr.mxu0 0.0
        %360 = vmatpush1.msra.mxu0 0.0
        %361 = vmatprep.subr.mxu0 0.0
        %362 = vmatpush1.msra.mxu0 0.0
        %363 = vmatprep.subr.mxu0 0.0
        %364 = vmatpush1.msra.mxu0 0.0
        %365 = vmatprep.subr.mxu0 0.0
        %366 = vmatpush1.msra.mxu0 0.0
        %367 = vmatprep.subr.mxu0 0.0
        %368 = vmatpush1.msra.mxu0 0.0
        %369 = vmatprep.subr.mxu0 0.0
        %370 = vmatpush1.msra.mxu0 0.0
        %371 = vmatprep.subr.mxu0 0.0
        %372 = vmatpush1.msra.mxu0 0.0
        %373 = vmatprep.subr.mxu0 0.0
        %374 = vmatpush1.msra.mxu0 0.0
        %375 = vmatprep.subr.mxu0 0.0
        %376 = vmatpush1.msra.mxu0 0.0
        %377 = vmatprep.subr.mxu0 0.0
        %378 = vmatpush1.msra.mxu0 0.0
        %379 = vmatprep.subr.mxu0 0.0
        %380 = vmatpush1.msra.mxu0 0.0
        %381 = vmatprep.subr.mxu0 0.0
        %382 = vmatpush1.msra.mxu0 0.0
        %383 = vmatprep.mubr.f32.mxu0 0.0
        %384 = vmatmul.mubr.f32.gmra.mrb[0].mxu0 %v207
        %v385 = vpop.f32.mrb[0].mxu0
        %v386 = vadd.f32 %v311, %v385
        %v387 = vpop.f32.mrb[0].mxu0
        %388 = vmatprep.mubr.f32.mxu0 0.0
        %389 = vmatmul.mubr.f32.gmra.mrb[0].mxu0 %v208
        %v390 = vpop.f32.mrb[0].mxu0
        %v391 = vadd.f32 %v316, %v390
        %v392 = vpop.f32.mrb[0].mxu0
        %393 = vdwg.mxu0
        %v394 = vld [vmem:[#allocation2 + $0x9] sm:$0xff]
        %v395 = vld [vmem:[#allocation2 + $0x11] sm:$0xff]
        %s396 = scalar_lea.vmem [#allocation3], 256
        %v397 = vld [vmem:[%s396] sm:$0xff]
        %v398 = vld [vmem:[%s396 + $0x8] sm:$0xff]
        %v399 = vld [vmem:[%s396 + $0x10] sm:$0xff]
        %v400 = vld [vmem:[%s396 + $0x18] sm:$0xff]
        %v401 = vld [vmem:[%s396 + $0x20] sm:$0xff]
        %v402 = vld [vmem:[%s396 + $0x28] sm:$0xff]
        %v403 = vld [vmem:[%s396 + $0x30] sm:$0xff]
        %v404 = vld [vmem:[%s396 + $0x38] sm:$0xff]
        %v405 = vld [vmem:[%s396 + $0x40] sm:$0xff]
        %v406 = vld [vmem:[%s396 + $0x48] sm:$0xff]
        %v407 = vld [vmem:[%s396 + $0x50] sm:$0xff]
        %v408 = vld [vmem:[%s396 + $0x58] sm:$0xff]
        %v409 = vld [vmem:[%s396 + $0x60] sm:$0xff]
        %v410 = vld [vmem:[%s396 + $0x68] sm:$0xff]
        %v411 = vld [vmem:[%s396 + $0x70] sm:$0xff]
        %v412 = vld [vmem:[%s396 + $0x78] sm:$0xff]
        %413 = vmatprep.subr.mxu0 0.0
        %414 = vmatpush1.msra.mxu0 %v397
        %415 = vmatprep.subr.mxu0 0.0
        %416 = vmatpush1.msra.mxu0 %v398
        %417 = vmatprep.subr.mxu0 0.0
        %418 = vmatpush1.msra.mxu0 %v399
        %419 = vmatprep.subr.mxu0 0.0
        %420 = vmatpush1.msra.mxu0 %v400
        %421 = vmatprep.subr.mxu0 0.0
        %422 = vmatpush1.msra.mxu0 %v401
        %423 = vmatprep.subr.mxu0 0.0
        %424 = vmatpush1.msra.mxu0 %v402
        %425 = vmatprep.subr.mxu0 0.0
        %426 = vmatpush1.msra.mxu0 %v403
        %427 = vmatprep.subr.mxu0 0.0
        %428 = vmatpush1.msra.mxu0 %v404
        %429 = vmatprep.subr.mxu0 0.0
        %430 = vmatpush1.msra.mxu0 %v405
        %431 = vmatprep.subr.mxu0 0.0
        %432 = vmatpush1.msra.mxu0 %v406
        %433 = vmatprep.subr.mxu0 0.0
        %434 = vmatpush1.msra.mxu0 %v407
        %435 = vmatprep.subr.mxu0 0.0
        %436 = vmatpush1.msra.mxu0 %v408
        %437 = vmatprep.subr.mxu0 0.0
        %438 = vmatpush1.msra.mxu0 %v409
        %439 = vmatprep.subr.mxu0 0.0
        %440 = vmatpush1.msra.mxu0 %v410
        %441 = vmatprep.subr.mxu0 0.0
        %442 = vmatpush1.msra.mxu0 %v411
        %443 = vmatprep.subr.mxu0 0.0
        %444 = vmatpush1.msra.mxu0 %v412
        %445 = vmatprep.subr.mxu0 0.0
        %446 = vmatpush1.msra.mxu0 0.0
        %447 = vmatprep.subr.mxu0 0.0
        %448 = vmatpush1.msra.mxu0 0.0
        %449 = vmatprep.subr.mxu0 0.0
        %450 = vmatpush1.msra.mxu0 0.0
        %451 = vmatprep.subr.mxu0 0.0
        %452 = vmatpush1.msra.mxu0 0.0
        %453 = vmatprep.subr.mxu0 0.0
        %454 = vmatpush1.msra.mxu0 0.0
        %455 = vmatprep.subr.mxu0 0.0
        %456 = vmatpush1.msra.mxu0 0.0
        %457 = vmatprep.subr.mxu0 0.0
        %458 = vmatpush1.msra.mxu0 0.0
        %459 = vmatprep.subr.mxu0 0.0
        %460 = vmatpush1.msra.mxu0 0.0
        %461 = vmatprep.subr.mxu0 0.0
        %462 = vmatpush1.msra.mxu0 0.0
        %463 = vmatprep.subr.mxu0 0.0
        %464 = vmatpush1.msra.mxu0 0.0
        %465 = vmatprep.subr.mxu0 0.0
        %466 = vmatpush1.msra.mxu0 0.0
        %467 = vmatprep.subr.mxu0 0.0
        %468 = vmatpush1.msra.mxu0 0.0
        %469 = vmatprep.subr.mxu0 0.0
        %470 = vmatpush1.msra.mxu0 0.0
        %471 = vmatprep.subr.mxu0 0.0
        %472 = vmatpush1.msra.mxu0 0.0
        %473 = vmatprep.subr.mxu0 0.0
        %474 = vmatpush1.msra.mxu0 0.0
        %475 = vmatprep.subr.mxu0 0.0
        %476 = vmatpush1.msra.mxu0 0.0
        %477 = vmatprep.mubr.f32.mxu0 0.0
        %478 = vmatmul.mubr.f32.gmra.mrb[0].mxu0 %v394
        %v479 = vpop.f32.mrb[0].mxu0
        %v480 = vadd.f32 0.0, %v479
        %v481 = vpop.f32.mrb[0].mxu0
        %482 = vmatprep.mubr.f32.mxu0 0.0
        %483 = vmatmul.mubr.f32.gmra.mrb[0].mxu0 %v395
        %v484 = vpop.f32.mrb[0].mxu0
        %v485 = vadd.f32 0.0, %v484
        %v486 = vpop.f32.mrb[0].mxu0
        %487 = vdwg.mxu0
        %v488 = vadd.f32 %v386, %v480
        %v489 = vadd.f32 %v391, %v485
        %490 = vst [vmem:[#allocation2 + $0x8] sm:$0xff] %v488
        %491 = vst [vmem:[#allocation2 + $0x10] sm:$0xff] %v489
        %v492 = vld [vmem:[#allocation2 + $0x6] sm:$0xff]
        %v493 = vld [vmem:[#allocation2 + $0xe] sm:$0xff]
        %s494 = scalar_lea.vmem [#allocation3], 384
        %v495 = vld [vmem:[%s494] sm:$0xff]
        %v496 = vld [vmem:[%s494 + $0x8] sm:$0xff]
        %v497 = vld [vmem:[%s494 + $0x10] sm:$0xff]
        %v498 = vld [vmem:[%s494 + $0x18] sm:$0xff]
        %v499 = vld [vmem:[%s494 + $0x20] sm:$0xff]
        %v500 = vld [vmem:[%s494 + $0x28] sm:$0xff]
        %v501 = vld [vmem:[%s494 + $0x30] sm:$0xff]
        %v502 = vld [vmem:[%s494 + $0x38] sm:$0xff]
        %v503 = vld [vmem:[%s494 + $0x40] sm:$0xff]
        %v504 = vld [vmem:[%s494 + $0x48] sm:$0xff]
        %v505 = vld [vmem:[%s494 + $0x50] sm:$0xff]
        %v506 = vld [vmem:[%s494 + $0x58] sm:$0xff]
        %v507 = vld [vmem:[%s494 + $0x60] sm:$0xff]
        %v508 = vld [vmem:[%s494 + $0x68] sm:$0xff]
        %v509 = vld [vmem:[%s494 + $0x70] sm:$0xff]
        %v510 = vld [vmem:[%s494 + $0x78] sm:$0xff]
        %v511 = vld [vmem:[#allocation2 + $0x8] sm:$0xff]
        %v512 = vld [vmem:[#allocation2 + $0x10] sm:$0xff]
        %s513 = scalar_lea.vmem [#allocation3], 512
        %v514 = vld [vmem:[%s513] sm:$0xff]
        %v515 = vld [vmem:[%s513 + $0x8] sm:$0xff]
        %v516 = vld [vmem:[%s513 + $0x10] sm:$0xff]
        %v517 = vld [vmem:[%s513 + $0x18] sm:$0xff]
        %v518 = vld [vmem:[%s513 + $0x20] sm:$0xff]
        %v519 = vld [vmem:[%s513 + $0x28] sm:$0xff]
        %v520 = vld [vmem:[%s513 + $0x30] sm:$0xff]
        %v521 = vld [vmem:[%s513 + $0x38] sm:$0xff]
        %v522 = vld [vmem:[%s513 + $0x40] sm:$0xff]
        %v523 = vld [vmem:[%s513 + $0x48] sm:$0xff]
        %v524 = vld [vmem:[%s513 + $0x50] sm:$0xff]
        %v525 = vld [vmem:[%s513 + $0x58] sm:$0xff]
        %v526 = vld [vmem:[%s513 + $0x60] sm:$0xff]
        %v527 = vld [vmem:[%s513 + $0x68] sm:$0xff]
        %v528 = vld [vmem:[%s513 + $0x70] sm:$0xff]
        %v529 = vld [vmem:[%s513 + $0x78] sm:$0xff]
        %530 = vmatprep.subr.mxu0 0.0
        %531 = vmatpush1.msra.mxu0 %v514
        %532 = vmatprep.subr.mxu0 0.0
        %533 = vmatpush1.msra.mxu0 %v515
        %534 = vmatprep.subr.mxu0 0.0
        %535 = vmatpush1.msra.mxu0 %v516
        %536 = vmatprep.subr.mxu0 0.0
        %537 = vmatpush1.msra.mxu0 %v517
        %538 = vmatprep.subr.mxu0 0.0
        %539 = vmatpush1.msra.mxu0 %v518
        %540 = vmatprep.subr.mxu0 0.0
        %541 = vmatpush1.msra.mxu0 %v519
        %542 = vmatprep.subr.mxu0 0.0
        %543 = vmatpush1.msra.mxu0 %v520
        %544 = vmatprep.subr.mxu0 0.0
        %545 = vmatpush1.msra.mxu0 %v521
        %546 = vmatprep.subr.mxu0 0.0
        %547 = vmatpush1.msra.mxu0 %v522
        %548 = vmatprep.subr.mxu0 0.0
        %549 = vmatpush1.msra.mxu0 %v523
        %550 = vmatprep.subr.mxu0 0.0
        %551 = vmatpush1.msra.mxu0 %v524
        %552 = vmatprep.subr.mxu0 0.0
        %553 = vmatpush1.msra.mxu0 %v525
        %554 = vmatprep.subr.mxu0 0.0
        %555 = vmatpush1.msra.mxu0 %v526
        %556 = vmatprep.subr.mxu0 0.0
        %557 = vmatpush1.msra.mxu0 %v527
        %558 = vmatprep.subr.mxu0 0.0
        %559 = vmatpush1.msra.mxu0 %v528
        %560 = vmatprep.subr.mxu0 0.0
        %561 = vmatpush1.msra.mxu0 %v529
        %562 = vmatprep.subr.mxu0 0.0
        %563 = vmatpush1.msra.mxu0 0.0
        %564 = vmatprep.subr.mxu0 0.0
        %565 = vmatpush1.msra.mxu0 0.0
        %566 = vmatprep.subr.mxu0 0.0
        %567 = vmatpush1.msra.mxu0 0.0
        %568 = vmatprep.subr.mxu0 0.0
        %569 = vmatpush1.msra.mxu0 0.0
        %570 = vmatprep.subr.mxu0 0.0
        %571 = vmatpush1.msra.mxu0 0.0
        %572 = vmatprep.subr.mxu0 0.0
        %573 = vmatpush1.msra.mxu0 0.0
        %574 = vmatprep.subr.mxu0 0.0
        %575 = vmatpush1.msra.mxu0 0.0
        %576 = vmatprep.subr.mxu0 0.0
        %577 = vmatpush1.msra.mxu0 0.0
        %578 = vmatprep.subr.mxu0 0.0
        %579 = vmatpush1.msra.mxu0 0.0
        %580 = vmatprep.subr.mxu0 0.0
        %581 = vmatpush1.msra.mxu0 0.0
        %582 = vmatprep.subr.mxu0 0.0
        %583 = vmatpush1.msra.mxu0 0.0
        %584 = vmatprep.subr.mxu0 0.0
        %585 = vmatpush1.msra.mxu0 0.0
        %586 = vmatprep.subr.mxu0 0.0
        %587 = vmatpush1.msra.mxu0 0.0
        %588 = vmatprep.subr.mxu0 0.0
        %589 = vmatpush1.msra.mxu0 0.0
        %590 = vmatprep.subr.mxu0 0.0
        %591 = vmatpush1.msra.mxu0 0.0
        %592 = vmatprep.subr.mxu0 0.0
        %593 = vmatpush1.msra.mxu0 0.0
        %594 = vmatprep.mubr.f32.mxu0 0.0
        %595 = vmatmul.mubr.f32.gmra.mrb[0].mxu0 %v511
        %v596 = vpop.f32.mrb[0].mxu0
        %v597 = vadd.f32 0.0, %v596
        %v598 = vpop.f32.mrb[0].mxu0
        %599 = vmatprep.mubr.f32.mxu0 0.0
        %600 = vmatmul.mubr.f32.gmra.mrb[0].mxu0 %v512
        %v601 = vpop.f32.mrb[0].mxu0
        %v602 = vadd.f32 0.0, %v601
        %v603 = vpop.f32.mrb[0].mxu0
        %604 = vdwg.mxu0
        %605 = vmatprep.subr.mxu0 0.0
        %606 = vmatpush1.msra.mxu0 %v495
        %607 = vmatprep.subr.mxu0 0.0
        %608 = vmatpush1.msra.mxu0 %v496
        %609 = vmatprep.subr.mxu0 0.0
        %610 = vmatpush1.msra.mxu0 %v497
        %611 = vmatprep.subr.mxu0 0.0
        %612 = vmatpush1.msra.mxu0 %v498
        %613 = vmatprep.subr.mxu0 0.0
        %614 = vmatpush1.msra.mxu0 %v499
        %615 = vmatprep.subr.mxu0 0.0
        %616 = vmatpush1.msra.mxu0 %v500
        %617 = vmatprep.subr.mxu0 0.0
        %618 = vmatpush1.msra.mxu0 %v501
        %619 = vmatprep.subr.mxu0 0.0
        %620 = vmatpush1.msra.mxu0 %v502
        %621 = vmatprep.subr.mxu0 0.0
        %622 = vmatpush1.msra.mxu0 %v503
        %623 = vmatprep.subr.mxu0 0.0
        %624 = vmatpush1.msra.mxu0 %v504
        %625 = vmatprep.subr.mxu0 0.0
        %626 = vmatpush1.msra.mxu0 %v505
        %627 = vmatprep.subr.mxu0 0.0
        %628 = vmatpush1.msra.mxu0 %v506
        %629 = vmatprep.subr.mxu0 0.0
        %630 = vmatpush1.msra.mxu0 %v507
        %631 = vmatprep.subr.mxu0 0.0
        %632 = vmatpush1.msra.mxu0 %v508
        %633 = vmatprep.subr.mxu0 0.0
        %634 = vmatpush1.msra.mxu0 %v509
        %635 = vmatprep.subr.mxu0 0.0
        %636 = vmatpush1.msra.mxu0 %v510
        %637 = vmatprep.subr.mxu0 0.0
        %638 = vmatpush1.msra.mxu0 0.0
        %639 = vmatprep.subr.mxu0 0.0
        %640 = vmatpush1.msra.mxu0 0.0
        %641 = vmatprep.subr.mxu0 0.0
        %642 = vmatpush1.msra.mxu0 0.0
        %643 = vmatprep.subr.mxu0 0.0
        %644 = vmatpush1.msra.mxu0 0.0
        %645 = vmatprep.subr.mxu0 0.0
        %646 = vmatpush1.msra.mxu0 0.0
        %647 = vmatprep.subr.mxu0 0.0
        %648 = vmatpush1.msra.mxu0 0.0
        %649 = vmatprep.subr.mxu0 0.0
        %650 = vmatpush1.msra.mxu0 0.0
        %651 = vmatprep.subr.mxu0 0.0
        %652 = vmatpush1.msra.mxu0 0.0
        %653 = vmatprep.subr.mxu0 0.0
        %654 = vmatpush1.msra.mxu0 0.0
        %655 = vmatprep.subr.mxu0 0.0
        %656 = vmatpush1.msra.mxu0 0.0
        %657 = vmatprep.subr.mxu0 0.0
        %658 = vmatpush1.msra.mxu0 0.0
        %659 = vmatprep.subr.mxu0 0.0
        %660 = vmatpush1.msra.mxu0 0.0
        %661 = vmatprep.subr.mxu0 0.0
        %662 = vmatpush1.msra.mxu0 0.0
        %663 = vmatprep.subr.mxu0 0.0
        %664 = vmatpush1.msra.mxu0 0.0
        %665 = vmatprep.subr.mxu0 0.0
        %666 = vmatpush1.msra.mxu0 0.0
        %667 = vmatprep.subr.mxu0 0.0
        %668 = vmatpush1.msra.mxu0 0.0
        %669 = vmatprep.mubr.f32.mxu0 0.0
        %670 = vmatmul.mubr.f32.gmra.mrb[0].mxu0 %v492
        %v671 = vpop.f32.mrb[0].mxu0
        %v672 = vadd.f32 %v597, %v671
        %v673 = vpop.f32.mrb[0].mxu0
        %674 = vmatprep.mubr.f32.mxu0 0.0
        %675 = vmatmul.mubr.f32.gmra.mrb[0].mxu0 %v493
        %v676 = vpop.f32.mrb[0].mxu0
        %v677 = vadd.f32 %v602, %v676
        %v678 = vpop.f32.mrb[0].mxu0
        %679 = vdwg.mxu0
        %v680 = vld [vmem:[#allocation2 + $0xa] sm:$0xff]
        %v681 = vld [vmem:[#allocation2 + $0x12] sm:$0xff]
        %s682 = scalar_lea.vmem [#allocation3], 640
        %v683 = vld [vmem:[%s682] sm:$0xff]
        %v684 = vld [vmem:[%s682 + $0x8] sm:$0xff]
        %v685 = vld [vmem:[%s682 + $0x10] sm:$0xff]
        %v686 = vld [vmem:[%s682 + $0x18] sm:$0xff]
        %v687 = vld [vmem:[%s682 + $0x20] sm:$0xff]
        %v688 = vld [vmem:[%s682 + $0x28] sm:$0xff]
        %v689 = vld [vmem:[%s682 + $0x30] sm:$0xff]
        %v690 = vld [vmem:[%s682 + $0x38] sm:$0xff]
        %v691 = vld [vmem:[%s682 + $0x40] sm:$0xff]
        %v692 = vld [vmem:[%s682 + $0x48] sm:$0xff]
        %v693 = vld [vmem:[%s682 + $0x50] sm:$0xff]
        %v694 = vld [vmem:[%s682 + $0x58] sm:$0xff]
        %v695 = vld [vmem:[%s682 + $0x60] sm:$0xff]
        %v696 = vld [vmem:[%s682 + $0x68] sm:$0xff]
        %v697 = vld [vmem:[%s682 + $0x70] sm:$0xff]
        %v698 = vld [vmem:[%s682 + $0x78] sm:$0xff]
        %699 = vmatprep.subr.mxu0 0.0
        %700 = vmatpush1.msra.mxu0 %v683
        %701 = vmatprep.subr.mxu0 0.0
        %702 = vmatpush1.msra.mxu0 %v684
        %703 = vmatprep.subr.mxu0 0.0
        %704 = vmatpush1.msra.mxu0 %v685
        %705 = vmatprep.subr.mxu0 0.0
        %706 = vmatpush1.msra.mxu0 %v686
        %707 = vmatprep.subr.mxu0 0.0
        %708 = vmatpush1.msra.mxu0 %v687
        %709 = vmatprep.subr.mxu0 0.0
        %710 = vmatpush1.msra.mxu0 %v688
        %711 = vmatprep.subr.mxu0 0.0
        %712 = vmatpush1.msra.mxu0 %v689
        %713 = vmatprep.subr.mxu0 0.0
        %714 = vmatpush1.msra.mxu0 %v690
        %715 = vmatprep.subr.mxu0 0.0
        %716 = vmatpush1.msra.mxu0 %v691
        %717 = vmatprep.subr.mxu0 0.0
        %718 = vmatpush1.msra.mxu0 %v692
        %719 = vmatprep.subr.mxu0 0.0
        %720 = vmatpush1.msra.mxu0 %v693
        %721 = vmatprep.subr.mxu0 0.0
        %722 = vmatpush1.msra.mxu0 %v694
        %723 = vmatprep.subr.mxu0 0.0
        %724 = vmatpush1.msra.mxu0 %v695
        %725 = vmatprep.subr.mxu0 0.0
        %726 = vmatpush1.msra.mxu0 %v696
        %727 = vmatprep.subr.mxu0 0.0
        %728 = vmatpush1.msra.mxu0 %v697
        %729 = vmatprep.subr.mxu0 0.0
        %730 = vmatpush1.msra.mxu0 %v698
        %731 = vmatprep.subr.mxu0 0.0
        %732 = vmatpush1.msra.mxu0 0.0
        %733 = vmatprep.subr.mxu0 0.0
        %734 = vmatpush1.msra.mxu0 0.0
        %735 = vmatprep.subr.mxu0 0.0
        %736 = vmatpush1.msra.mxu0 0.0
        %737 = vmatprep.subr.mxu0 0.0
        %738 = vmatpush1.msra.mxu0 0.0
        %739 = vmatprep.subr.mxu0 0.0
        %740 = vmatpush1.msra.mxu0 0.0
        %741 = vmatprep.subr.mxu0 0.0
        %742 = vmatpush1.msra.mxu0 0.0
        %743 = vmatprep.subr.mxu0 0.0
        %744 = vmatpush1.msra.mxu0 0.0
        %745 = vmatprep.subr.mxu0 0.0
        %746 = vmatpush1.msra.mxu0 0.0
        %747 = vmatprep.subr.mxu0 0.0
        %748 = vmatpush1.msra.mxu0 0.0
        %749 = vmatprep.subr.mxu0 0.0
        %750 = vmatpush1.msra.mxu0 0.0
        %751 = vmatprep.subr.mxu0 0.0
        %752 = vmatpush1.msra.mxu0 0.0
        %753 = vmatprep.subr.mxu0 0.0
        %754 = vmatpush1.msra.mxu0 0.0
        %755 = vmatprep.subr.mxu0 0.0
        %756 = vmatpush1.msra.mxu0 0.0
        %757 = vmatprep.subr.mxu0 0.0
        %758 = vmatpush1.msra.mxu0 0.0
        %759 = vmatprep.subr.mxu0 0.0
        %760 = vmatpush1.msra.mxu0 0.0
        %761 = vmatprep.subr.mxu0 0.0
        %762 = vmatpush1.msra.mxu0 0.0
        %763 = vmatprep.mubr.f32.mxu0 0.0
        %764 = vmatmul.mubr.f32.gmra.mrb[0].mxu0 %v680
        %v765 = vpop.f32.mrb[0].mxu0
        %v766 = vadd.f32 0.0, %v765
        %v767 = vpop.f32.mrb[0].mxu0
        %768 = vmatprep.mubr.f32.mxu0 0.0
        %769 = vmatmul.mubr.f32.gmra.mrb[0].mxu0 %v681
        %v770 = vpop.f32.mrb[0].mxu0
        %v771 = vadd.f32 0.0, %v770
        %v772 = vpop.f32.mrb[0].mxu0
        %773 = vdwg.mxu0
        %v774 = vadd.f32 %v672, %v766
        %v775 = vadd.f32 %v677, %v771
        %776 = vst [vmem:[#allocation2 + $0x8] sm:$0xff] %v774
        %777 = vst [vmem:[#allocation2 + $0x10] sm:$0xff] %v775
        %v778 = vld [vmem:[#allocation2 + $0x4] sm:$0xff]
        %v779 = vld [vmem:[#allocation2 + $0xc] sm:$0xff]
        %s780 = scalar_lea.vmem [#allocation3], 768
        %v781 = vld [vmem:[%s780] sm:$0xff]
        %v782 = vld [vmem:[%s780 + $0x8] sm:$0xff]
        %v783 = vld [vmem:[%s780 + $0x10] sm:$0xff]
        %v784 = vld [vmem:[%s780 + $0x18] sm:$0xff]
        %v785 = vld [vmem:[%s780 + $0x20] sm:$0xff]
        %v786 = vld [vmem:[%s780 + $0x28] sm:$0xff]
        %v787 = vld [vmem:[%s780 + $0x30] sm:$0xff]
        %v788 = vld [vmem:[%s780 + $0x38] sm:$0xff]
        %v789 = vld [vmem:[%s780 + $0x40] sm:$0xff]
        %v790 = vld [vmem:[%s780 + $0x48] sm:$0xff]
        %v791 = vld [vmem:[%s780 + $0x50] sm:$0xff]
        %v792 = vld [vmem:[%s780 + $0x58] sm:$0xff]
        %v793 = vld [vmem:[%s780 + $0x60] sm:$0xff]
        %v794 = vld [vmem:[%s780 + $0x68] sm:$0xff]
        %v795 = vld [vmem:[%s780 + $0x70] sm:$0xff]
        %v796 = vld [vmem:[%s780 + $0x78] sm:$0xff]
        %v797 = vld [vmem:[#allocation2 + $0x8] sm:$0xff]
        %v798 = vld [vmem:[#allocation2 + $0x10] sm:$0xff]
        %s799 = scalar_lea.vmem [#allocation3], 896
        %v800 = vld [vmem:[%s799] sm:$0xff]
        %v801 = vld [vmem:[%s799 + $0x8] sm:$0xff]
        %v802 = vld [vmem:[%s799 + $0x10] sm:$0xff]
        %v803 = vld [vmem:[%s799 + $0x18] sm:$0xff]
        %v804 = vld [vmem:[%s799 + $0x20] sm:$0xff]
        %v805 = vld [vmem:[%s799 + $0x28] sm:$0xff]
        %v806 = vld [vmem:[%s799 + $0x30] sm:$0xff]
        %v807 = vld [vmem:[%s799 + $0x38] sm:$0xff]
        %v808 = vld [vmem:[%s799 + $0x40] sm:$0xff]
        %v809 = vld [vmem:[%s799 + $0x48] sm:$0xff]
        %v810 = vld [vmem:[%s799 + $0x50] sm:$0xff]
        %v811 = vld [vmem:[%s799 + $0x58] sm:$0xff]
        %v812 = vld [vmem:[%s799 + $0x60] sm:$0xff]
        %v813 = vld [vmem:[%s799 + $0x68] sm:$0xff]
        %v814 = vld [vmem:[%s799 + $0x70] sm:$0xff]
        %v815 = vld [vmem:[%s799 + $0x78] sm:$0xff]
        %816 = vmatprep.subr.mxu0 0.0
        %817 = vmatpush1.msra.mxu0 %v800
        %818 = vmatprep.subr.mxu0 0.0
        %819 = vmatpush1.msra.mxu0 %v801
        %820 = vmatprep.subr.mxu0 0.0
        %821 = vmatpush1.msra.mxu0 %v802
        %822 = vmatprep.subr.mxu0 0.0
        %823 = vmatpush1.msra.mxu0 %v803
        %824 = vmatprep.subr.mxu0 0.0
        %825 = vmatpush1.msra.mxu0 %v804
        %826 = vmatprep.subr.mxu0 0.0
        %827 = vmatpush1.msra.mxu0 %v805
        %828 = vmatprep.subr.mxu0 0.0
        %829 = vmatpush1.msra.mxu0 %v806
        %830 = vmatprep.subr.mxu0 0.0
        %831 = vmatpush1.msra.mxu0 %v807
        %832 = vmatprep.subr.mxu0 0.0
        %833 = vmatpush1.msra.mxu0 %v808
        %834 = vmatprep.subr.mxu0 0.0
        %835 = vmatpush1.msra.mxu0 %v809
        %836 = vmatprep.subr.mxu0 0.0
        %837 = vmatpush1.msra.mxu0 %v810
        %838 = vmatprep.subr.mxu0 0.0
        %839 = vmatpush1.msra.mxu0 %v811
        %840 = vmatprep.subr.mxu0 0.0
        %841 = vmatpush1.msra.mxu0 %v812
        %842 = vmatprep.subr.mxu0 0.0
        %843 = vmatpush1.msra.mxu0 %v813
        %844 = vmatprep.subr.mxu0 0.0
        %845 = vmatpush1.msra.mxu0 %v814
        %846 = vmatprep.subr.mxu0 0.0
        %847 = vmatpush1.msra.mxu0 %v815
        %848 = vmatprep.subr.mxu0 0.0
        %849 = vmatpush1.msra.mxu0 0.0
        %850 = vmatprep.subr.mxu0 0.0
        %851 = vmatpush1.msra.mxu0 0.0
        %852 = vmatprep.subr.mxu0 0.0
        %853 = vmatpush1.msra.mxu0 0.0
        %854 = vmatprep.subr.mxu0 0.0
        %855 = vmatpush1.msra.mxu0 0.0
        %856 = vmatprep.subr.mxu0 0.0
        %857 = vmatpush1.msra.mxu0 0.0
        %858 = vmatprep.subr.mxu0 0.0
        %859 = vmatpush1.msra.mxu0 0.0
        %860 = vmatprep.subr.mxu0 0.0
        %861 = vmatpush1.msra.mxu0 0.0
        %862 = vmatprep.subr.mxu0 0.0
        %863 = vmatpush1.msra.mxu0 0.0
        %864 = vmatprep.subr.mxu0 0.0
        %865 = vmatpush1.msra.mxu0 0.0
        %866 = vmatprep.subr.mxu0 0.0
        %867 = vmatpush1.msra.mxu0 0.0
        %868 = vmatprep.subr.mxu0 0.0
        %869 = vmatpush1.msra.mxu0 0.0
        %870 = vmatprep.subr.mxu0 0.0
        %871 = vmatpush1.msra.mxu0 0.0
        %872 = vmatprep.subr.mxu0 0.0
        %873 = vmatpush1.msra.mxu0 0.0
        %874 = vmatprep.subr.mxu0 0.0
        %875 = vmatpush1.msra.mxu0 0.0
        %876 = vmatprep.subr.mxu0 0.0
        %877 = vmatpush1.msra.mxu0 0.0
        %878 = vmatprep.subr.mxu0 0.0
        %879 = vmatpush1.msra.mxu0 0.0
        %880 = vmatprep.mubr.f32.mxu0 0.0
        %881 = vmatmul.mubr.f32.gmra.mrb[0].mxu0 %v797
        %v882 = vpop.f32.mrb[0].mxu0
        %v883 = vadd.f32 0.0, %v882
        %v884 = vpop.f32.mrb[0].mxu0
        %885 = vmatprep.mubr.f32.mxu0 0.0
        %886 = vmatmul.mubr.f32.gmra.mrb[0].mxu0 %v798
        %v887 = vpop.f32.mrb[0].mxu0
        %v888 = vadd.f32 0.0, %v887
        %v889 = vpop.f32.mrb[0].mxu0
        %890 = vdwg.mxu0
        %891 = vmatprep.subr.mxu0 0.0
        %892 = vmatpush1.msra.mxu0 %v781
        %893 = vmatprep.subr.mxu0 0.0
        %894 = vmatpush1.msra.mxu0 %v782
        %895 = vmatprep.subr.mxu0 0.0
        %896 = vmatpush1.msra.mxu0 %v783
        %897 = vmatprep.subr.mxu0 0.0
        %898 = vmatpush1.msra.mxu0 %v784
        %899 = vmatprep.subr.mxu0 0.0
        %900 = vmatpush1.msra.mxu0 %v785
        %901 = vmatprep.subr.mxu0 0.0
        %902 = vmatpush1.msra.mxu0 %v786
        %903 = vmatprep.subr.mxu0 0.0
        %904 = vmatpush1.msra.mxu0 %v787
        %905 = vmatprep.subr.mxu0 0.0
        %906 = vmatpush1.msra.mxu0 %v788
        %907 = vmatprep.subr.mxu0 0.0
        %908 = vmatpush1.msra.mxu0 %v789
        %909 = vmatprep.subr.mxu0 0.0
        %910 = vmatpush1.msra.mxu0 %v790
        %911 = vmatprep.subr.mxu0 0.0
        %912 = vmatpush1.msra.mxu0 %v791
        %913 = vmatprep.subr.mxu0 0.0
        %914 = vmatpush1.msra.mxu0 %v792
        %915 = vmatprep.subr.mxu0 0.0
        %916 = vmatpush1.msra.mxu0 %v793
        %917 = vmatprep.subr.mxu0 0.0
        %918 = vmatpush1.msra.mxu0 %v794
        %919 = vmatprep.subr.mxu0 0.0
        %920 = vmatpush1.msra.mxu0 %v795
        %921 = vmatprep.subr.mxu0 0.0
        %922 = vmatpush1.msra.mxu0 %v796
        %923 = vmatprep.subr.mxu0 0.0
        %924 = vmatpush1.msra.mxu0 0.0
        %925 = vmatprep.subr.mxu0 0.0
        %926 = vmatpush1.msra.mxu0 0.0
        %927 = vmatprep.subr.mxu0 0.0
        %928 = vmatpush1.msra.mxu0 0.0
        %929 = vmatprep.subr.mxu0 0.0
        %930 = vmatpush1.msra.mxu0 0.0
        %931 = vmatprep.subr.mxu0 0.0
        %932 = vmatpush1.msra.mxu0 0.0
        %933 = vmatprep.subr.mxu0 0.0
        %934 = vmatpush1.msra.mxu0 0.0
        %935 = vmatprep.subr.mxu0 0.0
        %936 = vmatpush1.msra.mxu0 0.0
        %937 = vmatprep.subr.mxu0 0.0
        %938 = vmatpush1.msra.mxu0 0.0
        %939 = vmatprep.subr.mxu0 0.0
        %940 = vmatpush1.msra.mxu0 0.0
        %941 = vmatprep.subr.mxu0 0.0
        %942 = vmatpush1.msra.mxu0 0.0
        %943 = vmatprep.subr.mxu0 0.0
        %944 = vmatpush1.msra.mxu0 0.0
        %945 = vmatprep.subr.mxu0 0.0
        %946 = vmatpush1.msra.mxu0 0.0
        %947 = vmatprep.subr.mxu0 0.0
        %948 = vmatpush1.msra.mxu0 0.0
        %949 = vmatprep.subr.mxu0 0.0
        %950 = vmatpush1.msra.mxu0 0.0
        %951 = vmatprep.subr.mxu0 0.0
        %952 = vmatpush1.msra.mxu0 0.0
        %953 = vmatprep.subr.mxu0 0.0
        %954 = vmatpush1.msra.mxu0 0.0
        %955 = vmatprep.mubr.f32.mxu0 0.0
        %956 = vmatmul.mubr.f32.gmra.mrb[0].mxu0 %v778
        %v957 = vpop.f32.mrb[0].mxu0
        %v958 = vadd.f32 %v883, %v957
        %v959 = vpop.f32.mrb[0].mxu0
        %960 = vmatprep.mubr.f32.mxu0 0.0
        %961 = vmatmul.mubr.f32.gmra.mrb[0].mxu0 %v779
        %v962 = vpop.f32.mrb[0].mxu0
        %v963 = vadd.f32 %v888, %v962
        %v964 = vpop.f32.mrb[0].mxu0
        %965 = vdwg.mxu0
        %v966 = vld [vmem:[#allocation2 + $0xc] sm:$0xff]
        %v967 = vld [vmem:[#allocation2 + $0x14] sm:$0xff]
        %s968 = scalar_lea.vmem [#allocation3], 1024
        %v969 = vld [vmem:[%s968] sm:$0xff]
        %v970 = vld [vmem:[%s968 + $0x8] sm:$0xff]
        %v971 = vld [vmem:[%s968 + $0x10] sm:$0xff]
        %v972 = vld [vmem:[%s968 + $0x18] sm:$0xff]
        %v973 = vld [vmem:[%s968 + $0x20] sm:$0xff]
        %v974 = vld [vmem:[%s968 + $0x28] sm:$0xff]
        %v975 = vld [vmem:[%s968 + $0x30] sm:$0xff]
        %v976 = vld [vmem:[%s968 + $0x38] sm:$0xff]
        %v977 = vld [vmem:[%s968 + $0x40] sm:$0xff]
        %v978 = vld [vmem:[%s968 + $0x48] sm:$0xff]
        %v979 = vld [vmem:[%s968 + $0x50] sm:$0xff]
        %v980 = vld [vmem:[%s968 + $0x58] sm:$0xff]
        %v981 = vld [vmem:[%s968 + $0x60] sm:$0xff]
        %v982 = vld [vmem:[%s968 + $0x68] sm:$0xff]
        %v983 = vld [vmem:[%s968 + $0x70] sm:$0xff]
        %v984 = vld [vmem:[%s968 + $0x78] sm:$0xff]
        %985 = vmatprep.subr.mxu0 0.0
        %986 = vmatpush1.msra.mxu0 %v969
        %987 = vmatprep.subr.mxu0 0.0
        %988 = vmatpush1.msra.mxu0 %v970
        %989 = vmatprep.subr.mxu0 0.0
        %990 = vmatpush1.msra.mxu0 %v971
        %991 = vmatprep.subr.mxu0 0.0
        %992 = vmatpush1.msra.mxu0 %v972
        %993 = vmatprep.subr.mxu0 0.0
        %994 = vmatpush1.msra.mxu0 %v973
        %995 = vmatprep.subr.mxu0 0.0
        %996 = vmatpush1.msra.mxu0 %v974
        %997 = vmatprep.subr.mxu0 0.0
        %998 = vmatpush1.msra.mxu0 %v975
        %999 = vmatprep.subr.mxu0 0.0
        %1000 = vmatpush1.msra.mxu0 %v976
        %1001 = vmatprep.subr.mxu0 0.0
        %1002 = vmatpush1.msra.mxu0 %v977
        %1003 = vmatprep.subr.mxu0 0.0
        %1004 = vmatpush1.msra.mxu0 %v978
        %1005 = vmatprep.subr.mxu0 0.0
        %1006 = vmatpush1.msra.mxu0 %v979
        %1007 = vmatprep.subr.mxu0 0.0
        %1008 = vmatpush1.msra.mxu0 %v980
        %1009 = vmatprep.subr.mxu0 0.0
        %1010 = vmatpush1.msra.mxu0 %v981
        %1011 = vmatprep.subr.mxu0 0.0
        %1012 = vmatpush1.msra.mxu0 %v982
        %1013 = vmatprep.subr.mxu0 0.0
        %1014 = vmatpush1.msra.mxu0 %v983
        %1015 = vmatprep.subr.mxu0 0.0
        %1016 = vmatpush1.msra.mxu0 %v984
        %1017 = vmatprep.subr.mxu0 0.0
        %1018 = vmatpush1.msra.mxu0 0.0
        %1019 = vmatprep.subr.mxu0 0.0
        %1020 = vmatpush1.msra.mxu0 0.0
        %1021 = vmatprep.subr.mxu0 0.0
        %1022 = vmatpush1.msra.mxu0 0.0
        %1023 = vmatprep.subr.mxu0 0.0
        %1024 = vmatpush1.msra.mxu0 0.0
        %1025 = vmatprep.subr.mxu0 0.0
        %1026 = vmatpush1.msra.mxu0 0.0
        %1027 = vmatprep.subr.mxu0 0.0
        %1028 = vmatpush1.msra.mxu0 0.0
        %1029 = vmatprep.subr.mxu0 0.0
        %1030 = vmatpush1.msra.mxu0 0.0
        %1031 = vmatprep.subr.mxu0 0.0
        %1032 = vmatpush1.msra.mxu0 0.0
        %1033 = vmatprep.subr.mxu0 0.0
        %1034 = vmatpush1.msra.mxu0 0.0
        %1035 = vmatprep.subr.mxu0 0.0
        %1036 = vmatpush1.msra.mxu0 0.0
        %1037 = vmatprep.subr.mxu0 0.0
        %1038 = vmatpush1.msra.mxu0 0.0
        %1039 = vmatprep.subr.mxu0 0.0
        %1040 = vmatpush1.msra.mxu0 0.0
        %1041 = vmatprep.subr.mxu0 0.0
        %1042 = vmatpush1.msra.mxu0 0.0
        %1043 = vmatprep.subr.mxu0 0.0
        %1044 = vmatpush1.msra.mxu0 0.0
        %1045 = vmatprep.subr.mxu0 0.0
        %1046 = vmatpush1.msra.mxu0 0.0
        %1047 = vmatprep.subr.mxu0 0.0
        %1048 = vmatpush1.msra.mxu0 0.0
        %1049 = vmatprep.mubr.f32.mxu0 0.0
        %1050 = vmatmul.mubr.f32.gmra.mrb[0].mxu0 %v966
        %v1051 = vpop.f32.mrb[0].mxu0
        %v1052 = vadd.f32 0.0, %v1051
        %v1053 = vpop.f32.mrb[0].mxu0
        %1054 = vmatprep.mubr.f32.mxu0 0.0
        %1055 = vmatmul.mubr.f32.gmra.mrb[0].mxu0 %v967
        %v1056 = vpop.f32.mrb[0].mxu0
        %v1057 = vadd.f32 0.0, %v1056
        %v1058 = vpop.f32.mrb[0].mxu0
        %1059 = vdwg.mxu0
        %v1060 = vadd.f32 %v958, %v1052
        %v1061 = vadd.f32 %v963, %v1057
        %1062 = vst [vmem:[#allocation2 + $0x8] sm:$0xff] %v1060
        %1063 = vst [vmem:[#allocation2 + $0x10] sm:$0xff] %v1061
        %v1064 = vld [vmem:[#allocation2] sm:$0xff]
        %v1065 = vld [vmem:[#allocation2 + $0x8] sm:$0xff]
        %s1066 = scalar_lea.vmem [#allocation3], 1152
        %v1067 = vld [vmem:[%s1066] sm:$0xff]
        %v1068 = vld [vmem:[%s1066 + $0x8] sm:$0xff]
        %v1069 = vld [vmem:[%s1066 + $0x10] sm:$0xff]
        %v1070 = vld [vmem:[%s1066 + $0x18] sm:$0xff]
        %v1071 = vld [vmem:[%s1066 + $0x20] sm:$0xff]
        %v1072 = vld [vmem:[%s1066 + $0x28] sm:$0xff]
        %v1073 = vld [vmem:[%s1066 + $0x30] sm:$0xff]
        %v1074 = vld [vmem:[%s1066 + $0x38] sm:$0xff]
        %v1075 = vld [vmem:[%s1066 + $0x40] sm:$0xff]
        %v1076 = vld [vmem:[%s1066 + $0x48] sm:$0xff]
        %v1077 = vld [vmem:[%s1066 + $0x50] sm:$0xff]
        %v1078 = vld [vmem:[%s1066 + $0x58] sm:$0xff]
        %v1079 = vld [vmem:[%s1066 + $0x60] sm:$0xff]
        %v1080 = vld [vmem:[%s1066 + $0x68] sm:$0xff]
        %v1081 = vld [vmem:[%s1066 + $0x70] sm:$0xff]
        %v1082 = vld [vmem:[%s1066 + $0x78] sm:$0xff]
        %v1083 = vld [vmem:[#allocation2 + $0x10] sm:$0xff]
        %s1084 = scalar_lea.vmem [#allocation3], 1280
        %v1085 = vld [vmem:[%s1084] sm:$0xff]
        %v1086 = vld [vmem:[%s1084 + $0x8] sm:$0xff]
        %v1087 = vld [vmem:[%s1084 + $0x10] sm:$0xff]
        %v1088 = vld [vmem:[%s1084 + $0x18] sm:$0xff]
        %v1089 = vld [vmem:[%s1084 + $0x20] sm:$0xff]
        %v1090 = vld [vmem:[%s1084 + $0x28] sm:$0xff]
        %v1091 = vld [vmem:[%s1084 + $0x30] sm:$0xff]
        %v1092 = vld [vmem:[%s1084 + $0x38] sm:$0xff]
        %v1093 = vld [vmem:[%s1084 + $0x40] sm:$0xff]
        %v1094 = vld [vmem:[%s1084 + $0x48] sm:$0xff]
        %v1095 = vld [vmem:[%s1084 + $0x50] sm:$0xff]
        %v1096 = vld [vmem:[%s1084 + $0x58] sm:$0xff]
        %v1097 = vld [vmem:[%s1084 + $0x60] sm:$0xff]
        %v1098 = vld [vmem:[%s1084 + $0x68] sm:$0xff]
        %v1099 = vld [vmem:[%s1084 + $0x70] sm:$0xff]
        %v1100 = vld [vmem:[%s1084 + $0x78] sm:$0xff]
        %1101 = vmatprep.subr.mxu0 0.0
        %1102 = vmatpush1.msra.mxu0 %v1085
        %1103 = vmatprep.subr.mxu0 0.0
        %1104 = vmatpush1.msra.mxu0 %v1086
        %1105 = vmatprep.subr.mxu0 0.0
        %1106 = vmatpush1.msra.mxu0 %v1087
        %1107 = vmatprep.subr.mxu0 0.0
        %1108 = vmatpush1.msra.mxu0 %v1088
        %1109 = vmatprep.subr.mxu0 0.0
        %1110 = vmatpush1.msra.mxu0 %v1089
        %1111 = vmatprep.subr.mxu0 0.0
        %1112 = vmatpush1.msra.mxu0 %v1090
        %1113 = vmatprep.subr.mxu0 0.0
        %1114 = vmatpush1.msra.mxu0 %v1091
        %1115 = vmatprep.subr.mxu0 0.0
        %1116 = vmatpush1.msra.mxu0 %v1092
        %1117 = vmatprep.subr.mxu0 0.0
        %1118 = vmatpush1.msra.mxu0 %v1093
        %1119 = vmatprep.subr.mxu0 0.0
        %1120 = vmatpush1.msra.mxu0 %v1094
        %1121 = vmatprep.subr.mxu0 0.0
        %1122 = vmatpush1.msra.mxu0 %v1095
        %1123 = vmatprep.subr.mxu0 0.0
        %1124 = vmatpush1.msra.mxu0 %v1096
        %1125 = vmatprep.subr.mxu0 0.0
        %1126 = vmatpush1.msra.mxu0 %v1097
        %1127 = vmatprep.subr.mxu0 0.0
        %1128 = vmatpush1.msra.mxu0 %v1098
        %1129 = vmatprep.subr.mxu0 0.0
        %1130 = vmatpush1.msra.mxu0 %v1099
        %1131 = vmatprep.subr.mxu0 0.0
        %1132 = vmatpush1.msra.mxu0 %v1100
        %1133 = vmatprep.subr.mxu0 0.0
        %1134 = vmatpush1.msra.mxu0 0.0
        %1135 = vmatprep.subr.mxu0 0.0
        %1136 = vmatpush1.msra.mxu0 0.0
        %1137 = vmatprep.subr.mxu0 0.0
        %1138 = vmatpush1.msra.mxu0 0.0
        %1139 = vmatprep.subr.mxu0 0.0
        %1140 = vmatpush1.msra.mxu0 0.0
        %1141 = vmatprep.subr.mxu0 0.0
        %1142 = vmatpush1.msra.mxu0 0.0
        %1143 = vmatprep.subr.mxu0 0.0
        %1144 = vmatpush1.msra.mxu0 0.0
        %1145 = vmatprep.subr.mxu0 0.0
        %1146 = vmatpush1.msra.mxu0 0.0
        %1147 = vmatprep.subr.mxu0 0.0
        %1148 = vmatpush1.msra.mxu0 0.0
        %1149 = vmatprep.subr.mxu0 0.0
        %1150 = vmatpush1.msra.mxu0 0.0
        %1151 = vmatprep.subr.mxu0 0.0
        %1152 = vmatpush1.msra.mxu0 0.0
        %1153 = vmatprep.subr.mxu0 0.0
        %1154 = vmatpush1.msra.mxu0 0.0
        %1155 = vmatprep.subr.mxu0 0.0
        %1156 = vmatpush1.msra.mxu0 0.0
        %1157 = vmatprep.subr.mxu0 0.0
        %1158 = vmatpush1.msra.mxu0 0.0
        %1159 = vmatprep.subr.mxu0 0.0
        %1160 = vmatpush1.msra.mxu0 0.0
        %1161 = vmatprep.subr.mxu0 0.0
        %1162 = vmatpush1.msra.mxu0 0.0
        %1163 = vmatprep.subr.mxu0 0.0
        %1164 = vmatpush1.msra.mxu0 0.0
        %1165 = vmatprep.mubr.f32.mxu0 0.0
        %1166 = vmatmul.mubr.f32.gmra.mrb[0].mxu0 %v1065
        %v1167 = vpop.f32.mrb[0].mxu0
        %v1168 = vadd.f32 0.0, %v1167
        %v1169 = vpop.f32.mrb[0].mxu0
        %1170 = vmatprep.mubr.f32.mxu0 0.0
        %1171 = vmatmul.mubr.f32.gmra.mrb[0].mxu0 %v1083
        %v1172 = vpop.f32.mrb[0].mxu0
        %v1173 = vadd.f32 0.0, %v1172
        %v1174 = vpop.f32.mrb[0].mxu0
        %1175 = vdwg.mxu0
        %1176 = vmatprep.subr.mxu0 0.0
        %1177 = vmatpush1.msra.mxu0 %v1067
        %1178 = vmatprep.subr.mxu0 0.0
        %1179 = vmatpush1.msra.mxu0 %v1068
        %1180 = vmatprep.subr.mxu0 0.0
        %1181 = vmatpush1.msra.mxu0 %v1069
        %1182 = vmatprep.subr.mxu0 0.0
        %1183 = vmatpush1.msra.mxu0 %v1070
        %1184 = vmatprep.subr.mxu0 0.0
        %1185 = vmatpush1.msra.mxu0 %v1071
        %1186 = vmatprep.subr.mxu0 0.0
        %1187 = vmatpush1.msra.mxu0 %v1072
        %1188 = vmatprep.subr.mxu0 0.0
        %1189 = vmatpush1.msra.mxu0 %v1073
        %1190 = vmatprep.subr.mxu0 0.0
        %1191 = vmatpush1.msra.mxu0 %v1074
        %1192 = vmatprep.subr.mxu0 0.0
        %1193 = vmatpush1.msra.mxu0 %v1075
        %1194 = vmatprep.subr.mxu0 0.0
        %1195 = vmatpush1.msra.mxu0 %v1076
        %1196 = vmatprep.subr.mxu0 0.0
        %1197 = vmatpush1.msra.mxu0 %v1077
        %1198 = vmatprep.subr.mxu0 0.0
        %1199 = vmatpush1.msra.mxu0 %v1078
        %1200 = vmatprep.subr.mxu0 0.0
        %1201 = vmatpush1.msra.mxu0 %v1079
        %1202 = vmatprep.subr.mxu0 0.0
        %1203 = vmatpush1.msra.mxu0 %v1080
        %1204 = vmatprep.subr.mxu0 0.0
        %1205 = vmatpush1.msra.mxu0 %v1081
        %1206 = vmatprep.subr.mxu0 0.0
        %1207 = vmatpush1.msra.mxu0 %v1082
        %1208 = vmatprep.subr.mxu0 0.0
        %1209 = vmatpush1.msra.mxu0 0.0
        %1210 = vmatprep.subr.mxu0 0.0
        %1211 = vmatpush1.msra.mxu0 0.0
        %1212 = vmatprep.subr.mxu0 0.0
        %1213 = vmatpush1.msra.mxu0 0.0
        %1214 = vmatprep.subr.mxu0 0.0
        %1215 = vmatpush1.msra.mxu0 0.0
        %1216 = vmatprep.subr.mxu0 0.0
        %1217 = vmatpush1.msra.mxu0 0.0
        %1218 = vmatprep.subr.mxu0 0.0
        %1219 = vmatpush1.msra.mxu0 0.0
        %1220 = vmatprep.subr.mxu0 0.0
        %1221 = vmatpush1.msra.mxu0 0.0
        %1222 = vmatprep.subr.mxu0 0.0
        %1223 = vmatpush1.msra.mxu0 0.0
        %1224 = vmatprep.subr.mxu0 0.0
        %1225 = vmatpush1.msra.mxu0 0.0
        %1226 = vmatprep.subr.mxu0 0.0
        %1227 = vmatpush1.msra.mxu0 0.0
        %1228 = vmatprep.subr.mxu0 0.0
        %1229 = vmatpush1.msra.mxu0 0.0
        %1230 = vmatprep.subr.mxu0 0.0
        %1231 = vmatpush1.msra.mxu0 0.0
        %1232 = vmatprep.subr.mxu0 0.0
        %1233 = vmatpush1.msra.mxu0 0.0
        %1234 = vmatprep.subr.mxu0 0.0
        %1235 = vmatpush1.msra.mxu0 0.0
        %1236 = vmatprep.subr.mxu0 0.0
        %1237 = vmatpush1.msra.mxu0 0.0
        %1238 = vmatprep.subr.mxu0 0.0
        %1239 = vmatpush1.msra.mxu0 0.0
        %1240 = vmatprep.mubr.f32.mxu0 0.0
        %1241 = vmatmul.mubr.f32.gmra.mrb[0].mxu0 %v1064
        %v1242 = vpop.f32.mrb[0].mxu0
        %v1243 = vadd.f32 %v1168, %v1242
        %v1244 = vpop.f32.mrb[0].mxu0
        %1245 = vmatprep.mubr.f32.mxu0 0.0
        %1246 = vmatmul.mubr.f32.gmra.mrb[0].mxu0 %v1065
        %v1247 = vpop.f32.mrb[0].mxu0
        %v1248 = vadd.f32 %v1173, %v1247
        %v1249 = vpop.f32.mrb[0].mxu0
        %1250 = vdwg.mxu0
        %v1251 = vld [vmem:[#allocation2 + $0x10] sm:$0xff]
        %v1252 = vld [vmem:[#allocation2 + $0x18] sm:$0xff]
        %s1253 = scalar_lea.vmem [#allocation3], 1408
        %v1254 = vld [vmem:[%s1253] sm:$0xff]
        %v1255 = vld [vmem:[%s1253 + $0x8] sm:$0xff]
        %v1256 = vld [vmem:[%s1253 + $0x10] sm:$0xff]
        %v1257 = vld [vmem:[%s1253 + $0x18] sm:$0xff]
        %v1258 = vld [vmem:[%s1253 + $0x20] sm:$0xff]
        %v1259 = vld [vmem:[%s1253 + $0x28] sm:$0xff]
        %v1260 = vld [vmem:[%s1253 + $0x30] sm:$0xff]
        %v1261 = vld [vmem:[%s1253 + $0x38] sm:$0xff]
        %v1262 = vld [vmem:[%s1253 + $0x40] sm:$0xff]
        %v1263 = vld [vmem:[%s1253 + $0x48] sm:$0xff]
        %v1264 = vld [vmem:[%s1253 + $0x50] sm:$0xff]
        %v1265 = vld [vmem:[%s1253 + $0x58] sm:$0xff]
        %v1266 = vld [vmem:[%s1253 + $0x60] sm:$0xff]
        %v1267 = vld [vmem:[%s1253 + $0x68] sm:$0xff]
        %v1268 = vld [vmem:[%s1253 + $0x70] sm:$0xff]
        %v1269 = vld [vmem:[%s1253 + $0x78] sm:$0xff]
        %1270 = vmatprep.subr.mxu0 0.0
        %1271 = vmatpush1.msra.mxu0 %v1254
        %1272 = vmatprep.subr.mxu0 0.0
        %1273 = vmatpush1.msra.mxu0 %v1255
        %1274 = vmatprep.subr.mxu0 0.0
        %1275 = vmatpush1.msra.mxu0 %v1256
        %1276 = vmatprep.subr.mxu0 0.0
        %1277 = vmatpush1.msra.mxu0 %v1257
        %1278 = vmatprep.subr.mxu0 0.0
        %1279 = vmatpush1.msra.mxu0 %v1258
        %1280 = vmatprep.subr.mxu0 0.0
        %1281 = vmatpush1.msra.mxu0 %v1259
        %1282 = vmatprep.subr.mxu0 0.0
        %1283 = vmatpush1.msra.mxu0 %v1260
        %1284 = vmatprep.subr.mxu0 0.0
        %1285 = vmatpush1.msra.mxu0 %v1261
        %1286 = vmatprep.subr.mxu0 0.0
        %1287 = vmatpush1.msra.mxu0 %v1262
        %1288 = vmatprep.subr.mxu0 0.0
        %1289 = vmatpush1.msra.mxu0 %v1263
        %1290 = vmatprep.subr.mxu0 0.0
        %1291 = vmatpush1.msra.mxu0 %v1264
        %1292 = vmatprep.subr.mxu0 0.0
        %1293 = vmatpush1.msra.mxu0 %v1265
        %1294 = vmatprep.subr.mxu0 0.0
        %1295 = vmatpush1.msra.mxu0 %v1266
        %1296 = vmatprep.subr.mxu0 0.0
        %1297 = vmatpush1.msra.mxu0 %v1267
        %1298 = vmatprep.subr.mxu0 0.0
        %1299 = vmatpush1.msra.mxu0 %v1268
        %1300 = vmatprep.subr.mxu0 0.0
        %1301 = vmatpush1.msra.mxu0 %v1269
        %1302 = vmatprep.subr.mxu0 0.0
        %1303 = vmatpush1.msra.mxu0 0.0
        %1304 = vmatprep.subr.mxu0 0.0
        %1305 = vmatpush1.msra.mxu0 0.0
        %1306 = vmatprep.subr.mxu0 0.0
        %1307 = vmatpush1.msra.mxu0 0.0
        %1308 = vmatprep.subr.mxu0 0.0
        %1309 = vmatpush1.msra.mxu0 0.0
        %1310 = vmatprep.subr.mxu0 0.0
        %1311 = vmatpush1.msra.mxu0 0.0
        %1312 = vmatprep.subr.mxu0 0.0
        %1313 = vmatpush1.msra.mxu0 0.0
        %1314 = vmatprep.subr.mxu0 0.0
        %1315 = vmatpush1.msra.mxu0 0.0
        %1316 = vmatprep.subr.mxu0 0.0
        %1317 = vmatpush1.msra.mxu0 0.0
        %1318 = vmatprep.subr.mxu0 0.0
        %1319 = vmatpush1.msra.mxu0 0.0
        %1320 = vmatprep.subr.mxu0 0.0
        %1321 = vmatpush1.msra.mxu0 0.0
        %1322 = vmatprep.subr.mxu0 0.0
        %1323 = vmatpush1.msra.mxu0 0.0
        %1324 = vmatprep.subr.mxu0 0.0
        %1325 = vmatpush1.msra.mxu0 0.0
        %1326 = vmatprep.subr.mxu0 0.0
        %1327 = vmatpush1.msra.mxu0 0.0
        %1328 = vmatprep.subr.mxu0 0.0
        %1329 = vmatpush1.msra.mxu0 0.0
        %1330 = vmatprep.subr.mxu0 0.0
        %1331 = vmatpush1.msra.mxu0 0.0
        %1332 = vmatprep.subr.mxu0 0.0
        %1333 = vmatpush1.msra.mxu0 0.0
        %1334 = vmatprep.mubr.f32.mxu0 0.0
        %1335 = vmatmul.mubr.f32.gmra.mrb[0].mxu0 %v1251
        %v1336 = vpop.f32.mrb[0].mxu0
        %v1337 = vadd.f32 0.0, %v1336
        %v1338 = vpop.f32.mrb[0].mxu0
        %1339 = vmatprep.mubr.f32.mxu0 0.0
        %1340 = vmatmul.mubr.f32.gmra.mrb[0].mxu0 %v1252
        %v1341 = vpop.f32.mrb[0].mxu0
        %v1342 = vadd.f32 0.0, %v1341
        %v1343 = vpop.f32.mrb[0].mxu0
        %1344 = vdwg.mxu0
        %v1345 = vadd.f32 %v1243, %v1337
        %v1346 = vadd.f32 %v1248, %v1342
        %1347 = vst [vmem:[#allocation2 + $0x8] sm:$0xff] %v1345
        %1348 = vst [vmem:[#allocation2 + $0x10] sm:$0xff] %v1346
        %v1349 = vld [vmem:[#allocation2 + $0x8] sm:$0xff]
        %v1350 = vld [vmem:[#allocation2 + $0x10] sm:$0xff]
        %s1351 = scalar_lea.vmem [#allocation3], 1536
        %v1352 = vld [vmem:[%s1351] sm:$0xff]
        %v1353 = vld [vmem:[%s1351 + $0x8] sm:$0xff]
        %v1354 = vld [vmem:[%s1351 + $0x10] sm:$0xff]
        %v1355 = vld [vmem:[%s1351 + $0x18] sm:$0xff]
        %v1356 = vld [vmem:[%s1351 + $0x20] sm:$0xff]
        %v1357 = vld [vmem:[%s1351 + $0x28] sm:$0xff]
        %v1358 = vld [vmem:[%s1351 + $0x30] sm:$0xff]
        %v1359 = vld [vmem:[%s1351 + $0x38] sm:$0xff]
        %v1360 = vld [vmem:[%s1351 + $0x40] sm:$0xff]
        %v1361 = vld [vmem:[%s1351 + $0x48] sm:$0xff]
        %v1362 = vld [vmem:[%s1351 + $0x50] sm:$0xff]
        %v1363 = vld [vmem:[%s1351 + $0x58] sm:$0xff]
        %v1364 = vld [vmem:[%s1351 + $0x60] sm:$0xff]
        %v1365 = vld [vmem:[%s1351 + $0x68] sm:$0xff]
        %v1366 = vld [vmem:[%s1351 + $0x70] sm:$0xff]
        %v1367 = vld [vmem:[%s1351 + $0x78] sm:$0xff]
        %1368 = vmatprep.subr.mxu0 0.0
        %1369 = vmatpush1.msra.mxu0 %v1352
        %1370 = vmatprep.subr.mxu0 0.0
        %1371 = vmatpush1.msra.mxu0 %v1353
        %1372 = vmatprep.subr.mxu0 0.0
        %1373 = vmatpush1.msra.mxu0 %v1354
        %1374 = vmatprep.subr.mxu0 0.0
        %1375 = vmatpush1.msra.mxu0 %v1355
        %1376 = vmatprep.subr.mxu0 0.0
        %1377 = vmatpush1.msra.mxu0 %v1356
        %1378 = vmatprep.subr.mxu0 0.0
        %1379 = vmatpush1.msra.mxu0 %v1357
        %1380 = vmatprep.subr.mxu0 0.0
        %1381 = vmatpush1.msra.mxu0 %v1358
        %1382 = vmatprep.subr.mxu0 0.0
        %1383 = vmatpush1.msra.mxu0 %v1359
        %1384 = vmatprep.subr.mxu0 0.0
        %1385 = vmatpush1.msra.mxu0 %v1360
        %1386 = vmatprep.subr.mxu0 0.0
        %1387 = vmatpush1.msra.mxu0 %v1361
        %1388 = vmatprep.subr.mxu0 0.0
        %1389 = vmatpush1.msra.mxu0 %v1362
        %1390 = vmatprep.subr.mxu0 0.0
        %1391 = vmatpush1.msra.mxu0 %v1363
        %1392 = vmatprep.subr.mxu0 0.0
        %1393 = vmatpush1.msra.mxu0 %v1364
        %1394 = vmatprep.subr.mxu0 0.0
        %1395 = vmatpush1.msra.mxu0 %v1365
        %1396 = vmatprep.subr.mxu0 0.0
        %1397 = vmatpush1.msra.mxu0 %v1366
        %1398 = vmatprep.subr.mxu0 0.0
        %1399 = vmatpush1.msra.mxu0 %v1367
        %1400 = vmatprep.subr.mxu0 0.0
        %1401 = vmatpush1.msra.mxu0 0.0
        %1402 = vmatprep.subr.mxu0 0.0
        %1403 = vmatpush1.msra.mxu0 0.0
        %1404 = vmatprep.subr.mxu0 0.0
        %1405 = vmatpush1.msra.mxu0 0.0
        %1406 = vmatprep.subr.mxu0 0.0
        %1407 = vmatpush1.msra.mxu0 0.0
        %1408 = vmatprep.subr.mxu0 0.0
        %1409 = vmatpush1.msra.mxu0 0.0
        %1410 = vmatprep.subr.mxu0 0.0
        %1411 = vmatpush1.msra.mxu0 0.0
        %1412 = vmatprep.subr.mxu0 0.0
        %1413 = vmatpush1.msra.mxu0 0.0
        %1414 = vmatprep.subr.mxu0 0.0
        %1415 = vmatpush1.msra.mxu0 0.0
        %1416 = vmatprep.subr.mxu0 0.0
        %1417 = vmatpush1.msra.mxu0 0.0
        %1418 = vmatprep.subr.mxu0 0.0
        %1419 = vmatpush1.msra.mxu0 0.0
        %1420 = vmatprep.subr.mxu0 0.0
        %1421 = vmatpush1.msra.mxu0 0.0
        %1422 = vmatprep.subr.mxu0 0.0
        %1423 = vmatpush1.msra.mxu0 0.0
        %1424 = vmatprep.subr.mxu0 0.0
        %1425 = vmatpush1.msra.mxu0 0.0
        %1426 = vmatprep.subr.mxu0 0.0
        %1427 = vmatpush1.msra.mxu0 0.0
        %1428 = vmatprep.subr.mxu0 0.0
        %1429 = vmatpush1.msra.mxu0 0.0
        %1430 = vmatprep.subr.mxu0 0.0
        %1431 = vmatpush1.msra.mxu0 0.0
        %1432 = vmatprep.mubr.f32.mxu0 0.0
        %1433 = vmatmul.mubr.f32.gmra.mrb[0].mxu0 %v1349
        %v1434 = vpop.f32.mrb[0].mxu0
        %v1435 = vadd.f32 0.0, %v1434
        %v1436 = vpop.f32.mrb[0].mxu0
        %1437 = vmatprep.mubr.f32.mxu0 0.0
        %1438 = vmatmul.mubr.f32.gmra.mrb[0].mxu0 %v1350
        %v1439 = vpop.f32.mrb[0].mxu0
        %v1440 = vadd.f32 0.0, %v1439
        %v1441 = vpop.f32.mrb[0].mxu0
        %1442 = vdwg.mxu0
        %v1443 = vld [vmem:[#allocation5] sm:$0xff]
        %v1444 = vld [vmem:[#allocation5 + $0x8] sm:$0xff]
        %v1445 = vld [vmem:[#allocation5 + $0x10] sm:$0xff]
        %v1446 = vld [vmem:[#allocation5 + $0x18] sm:$0xff]
        %v1447 = vld [vmem:[#allocation5 + $0x20] sm:$0xff]
        %v1448 = vld [vmem:[#allocation5 + $0x28] sm:$0xff]
        %v1449 = vld [vmem:[#allocation5 + $0x30] sm:$0xff]
        %v1450 = vld [vmem:[#allocation5 + $0x38] sm:$0xff]
        %v1451 = vld [vmem:[#allocation5 + $0x40] sm:$0xff]
        %v1452 = vld [vmem:[#allocation5 + $0x48] sm:$0xff]
        %v1453 = vld [vmem:[#allocation5 + $0x50] sm:$0xff]
        %v1454 = vld [vmem:[#allocation5 + $0x58] sm:$0xff]
        %v1455 = vld [vmem:[#allocation5 + $0x60] sm:$0xff]
        %v1456 = vld [vmem:[#allocation5 + $0x68] sm:$0xff]
        %v1457 = vld [vmem:[#allocation5 + $0x70] sm:$0xff]
        %v1458 = vld [vmem:[#allocation5 + $0x78] sm:$0xff]
        %1459 = vst [vmem:[#allocation2 + $0x8] sm:$0xff] %v203
        %1460 = vst [vmem:[#allocation2 + $0x10] sm:$0xff] %v204
        %v1461 = vld [vmem:[#allocation2 + $0x7] sm:$0xff]
        %v1462 = vld [vmem:[#allocation2 + $0xf] sm:$0xff]
        %s1463 = scalar_lea.vmem [#allocation3], 1664
        %v1464 = vld [vmem:[%s1463] sm:$0xff]
        %v1465 = vld [vmem:[%s1463 + $0x8] sm:$0xff]
        %v1466 = vld [vmem:[%s1463 + $0x10] sm:$0xff]
        %v1467 = vld [vmem:[%s1463 + $0x18] sm:$0xff]
        %v1468 = vld [vmem:[%s1463 + $0x20] sm:$0xff]
        %v1469 = vld [vmem:[%s1463 + $0x28] sm:$0xff]
        %v1470 = vld [vmem:[%s1463 + $0x30] sm:$0xff]
        %v1471 = vld [vmem:[%s1463 + $0x38] sm:$0xff]
        %v1472 = vld [vmem:[%s1463 + $0x40] sm:$0xff]
        %v1473 = vld [vmem:[%s1463 + $0x48] sm:$0xff]
        %v1474 = vld [vmem:[%s1463 + $0x50] sm:$0xff]
        %v1475 = vld [vmem:[%s1463 + $0x58] sm:$0xff]
        %v1476 = vld [vmem:[%s1463 + $0x60] sm:$0xff]
        %v1477 = vld [vmem:[%s1463 + $0x68] sm:$0xff]
        %v1478 = vld [vmem:[%s1463 + $0x70] sm:$0xff]
        %v1479 = vld [vmem:[%s1463 + $0x78] sm:$0xff]
        %v1480 = vld [vmem:[#allocation2 + $0x8] sm:$0xff]
        %v1481 = vld [vmem:[#allocation2 + $0x10] sm:$0xff]
        %s1482 = scalar_lea.vmem [#allocation3], 1792
        %v1483 = vld [vmem:[%s1482] sm:$0xff]
        %v1484 = vld [vmem:[%s1482 + $0x8] sm:$0xff]
        %v1485 = vld [vmem:[%s1482 + $0x10] sm:$0xff]
        %v1486 = vld [vmem:[%s1482 + $0x18] sm:$0xff]
        %v1487 = vld [vmem:[%s1482 + $0x20] sm:$0xff]
        %v1488 = vld [vmem:[%s1482 + $0x28] sm:$0xff]
        %v1489 = vld [vmem:[%s1482 + $0x30] sm:$0xff]
        %v1490 = vld [vmem:[%s1482 + $0x38] sm:$0xff]
        %v1491 = vld [vmem:[%s1482 + $0x40] sm:$0xff]
        %v1492 = vld [vmem:[%s1482 + $0x48] sm:$0xff]
        %v1493 = vld [vmem:[%s1482 + $0x50] sm:$0xff]
        %v1494 = vld [vmem:[%s1482 + $0x58] sm:$0xff]
        %v1495 = vld [vmem:[%s1482 + $0x60] sm:$0xff]
        %v1496 = vld [vmem:[%s1482 + $0x68] sm:$0xff]
        %v1497 = vld [vmem:[%s1482 + $0x70] sm:$0xff]
        %v1498 = vld [vmem:[%s1482 + $0x78] sm:$0xff]
        %1499 = vmatprep.subr.mxu0 0.0
        %1500 = vmatpush1.msra.mxu0 %v1483
        %1501 = vmatprep.subr.mxu0 0.0
        %1502 = vmatpush1.msra.mxu0 %v1484
        %1503 = vmatprep.subr.mxu0 0.0
        %1504 = vmatpush1.msra.mxu0 %v1485
        %1505 = vmatprep.subr.mxu0 0.0
        %1506 = vmatpush1.msra.mxu0 %v1486
        %1507 = vmatprep.subr.mxu0 0.0
        %1508 = vmatpush1.msra.mxu0 %v1487
        %1509 = vmatprep.subr.mxu0 0.0
        %1510 = vmatpush1.msra.mxu0 %v1488
        %1511 = vmatprep.subr.mxu0 0.0
        %1512 = vmatpush1.msra.mxu0 %v1489
        %1513 = vmatprep.subr.mxu0 0.0
        %1514 = vmatpush1.msra.mxu0 %v1490
        %1515 = vmatprep.subr.mxu0 0.0
        %1516 = vmatpush1.msra.mxu0 %v1491
        %1517 = vmatprep.subr.mxu0 0.0
        %1518 = vmatpush1.msra.mxu0 %v1492
        %1519 = vmatprep.subr.mxu0 0.0
        %1520 = vmatpush1.msra.mxu0 %v1493
        %1521 = vmatprep.subr.mxu0 0.0
        %1522 = vmatpush1.msra.mxu0 %v1494
        %1523 = vmatprep.subr.mxu0 0.0
        %1524 = vmatpush1.msra.mxu0 %v1495
        %1525 = vmatprep.subr.mxu0 0.0
        %1526 = vmatpush1.msra.mxu0 %v1496
        %1527 = vmatprep.subr.mxu0 0.0
        %1528 = vmatpush1.msra.mxu0 %v1497
        %1529 = vmatprep.subr.mxu0 0.0
        %1530 = vmatpush1.msra.mxu0 %v1498
        %1531 = vmatprep.subr.mxu0 0.0
        %1532 = vmatpush1.msra.mxu0 0.0
        %1533 = vmatprep.subr.mxu0 0.0
        %1534 = vmatpush1.msra.mxu0 0.0
        %1535 = vmatprep.subr.mxu0 0.0
        %1536 = vmatpush1.msra.mxu0 0.0
        %1537 = vmatprep.subr.mxu0 0.0
        %1538 = vmatpush1.msra.mxu0 0.0
        %1539 = vmatprep.subr.mxu0 0.0
        %1540 = vmatpush1.msra.mxu0 0.0
        %1541 = vmatprep.subr.mxu0 0.0
        %1542 = vmatpush1.msra.mxu0 0.0
        %1543 = vmatprep.subr.mxu0 0.0
        %1544 = vmatpush1.msra.mxu0 0.0
        %1545 = vmatprep.subr.mxu0 0.0
        %1546 = vmatpush1.msra.mxu0 0.0
        %1547 = vmatprep.subr.mxu0 0.0
        %1548 = vmatpush1.msra.mxu0 0.0
        %1549 = vmatprep.subr.mxu0 0.0
        %1550 = vmatpush1.msra.mxu0 0.0
        %1551 = vmatprep.subr.mxu0 0.0
        %1552 = vmatpush1.msra.mxu0 0.0
        %1553 = vmatprep.subr.mxu0 0.0
        %1554 = vmatpush1.msra.mxu0 0.0
        %1555 = vmatprep.subr.mxu0 0.0
        %1556 = vmatpush1.msra.mxu0 0.0
        %1557 = vmatprep.subr.mxu0 0.0
        %1558 = vmatpush1.msra.mxu0 0.0
        %1559 = vmatprep.subr.mxu0 0.0
        %1560 = vmatpush1.msra.mxu0 0.0
        %1561 = vmatprep.subr.mxu0 0.0
        %1562 = vmatpush1.msra.mxu0 0.0
        %1563 = vmatprep.mubr.f32.mxu0 0.0
        %1564 = vmatmul.mubr.f32.gmra.mrb[0].mxu0 %v1480
        %v1565 = vpop.f32.mrb[0].mxu0
        %v1566 = vadd.f32 0.0, %v1565
        %v1567 = vpop.f32.mrb[0].mxu0
        %1568 = vmatprep.mubr.f32.mxu0 0.0
        %1569 = vmatmul.mubr.f32.gmra.mrb[0].mxu0 %v1481
        %v1570 = vpop.f32.mrb[0].mxu0
        %v1571 = vadd.f32 0.0, %v1570
        %v1572 = vpop.f32.mrb[0].mxu0
        %1573 = vdwg.mxu0
        %1574 = vmatprep.subr.mxu0 0.0
        %1575 = vmatpush1.msra.mxu0 %v1464
        %1576 = vmatprep.subr.mxu0 0.0
        %1577 = vmatpush1.msra.mxu0 %v1465
        %1578 = vmatprep.subr.mxu0 0.0
        %1579 = vmatpush1.msra.mxu0 %v1466
        %1580 = vmatprep.subr.mxu0 0.0
        %1581 = vmatpush1.msra.mxu0 %v1467
        %1582 = vmatprep.subr.mxu0 0.0
        %1583 = vmatpush1.msra.mxu0 %v1468
        %1584 = vmatprep.subr.mxu0 0.0
        %1585 = vmatpush1.msra.mxu0 %v1469
        %1586 = vmatprep.subr.mxu0 0.0
        %1587 = vmatpush1.msra.mxu0 %v1470
        %1588 = vmatprep.subr.mxu0 0.0
        %1589 = vmatpush1.msra.mxu0 %v1471
        %1590 = vmatprep.subr.mxu0 0.0
        %1591 = vmatpush1.msra.mxu0 %v1472
        %1592 = vmatprep.subr.mxu0 0.0
        %1593 = vmatpush1.msra.mxu0 %v1473
        %1594 = vmatprep.subr.mxu0 0.0
        %1595 = vmatpush1.msra.mxu0 %v1474
        %1596 = vmatprep.subr.mxu0 0.0
        %1597 = vmatpush1.msra.mxu0 %v1475
        %1598 = vmatprep.subr.mxu0 0.0
        %1599 = vmatpush1.msra.mxu0 %v1476
        %1600 = vmatprep.subr.mxu0 0.0
        %1601 = vmatpush1.msra.mxu0 %v1477
        %1602 = vmatprep.subr.mxu0 0.0
        %1603 = vmatpush1.msra.mxu0 %v1478
        %1604 = vmatprep.subr.mxu0 0.0
        %1605 = vmatpush1.msra.mxu0 %v1479
        %1606 = vmatprep.subr.mxu0 0.0
        %1607 = vmatpush1.msra.mxu0 0.0
        %1608 = vmatprep.subr.mxu0 0.0
        %1609 = vmatpush1.msra.mxu0 0.0
        %1610 = vmatprep.subr.mxu0 0.0
        %1611 = vmatpush1.msra.mxu0 0.0
        %1612 = vmatprep.subr.mxu0 0.0
        %1613 = vmatpush1.msra.mxu0 0.0
        %1614 = vmatprep.subr.mxu0 0.0
        %1615 = vmatpush1.msra.mxu0 0.0
        %1616 = vmatprep.subr.mxu0 0.0
        %1617 = vmatpush1.msra.mxu0 0.0
        %1618 = vmatprep.subr.mxu0 0.0
        %1619 = vmatpush1.msra.mxu0 0.0
        %1620 = vmatprep.subr.mxu0 0.0
        %1621 = vmatpush1.msra.mxu0 0.0
        %1622 = vmatprep.subr.mxu0 0.0
        %1623 = vmatpush1.msra.mxu0 0.0
        %1624 = vmatprep.subr.mxu0 0.0
        %1625 = vmatpush1.msra.mxu0 0.0
        %1626 = vmatprep.subr.mxu0 0.0
        %1627 = vmatpush1.msra.mxu0 0.0
        %1628 = vmatprep.subr.mxu0 0.0
        %1629 = vmatpush1.msra.mxu0 0.0
        %1630 = vmatprep.subr.mxu0 0.0
        %1631 = vmatpush1.msra.mxu0 0.0
        %1632 = vmatprep.subr.mxu0 0.0
        %1633 = vmatpush1.msra.mxu0 0.0
        %1634 = vmatprep.subr.mxu0 0.0
        %1635 = vmatpush1.msra.mxu0 0.0
        %1636 = vmatprep.subr.mxu0 0.0
        %1637 = vmatpush1.msra.mxu0 0.0
        %1638 = vmatprep.mubr.f32.mxu0 0.0
        %1639 = vmatmul.mubr.f32.gmra.mrb[0].mxu0 %v1461
        %v1640 = vpop.f32.mrb[0].mxu0
        %v1641 = vadd.f32 %v1566, %v1640
        %v1642 = vpop.f32.mrb[0].mxu0
        %1643 = vmatprep.mubr.f32.mxu0 0.0
        %1644 = vmatmul.mubr.f32.gmra.mrb[0].mxu0 %v1462
        %v1645 = vpop.f32.mrb[0].mxu0
        %v1646 = vadd.f32 %v1571, %v1645
        %v1647 = vpop.f32.mrb[0].mxu0
        %1648 = vdwg.mxu0
        %v1649 = vld [vmem:[#allocation2 + $0x9] sm:$0xff]
        %v1650 = vld [vmem:[#allocation2 + $0x11] sm:$0xff]
        %s1651 = scalar_lea.vmem [#allocation3], 1920
        %v1652 = vld [vmem:[%s1651] sm:$0xff]
        %v1653 = vld [vmem:[%s1651 + $0x8] sm:$0xff]
        %v1654 = vld [vmem:[%s1651 + $0x10] sm:$0xff]
        %v1655 = vld [vmem:[%s1651 + $0x18] sm:$0xff]
        %v1656 = vld [vmem:[%s1651 + $0x20] sm:$0xff]
        %v1657 = vld [vmem:[%s1651 + $0x28] sm:$0xff]
        %v1658 = vld [vmem:[%s1651 + $0x30] sm:$0xff]
        %v1659 = vld [vmem:[%s1651 + $0x38] sm:$0xff]
        %v1660 = vld [vmem:[%s1651 + $0x40] sm:$0xff]
        %v1661 = vld [vmem:[%s1651 + $0x48] sm:$0xff]
        %v1662 = vld [vmem:[%s1651 + $0x50] sm:$0xff]
        %v1663 = vld [vmem:[%s1651 + $0x58] sm:$0xff]
        %v1664 = vld [vmem:[%s1651 + $0x60] sm:$0xff]
        %v1665 = vld [vmem:[%s1651 + $0x68] sm:$0xff]
        %v1666 = vld [vmem:[%s1651 + $0x70] sm:$0xff]
        %v1667 = vld [vmem:[%s1651 + $0x78] sm:$0xff]
        %1668 = vmatprep.subr.mxu0 0.0
        %1669 = vmatpush1.msra.mxu0 %v1652
        %1670 = vmatprep.subr.mxu0 0.0
        %1671 = vmatpush1.msra.mxu0 %v1653
        %1672 = vmatprep.subr.mxu0 0.0
        %1673 = vmatpush1.msra.mxu0 %v1654
        %1674 = vmatprep.subr.mxu0 0.0
        %1675 = vmatpush1.msra.mxu0 %v1655
        %1676 = vmatprep.subr.mxu0 0.0
        %1677 = vmatpush1.msra.mxu0 %v1656
        %1678 = vmatprep.subr.mxu0 0.0
        %1679 = vmatpush1.msra.mxu0 %v1657
        %1680 = vmatprep.subr.mxu0 0.0
        %1681 = vmatpush1.msra.mxu0 %v1658
        %1682 = vmatprep.subr.mxu0 0.0
        %1683 = vmatpush1.msra.mxu0 %v1659
        %1684 = vmatprep.subr.mxu0 0.0
        %1685 = vmatpush1.msra.mxu0 %v1660
        %1686 = vmatprep.subr.mxu0 0.0
        %1687 = vmatpush1.msra.mxu0 %v1661
        %1688 = vmatprep.subr.mxu0 0.0
        %1689 = vmatpush1.msra.mxu0 %v1662
        %1690 = vmatprep.subr.mxu0 0.0
        %1691 = vmatpush1.msra.mxu0 %v1663
        %1692 = vmatprep.subr.mxu0 0.0
        %1693 = vmatpush1.msra.mxu0 %v1664
        %1694 = vmatprep.subr.mxu0 0.0
        %1695 = vmatpush1.msra.mxu0 %v1665
        %1696 = vmatprep.subr.mxu0 0.0
        %1697 = vmatpush1.msra.mxu0 %v1666
        %1698 = vmatprep.subr.mxu0 0.0
        %1699 = vmatpush1.msra.mxu0 %v1667
        %1700 = vmatprep.subr.mxu0 0.0
        %1701 = vmatpush1.msra.mxu0 0.0
        %1702 = vmatprep.subr.mxu0 0.0
        %1703 = vmatpush1.msra.mxu0 0.0
        %1704 = vmatprep.subr.mxu0 0.0
        %1705 = vmatpush1.msra.mxu0 0.0
        %1706 = vmatprep.subr.mxu0 0.0
        %1707 = vmatpush1.msra.mxu0 0.0
        %1708 = vmatprep.subr.mxu0 0.0
        %1709 = vmatpush1.msra.mxu0 0.0
        %1710 = vmatprep.subr.mxu0 0.0
        %1711 = vmatpush1.msra.mxu0 0.0
        %1712 = vmatprep.subr.mxu0 0.0
        %1713 = vmatpush1.msra.mxu0 0.0
        %1714 = vmatprep.subr.mxu0 0.0
        %1715 = vmatpush1.msra.mxu0 0.0
        %1716 = vmatprep.subr.mxu0 0.0
        %1717 = vmatpush1.msra.mxu0 0.0
        %1718 = vmatprep.subr.mxu0 0.0
        %1719 = vmatpush1.msra.mxu0 0.0
        %1720 = vmatprep.subr.mxu0 0.0
        %1721 = vmatpush1.msra.mxu0 0.0
        %1722 = vmatprep.subr.mxu0 0.0
        %1723 = vmatpush1.msra.mxu0 0.0
        %1724 = vmatprep.subr.mxu0 0.0
        %1725 = vmatpush1.msra.mxu0 0.0
        %1726 = vmatprep.subr.mxu0 0.0
        %1727 = vmatpush1.msra.mxu0 0.0
        %1728 = vmatprep.subr.mxu0 0.0
        %1729 = vmatpush1.msra.mxu0 0.0
        %1730 = vmatprep.subr.mxu0 0.0
        %1731 = vmatpush1.msra.mxu0 0.0
        %1732 = vmatprep.mubr.f32.mxu0 0.0
        %1733 = vmatmul.mubr.f32.gmra.mrb[0].mxu0 %v1649
        %v1734 = vpop.f32.mrb[0].mxu0
        %v1735 = vadd.f32 0.0, %v1734
        %v1736 = vpop.f32.mrb[0].mxu0
        %1737 = vmatprep.mubr.f32.mxu0 0.0
        %1738 = vmatmul.mubr.f32.gmra.mrb[0].mxu0 %v1650
        %v1739 = vpop.f32.mrb[0].mxu0
        %v1740 = vadd.f32 0.0, %v1739
        %v1741 = vpop.f32.mrb[0].mxu0
        %1742 = vdwg.mxu0
        %v1743 = vadd.f32 %v1641, %v1735
        %v1744 = vadd.f32 %v1646, %v1740
        %1745 = vst [vmem:[#allocation2 + $0x8] sm:$0xff] %v1743
        %1746 = vst [vmem:[#allocation2 + $0x10] sm:$0xff] %v1744
        %v1747 = vld [vmem:[#allocation2 + $0x6] sm:$0xff]
        %v1748 = vld [vmem:[#allocation2 + $0xe] sm:$0xff]
        %s1749 = scalar_lea.vmem [#allocation3], 2048
        %v1750 = vld [vmem:[%s1749] sm:$0xff]
        %v1751 = vld [vmem:[%s1749 + $0x8] sm:$0xff]
        %v1752 = vld [vmem:[%s1749 + $0x10] sm:$0xff]
        %v1753 = vld [vmem:[%s1749 + $0x18] sm:$0xff]
        %v1754 = vld [vmem:[%s1749 + $0x20] sm:$0xff]
        %v1755 = vld [vmem:[%s1749 + $0x28] sm:$0xff]
        %v1756 = vld [vmem:[%s1749 + $0x30] sm:$0xff]
        %v1757 = vld [vmem:[%s1749 + $0x38] sm:$0xff]
        %v1758 = vld [vmem:[%s1749 + $0x40] sm:$0xff]
        %v1759 = vld [vmem:[%s1749 + $0x48] sm:$0xff]
        %v1760 = vld [vmem:[%s1749 + $0x50] sm:$0xff]
        %v1761 = vld [vmem:[%s1749 + $0x58] sm:$0xff]
        %v1762 = vld [vmem:[%s1749 + $0x60] sm:$0xff]
        %v1763 = vld [vmem:[%s1749 + $0x68] sm:$0xff]
        %v1764 = vld [vmem:[%s1749 + $0x70] sm:$0xff]
        %v1765 = vld [vmem:[%s1749 + $0x78] sm:$0xff]
        %v1766 = vld [vmem:[#allocation2 + $0x8] sm:$0xff]
        %v1767 = vld [vmem:[#allocation2 + $0x10] sm:$0xff]
        %s1768 = scalar_lea.vmem [#allocation3], 2176
        %v1769 = vld [vmem:[%s1768] sm:$0xff]
        %v1770 = vld [vmem:[%s1768 + $0x8] sm:$0xff]
        %v1771 = vld [vmem:[%s1768 + $0x10] sm:$0xff]
        %v1772 = vld [vmem:[%s1768 + $0x18] sm:$0xff]
        %v1773 = vld [vmem:[%s1768 + $0x20] sm:$0xff]
        %v1774 = vld [vmem:[%s1768 + $0x28] sm:$0xff]
        %v1775 = vld [vmem:[%s1768 + $0x30] sm:$0xff]
        %v1776 = vld [vmem:[%s1768 + $0x38] sm:$0xff]
        %v1777 = vld [vmem:[%s1768 + $0x40] sm:$0xff]
        %v1778 = vld [vmem:[%s1768 + $0x48] sm:$0xff]
        %v1779 = vld [vmem:[%s1768 + $0x50] sm:$0xff]
        %v1780 = vld [vmem:[%s1768 + $0x58] sm:$0xff]
        %v1781 = vld [vmem:[%s1768 + $0x60] sm:$0xff]
        %v1782 = vld [vmem:[%s1768 + $0x68] sm:$0xff]
        %v1783 = vld [vmem:[%s1768 + $0x70] sm:$0xff]
        %v1784 = vld [vmem:[%s1768 + $0x78] sm:$0xff]
        %1785 = vmatprep.subr.mxu0 0.0
        %1786 = vmatpush1.msra.mxu0 %v1769
        %1787 = vmatprep.subr.mxu0 0.0
        %1788 = vmatpush1.msra.mxu0 %v1770
        %1789 = vmatprep.subr.mxu0 0.0
        %1790 = vmatpush1.msra.mxu0 %v1771
        %1791 = vmatprep.subr.mxu0 0.0
        %1792 = vmatpush1.msra.mxu0 %v1772
        %1793 = vmatprep.subr.mxu0 0.0
        %1794 = vmatpush1.msra.mxu0 %v1773
        %1795 = vmatprep.subr.mxu0 0.0
        %1796 = vmatpush1.msra.mxu0 %v1774
        %1797 = vmatprep.subr.mxu0 0.0
        %1798 = vmatpush1.msra.mxu0 %v1775
        %1799 = vmatprep.subr.mxu0 0.0
        %1800 = vmatpush1.msra.mxu0 %v1776
        %1801 = vmatprep.subr.mxu0 0.0
        %1802 = vmatpush1.msra.mxu0 %v1777
        %1803 = vmatprep.subr.mxu0 0.0
        %1804 = vmatpush1.msra.mxu0 %v1778
        %1805 = vmatprep.subr.mxu0 0.0
        %1806 = vmatpush1.msra.mxu0 %v1779
        %1807 = vmatprep.subr.mxu0 0.0
        %1808 = vmatpush1.msra.mxu0 %v1780
        %1809 = vmatprep.subr.mxu0 0.0
        %1810 = vmatpush1.msra.mxu0 %v1781
        %1811 = vmatprep.subr.mxu0 0.0
        %1812 = vmatpush1.msra.mxu0 %v1782
        %1813 = vmatprep.subr.mxu0 0.0
        %1814 = vmatpush1.msra.mxu0 %v1783
        %1815 = vmatprep.subr.mxu0 0.0
        %1816 = vmatpush1.msra.mxu0 %v1784
        %1817 = vmatprep.subr.mxu0 0.0
        %1818 = vmatpush1.msra.mxu0 0.0
        %1819 = vmatprep.subr.mxu0 0.0
        %1820 = vmatpush1.msra.mxu0 0.0
        %1821 = vmatprep.subr.mxu0 0.0
        %1822 = vmatpush1.msra.mxu0 0.0
        %1823 = vmatprep.subr.mxu0 0.0
        %1824 = vmatpush1.msra.mxu0 0.0
        %1825 = vmatprep.subr.mxu0 0.0
        %1826 = vmatpush1.msra.mxu0 0.0
        %1827 = vmatprep.subr.mxu0 0.0
        %1828 = vmatpush1.msra.mxu0 0.0
        %1829 = vmatprep.subr.mxu0 0.0
        %1830 = vmatpush1.msra.mxu0 0.0
        %1831 = vmatprep.subr.mxu0 0.0
        %1832 = vmatpush1.msra.mxu0 0.0
        %1833 = vmatprep.subr.mxu0 0.0
        %1834 = vmatpush1.msra.mxu0 0.0
        %1835 = vmatprep.subr.mxu0 0.0
        %1836 = vmatpush1.msra.mxu0 0.0
        %1837 = vmatprep.subr.mxu0 0.0
        %1838 = vmatpush1.msra.mxu0 0.0
        %1839 = vmatprep.subr.mxu0 0.0
        %1840 = vmatpush1.msra.mxu0 0.0
        %1841 = vmatprep.subr.mxu0 0.0
        %1842 = vmatpush1.msra.mxu0 0.0
        %1843 = vmatprep.subr.mxu0 0.0
        %1844 = vmatpush1.msra.mxu0 0.0
        %1845 = vmatprep.subr.mxu0 0.0
        %1846 = vmatpush1.msra.mxu0 0.0
        %1847 = vmatprep.subr.mxu0 0.0
        %1848 = vmatpush1.msra.mxu0 0.0
        %1849 = vmatprep.mubr.f32.mxu0 0.0
        %1850 = vmatmul.mubr.f32.gmra.mrb[0].mxu0 %v1766
        %v1851 = vpop.f32.mrb[0].mxu0
        %v1852 = vadd.f32 0.0, %v1851
        %v1853 = vpop.f32.mrb[0].mxu0
        %1854 = vmatprep.mubr.f32.mxu0 0.0
        %1855 = vmatmul.mubr.f32.gmra.mrb[0].mxu0 %v1767
        %v1856 = vpop.f32.mrb[0].mxu0
        %v1857 = vadd.f32 0.0, %v1856
        %v1858 = vpop.f32.mrb[0].mxu0
        %1859 = vdwg.mxu0
        %1860 = vmatprep.subr.mxu0 0.0
        %1861 = vmatpush1.msra.mxu0 %v1750
        %1862 = vmatprep.subr.mxu0 0.0
        %1863 = vmatpush1.msra.mxu0 %v1751
        %1864 = vmatprep.subr.mxu0 0.0
        %1865 = vmatpush1.msra.mxu0 %v1752
        %1866 = vmatprep.subr.mxu0 0.0
        %1867 = vmatpush1.msra.mxu0 %v1753
        %1868 = vmatprep.subr.mxu0 0.0
        %1869 = vmatpush1.msra.mxu0 %v1754
        %1870 = vmatprep.subr.mxu0 0.0
        %1871 = vmatpush1.msra.mxu0 %v1755
        %1872 = vmatprep.subr.mxu0 0.0
        %1873 = vmatpush1.msra.mxu0 %v1756
        %1874 = vmatprep.subr.mxu0 0.0
        %1875 = vmatpush1.msra.mxu0 %v1757
        %1876 = vmatprep.subr.mxu0 0.0
        %1877 = vmatpush1.msra.mxu0 %v1758
        %1878 = vmatprep.subr.mxu0 0.0
        %1879 = vmatpush1.msra.mxu0 %v1759
        %1880 = vmatprep.subr.mxu0 0.0
        %1881 = vmatpush1.msra.mxu0 %v1760
        %1882 = vmatprep.subr.mxu0 0.0
        %1883 = vmatpush1.msra.mxu0 %v1761
        %1884 = vmatprep.subr.mxu0 0.0
        %1885 = vmatpush1.msra.mxu0 %v1762
        %1886 = vmatprep.subr.mxu0 0.0
        %1887 = vmatpush1.msra.mxu0 %v1763
        %1888 = vmatprep.subr.mxu0 0.0
        %1889 = vmatpush1.msra.mxu0 %v1764
        %1890 = vmatprep.subr.mxu0 0.0
        %1891 = vmatpush1.msra.mxu0 %v1765
        %1892 = vmatprep.subr.mxu0 0.0
        %1893 = vmatpush1.msra.mxu0 0.0
        %1894 = vmatprep.subr.mxu0 0.0
        %1895 = vmatpush1.msra.mxu0 0.0
        %1896 = vmatprep.subr.mxu0 0.0
        %1897 = vmatpush1.msra.mxu0 0.0
        %1898 = vmatprep.subr.mxu0 0.0
        %1899 = vmatpush1.msra.mxu0 0.0
        %1900 = vmatprep.subr.mxu0 0.0
        %1901 = vmatpush1.msra.mxu0 0.0
        %1902 = vmatprep.subr.mxu0 0.0
        %1903 = vmatpush1.msra.mxu0 0.0
        %1904 = vmatprep.subr.mxu0 0.0
        %1905 = vmatpush1.msra.mxu0 0.0
        %1906 = vmatprep.subr.mxu0 0.0
        %1907 = vmatpush1.msra.mxu0 0.0
        %1908 = vmatprep.subr.mxu0 0.0
        %1909 = vmatpush1.msra.mxu0 0.0
        %1910 = vmatprep.subr.mxu0 0.0
        %1911 = vmatpush1.msra.mxu0 0.0
        %1912 = vmatprep.subr.mxu0 0.0
        %1913 = vmatpush1.msra.mxu0 0.0
        %1914 = vmatprep.subr.mxu0 0.0
        %1915 = vmatpush1.msra.mxu0 0.0
        %1916 = vmatprep.subr.mxu0 0.0
        %1917 = vmatpush1.msra.mxu0 0.0
        %1918 = vmatprep.subr.mxu0 0.0
        %1919 = vmatpush1.msra.mxu0 0.0
        %1920 = vmatprep.subr.mxu0 0.0
        %1921 = vmatpush1.msra.mxu0 0.0
        %1922 = vmatprep.subr.mxu0 0.0
        %1923 = vmatpush1.msra.mxu0 0.0
        %1924 = vmatprep.mubr.f32.mxu0 0.0
        %1925 = vmatmul.mubr.f32.gmra.mrb[0].mxu0 %v1747
        %v1926 = vpop.f32.mrb[0].mxu0
        %v1927 = vadd.f32 %v1852, %v1926
        %v1928 = vpop.f32.mrb[0].mxu0
        %1929 = vmatprep.mubr.f32.mxu0 0.0
        %1930 = vmatmul.mubr.f32.gmra.mrb[0].mxu0 %v1748
        %v1931 = vpop.f32.mrb[0].mxu0
        %v1932 = vadd.f32 %v1857, %v1931
        %v1933 = vpop.f32.mrb[0].mxu0
        %1934 = vdwg.mxu0
        %v1935 = vld [vmem:[#allocation2 + $0xa] sm:$0xff]
        %v1936 = vld [vmem:[#allocation2 + $0x12] sm:$0xff]
        %s1937 = scalar_lea.vmem [#allocation3], 2304
        %v1938 = vld [vmem:[%s1937] sm:$0xff]
        %v1939 = vld [vmem:[%s1937 + $0x8] sm:$0xff]
        %v1940 = vld [vmem:[%s1937 + $0x10] sm:$0xff]
        %v1941 = vld [vmem:[%s1937 + $0x18] sm:$0xff]
        %v1942 = vld [vmem:[%s1937 + $0x20] sm:$0xff]
        %v1943 = vld [vmem:[%s1937 + $0x28] sm:$0xff]
        %v1944 = vld [vmem:[%s1937 + $0x30] sm:$0xff]
        %v1945 = vld [vmem:[%s1937 + $0x38] sm:$0xff]
        %v1946 = vld [vmem:[%s1937 + $0x40] sm:$0xff]
        %v1947 = vld [vmem:[%s1937 + $0x48] sm:$0xff]
        %v1948 = vld [vmem:[%s1937 + $0x50] sm:$0xff]
        %v1949 = vld [vmem:[%s1937 + $0x58] sm:$0xff]
        %v1950 = vld [vmem:[%s1937 + $0x60] sm:$0xff]
        %v1951 = vld [vmem:[%s1937 + $0x68] sm:$0xff]
        %v1952 = vld [vmem:[%s1937 + $0x70] sm:$0xff]
        %v1953 = vld [vmem:[%s1937 + $0x78] sm:$0xff]
        %1954 = vmatprep.subr.mxu0 0.0
        %1955 = vmatpush1.msra.mxu0 %v1938
        %1956 = vmatprep.subr.mxu0 0.0
        %1957 = vmatpush1.msra.mxu0 %v1939
        %1958 = vmatprep.subr.mxu0 0.0
        %1959 = vmatpush1.msra.mxu0 %v1940
        %1960 = vmatprep.subr.mxu0 0.0
        %1961 = vmatpush1.msra.mxu0 %v1941
        %1962 = vmatprep.subr.mxu0 0.0
        %1963 = vmatpush1.msra.mxu0 %v1942
        %1964 = vmatprep.subr.mxu0 0.0
        %1965 = vmatpush1.msra.mxu0 %v1943
        %1966 = vmatprep.subr.mxu0 0.0
        %1967 = vmatpush1.msra.mxu0 %v1944
        %1968 = vmatprep.subr.mxu0 0.0
        %1969 = vmatpush1.msra.mxu0 %v1945
        %1970 = vmatprep.subr.mxu0 0.0
        %1971 = vmatpush1.msra.mxu0 %v1946
        %1972 = vmatprep.subr.mxu0 0.0
        %1973 = vmatpush1.msra.mxu0 %v1947
        %1974 = vmatprep.subr.mxu0 0.0
        %1975 = vmatpush1.msra.mxu0 %v1948
        %1976 = vmatprep.subr.mxu0 0.0
        %1977 = vmatpush1.msra.mxu0 %v1949
        %1978 = vmatprep.subr.mxu0 0.0
        %1979 = vmatpush1.msra.mxu0 %v1950
        %1980 = vmatprep.subr.mxu0 0.0
        %1981 = vmatpush1.msra.mxu0 %v1951
        %1982 = vmatprep.subr.mxu0 0.0
        %1983 = vmatpush1.msra.mxu0 %v1952
        %1984 = vmatprep.subr.mxu0 0.0
        %1985 = vmatpush1.msra.mxu0 %v1953
        %1986 = vmatprep.subr.mxu0 0.0
        %1987 = vmatpush1.msra.mxu0 0.0
        %1988 = vmatprep.subr.mxu0 0.0
        %1989 = vmatpush1.msra.mxu0 0.0
        %1990 = vmatprep.subr.mxu0 0.0
        %1991 = vmatpush1.msra.mxu0 0.0
        %1992 = vmatprep.subr.mxu0 0.0
        %1993 = vmatpush1.msra.mxu0 0.0
        %1994 = vmatprep.subr.mxu0 0.0
        %1995 = vmatpush1.msra.mxu0 0.0
        %1996 = vmatprep.subr.mxu0 0.0
        %1997 = vmatpush1.msra.mxu0 0.0
        %1998 = vmatprep.subr.mxu0 0.0
        %1999 = vmatpush1.msra.mxu0 0.0
        %2000 = vmatprep.subr.mxu0 0.0
        %2001 = vmatpush1.msra.mxu0 0.0
        %2002 = vmatprep.subr.mxu0 0.0
        %2003 = vmatpush1.msra.mxu0 0.0
        %2004 = vmatprep.subr.mxu0 0.0
        %2005 = vmatpush1.msra.mxu0 0.0
        %2006 = vmatprep.subr.mxu0 0.0
        %2007 = vmatpush1.msra.mxu0 0.0
        %2008 = vmatprep.subr.mxu0 0.0
        %2009 = vmatpush1.msra.mxu0 0.0
        %2010 = vmatprep.subr.mxu0 0.0
        %2011 = vmatpush1.msra.mxu0 0.0
        %2012 = vmatprep.subr.mxu0 0.0
        %2013 = vmatpush1.msra.mxu0 0.0
        %2014 = vmatprep.subr.mxu0 0.0
        %2015 = vmatpush1.msra.mxu0 0.0
        %2016 = vmatprep.subr.mxu0 0.0
        %2017 = vmatpush1.msra.mxu0 0.0
        %2018 = vmatprep.mubr.f32.mxu0 0.0
        %2019 = vmatmul.mubr.f32.gmra.mrb[0].mxu0 %v1935
        %v2020 = vpop.f32.mrb[0].mxu0
        %v2021 = vadd.f32 0.0, %v2020
        %v2022 = vpop.f32.mrb[0].mxu0
        %2023 = vmatprep.mubr.f32.mxu0 0.0
        %2024 = vmatmul.mubr.f32.gmra.mrb[0].mxu0 %v1936
        %v2025 = vpop.f32.mrb[0].mxu0
        %v2026 = vadd.f32 0.0, %v2025
        %v2027 = vpop.f32.mrb[0].mxu0
        %2028 = vdwg.mxu0
        %v2029 = vadd.f32 %v1927, %v2021
        %v2030 = vadd.f32 %v1932, %v2026
        %2031 = vst [vmem:[#allocation2 + $0x8] sm:$0xff] %v2029
        %2032 = vst [vmem:[#allocation2 + $0x10] sm:$0xff] %v2030
        %v2033 = vld [vmem:[#allocation2 + $0x4] sm:$0xff]
        %v2034 = vld [vmem:[#allocation2 + $0xc] sm:$0xff]
        %s2035 = scalar_lea.vmem [#allocation3], 2432
        %v2036 = vld [vmem:[%s2035] sm:$0xff]
        %v2037 = vld [vmem:[%s2035 + $0x8] sm:$0xff]
        %v2038 = vld [vmem:[%s2035 + $0x10] sm:$0xff]
        %v2039 = vld [vmem:[%s2035 + $0x18] sm:$0xff]
        %v2040 = vld [vmem:[%s2035 + $0x20] sm:$0xff]
        %v2041 = vld [vmem:[%s2035 + $0x28] sm:$0xff]
        %v2042 = vld [vmem:[%s2035 + $0x30] sm:$0xff]
        %v2043 = vld [vmem:[%s2035 + $0x38] sm:$0xff]
        %v2044 = vld [vmem:[%s2035 + $0x40] sm:$0xff]
        %v2045 = vld [vmem:[%s2035 + $0x48] sm:$0xff]
        %v2046 = vld [vmem:[%s2035 + $0x50] sm:$0xff]
        %v2047 = vld [vmem:[%s2035 + $0x58] sm:$0xff]
        %v2048 = vld [vmem:[%s2035 + $0x60] sm:$0xff]
        %v2049 = vld [vmem:[%s2035 + $0x68] sm:$0xff]
        %v2050 = vld [vmem:[%s2035 + $0x70] sm:$0xff]
        %v2051 = vld [vmem:[%s2035 + $0x78] sm:$0xff]
        %v2052 = vld [vmem:[#allocation2 + $0x8] sm:$0xff]
        %v2053 = vld [vmem:[#allocation2 + $0x10] sm:$0xff]
        %s2054 = scalar_lea.vmem [#allocation3], 2560
        %v2055 = vld [vmem:[%s2054] sm:$0xff]
        %v2056 = vld [vmem:[%s2054 + $0x8] sm:$0xff]
        %v2057 = vld [vmem:[%s2054 + $0x10] sm:$0xff]
        %v2058 = vld [vmem:[%s2054 + $0x18] sm:$0xff]
        %v2059 = vld [vmem:[%s2054 + $0x20] sm:$0xff]
        %v2060 = vld [vmem:[%s2054 + $0x28] sm:$0xff]
        %v2061 = vld [vmem:[%s2054 + $0x30] sm:$0xff]
        %v2062 = vld [vmem:[%s2054 + $0x38] sm:$0xff]
        %v2063 = vld [vmem:[%s2054 + $0x40] sm:$0xff]
        %v2064 = vld [vmem:[%s2054 + $0x48] sm:$0xff]
        %v2065 = vld [vmem:[%s2054 + $0x50] sm:$0xff]
        %v2066 = vld [vmem:[%s2054 + $0x58] sm:$0xff]
        %v2067 = vld [vmem:[%s2054 + $0x60] sm:$0xff]
        %v2068 = vld [vmem:[%s2054 + $0x68] sm:$0xff]
        %v2069 = vld [vmem:[%s2054 + $0x70] sm:$0xff]
        %v2070 = vld [vmem:[%s2054 + $0x78] sm:$0xff]
        %2071 = vmatprep.subr.mxu0 0.0
        %2072 = vmatpush1.msra.mxu0 %v2055
        %2073 = vmatprep.subr.mxu0 0.0
        %2074 = vmatpush1.msra.mxu0 %v2056
        %2075 = vmatprep.subr.mxu0 0.0
        %2076 = vmatpush1.msra.mxu0 %v2057
        %2077 = vmatprep.subr.mxu0 0.0
        %2078 = vmatpush1.msra.mxu0 %v2058
        %2079 = vmatprep.subr.mxu0 0.0
        %2080 = vmatpush1.msra.mxu0 %v2059
        %2081 = vmatprep.subr.mxu0 0.0
        %2082 = vmatpush1.msra.mxu0 %v2060
        %2083 = vmatprep.subr.mxu0 0.0
        %2084 = vmatpush1.msra.mxu0 %v2061
        %2085 = vmatprep.subr.mxu0 0.0
        %2086 = vmatpush1.msra.mxu0 %v2062
        %2087 = vmatprep.subr.mxu0 0.0
        %2088 = vmatpush1.msra.mxu0 %v2063
        %2089 = vmatprep.subr.mxu0 0.0
        %2090 = vmatpush1.msra.mxu0 %v2064
        %2091 = vmatprep.subr.mxu0 0.0
        %2092 = vmatpush1.msra.mxu0 %v2065
        %2093 = vmatprep.subr.mxu0 0.0
        %2094 = vmatpush1.msra.mxu0 %v2066
        %2095 = vmatprep.subr.mxu0 0.0
        %2096 = vmatpush1.msra.mxu0 %v2067
        %2097 = vmatprep.subr.mxu0 0.0
        %2098 = vmatpush1.msra.mxu0 %v2068
        %2099 = vmatprep.subr.mxu0 0.0
        %2100 = vmatpush1.msra.mxu0 %v2069
        %2101 = vmatprep.subr.mxu0 0.0
        %2102 = vmatpush1.msra.mxu0 %v2070
        %2103 = vmatprep.subr.mxu0 0.0
        %2104 = vmatpush1.msra.mxu0 0.0
        %2105 = vmatprep.subr.mxu0 0.0
        %2106 = vmatpush1.msra.mxu0 0.0
        %2107 = vmatprep.subr.mxu0 0.0
        %2108 = vmatpush1.msra.mxu0 0.0
        %2109 = vmatprep.subr.mxu0 0.0
        %2110 = vmatpush1.msra.mxu0 0.0
        %2111 = vmatprep.subr.mxu0 0.0
        %2112 = vmatpush1.msra.mxu0 0.0
        %2113 = vmatprep.subr.mxu0 0.0
        %2114 = vmatpush1.msra.mxu0 0.0
        %2115 = vmatprep.subr.mxu0 0.0
        %2116 = vmatpush1.msra.mxu0 0.0
        %2117 = vmatprep.subr.mxu0 0.0
        %2118 = vmatpush1.msra.mxu0 0.0
        %2119 = vmatprep.subr.mxu0 0.0
        %2120 = vmatpush1.msra.mxu0 0.0
        %2121 = vmatprep.subr.mxu0 0.0
        %2122 = vmatpush1.msra.mxu0 0.0
        %2123 = vmatprep.subr.mxu0 0.0
        %2124 = vmatpush1.msra.mxu0 0.0
        %2125 = vmatprep.subr.mxu0 0.0
        %2126 = vmatpush1.msra.mxu0 0.0
        %2127 = vmatprep.subr.mxu0 0.0
        %2128 = vmatpush1.msra.mxu0 0.0
        %2129 = vmatprep.subr.mxu0 0.0
        %2130 = vmatpush1.msra.mxu0 0.0
        %2131 = vmatprep.subr.mxu0 0.0
        %2132 = vmatpush1.msra.mxu0 0.0
        %2133 = vmatprep.subr.mxu0 0.0
        %2134 = vmatpush1.msra.mxu0 0.0
        %2135 = vmatprep.mubr.f32.mxu0 0.0
        %2136 = vmatmul.mubr.f32.gmra.mrb[0].mxu0 %v2052
        %v2137 = vpop.f32.mrb[0].mxu0
        %v2138 = vadd.f32 0.0, %v2137
        %v2139 = vpop.f32.mrb[0].mxu0
        %2140 = vmatprep.mubr.f32.mxu0 0.0
        %2141 = vmatmul.mubr.f32.gmra.mrb[0].mxu0 %v2053
        %v2142 = vpop.f32.mrb[0].mxu0
        %v2143 = vadd.f32 0.0, %v2142
        %v2144 = vpop.f32.mrb[0].mxu0
        %2145 = vdwg.mxu0
        %2146 = vmatprep.subr.mxu0 0.0
        %2147 = vmatpush1.msra.mxu0 %v2036
        %2148 = vmatprep.subr.mxu0 0.0
        %2149 = vmatpush1.msra.mxu0 %v2037
        %2150 = vmatprep.subr.mxu0 0.0
        %2151 = vmatpush1.msra.mxu0 %v2038
        %2152 = vmatprep.subr.mxu0 0.0
        %2153 = vmatpush1.msra.mxu0 %v2039
        %2154 = vmatprep.subr.mxu0 0.0
        %2155 = vmatpush1.msra.mxu0 %v2040
        %2156 = vmatprep.subr.mxu0 0.0
        %2157 = vmatpush1.msra.mxu0 %v2041
        %2158 = vmatprep.subr.mxu0 0.0
        %2159 = vmatpush1.msra.mxu0 %v2042
        %2160 = vmatprep.subr.mxu0 0.0
        %2161 = vmatpush1.msra.mxu0 %v2043
        %2162 = vmatprep.subr.mxu0 0.0
        %2163 = vmatpush1.msra.mxu0 %v2044
        %2164 = vmatprep.subr.mxu0 0.0
        %2165 = vmatpush1.msra.mxu0 %v2045
        %2166 = vmatprep.subr.mxu0 0.0
        %2167 = vmatpush1.msra.mxu0 %v2046
        %2168 = vmatprep.subr.mxu0 0.0
        %2169 = vmatpush1.msra.mxu0 %v2047
        %2170 = vmatprep.subr.mxu0 0.0
        %2171 = vmatpush1.msra.mxu0 %v2048
        %2172 = vmatprep.subr.mxu0 0.0
        %2173 = vmatpush1.msra.mxu0 %v2049
        %2174 = vmatprep.subr.mxu0 0.0
        %2175 = vmatpush1.msra.mxu0 %v2050
        %2176 = vmatprep.subr.mxu0 0.0
        %2177 = vmatpush1.msra.mxu0 %v2051
        %2178 = vmatprep.subr.mxu0 0.0
        %2179 = vmatpush1.msra.mxu0 0.0
        %2180 = vmatprep.subr.mxu0 0.0
        %2181 = vmatpush1.msra.mxu0 0.0
        %2182 = vmatprep.subr.mxu0 0.0
        %2183 = vmatpush1.msra.mxu0 0.0
        %2184 = vmatprep.subr.mxu0 0.0
        %2185 = vmatpush1.msra.mxu0 0.0
        %2186 = vmatprep.subr.mxu0 0.0
        %2187 = vmatpush1.msra.mxu0 0.0
        %2188 = vmatprep.subr.mxu0 0.0
        %2189 = vmatpush1.msra.mxu0 0.0
        %2190 = vmatprep.subr.mxu0 0.0
        %2191 = vmatpush1.msra.mxu0 0.0
        %2192 = vmatprep.subr.mxu0 0.0
        %2193 = vmatpush1.msra.mxu0 0.0
        %2194 = vmatprep.subr.mxu0 0.0
        %2195 = vmatpush1.msra.mxu0 0.0
        %2196 = vmatprep.subr.mxu0 0.0
        %2197 = vmatpush1.msra.mxu0 0.0
        %2198 = vmatprep.subr.mxu0 0.0
        %2199 = vmatpush1.msra.mxu0 0.0
        %2200 = vmatprep.subr.mxu0 0.0
        %2201 = vmatpush1.msra.mxu0 0.0
        %2202 = vmatprep.subr.mxu0 0.0
        %2203 = vmatpush1.msra.mxu0 0.0
        %2204 = vmatprep.subr.mxu0 0.0
        %2205 = vmatpush1.msra.mxu0 0.0
        %2206 = vmatprep.subr.mxu0 0.0
        %2207 = vmatpush1.msra.mxu0 0.0
        %2208 = vmatprep.subr.mxu0 0.0
        %2209 = vmatpush1.msra.mxu0 0.0
        %2210 = vmatprep.mubr.f32.mxu0 0.0
        %2211 = vmatmul.mubr.f32.gmra.mrb[0].mxu0 %v2033
        %v2212 = vpop.f32.mrb[0].mxu0
        %v2213 = vadd.f32 %v2138, %v2212
        %v2214 = vpop.f32.mrb[0].mxu0
        %2215 = vmatprep.mubr.f32.mxu0 0.0
        %2216 = vmatmul.mubr.f32.gmra.mrb[0].mxu0 %v2034
        %v2217 = vpop.f32.mrb[0].mxu0
        %v2218 = vadd.f32 %v2143, %v2217
        %v2219 = vpop.f32.mrb[0].mxu0
        %2220 = vdwg.mxu0
        %v2221 = vld [vmem:[#allocation2 + $0xc] sm:$0xff]
        %v2222 = vld [vmem:[#allocation2 + $0x14] sm:$0xff]
        %s2223 = scalar_lea.vmem [#allocation3], 2688
        %v2224 = vld [vmem:[%s2223] sm:$0xff]
        %v2225 = vld [vmem:[%s2223 + $0x8] sm:$0xff]
        %v2226 = vld [vmem:[%s2223 + $0x10] sm:$0xff]
        %v2227 = vld [vmem:[%s2223 + $0x18] sm:$0xff]
        %v2228 = vld [vmem:[%s2223 + $0x20] sm:$0xff]
        %v2229 = vld [vmem:[%s2223 + $0x28] sm:$0xff]
        %v2230 = vld [vmem:[%s2223 + $0x30] sm:$0xff]
        %v2231 = vld [vmem:[%s2223 + $0x38] sm:$0xff]
        %v2232 = vld [vmem:[%s2223 + $0x40] sm:$0xff]
        %v2233 = vld [vmem:[%s2223 + $0x48] sm:$0xff]
        %v2234 = vld [vmem:[%s2223 + $0x50] sm:$0xff]
        %v2235 = vld [vmem:[%s2223 + $0x58] sm:$0xff]
        %v2236 = vld [vmem:[%s2223 + $0x60] sm:$0xff]
        %v2237 = vld [vmem:[%s2223 + $0x68] sm:$0xff]
        %v2238 = vld [vmem:[%s2223 + $0x70] sm:$0xff]
        %v2239 = vld [vmem:[%s2223 + $0x78] sm:$0xff]
        %2240 = vmatprep.subr.mxu0 0.0
        %2241 = vmatpush1.msra.mxu0 %v2224
        %2242 = vmatprep.subr.mxu0 0.0
        %2243 = vmatpush1.msra.mxu0 %v2225
        %2244 = vmatprep.subr.mxu0 0.0
        %2245 = vmatpush1.msra.mxu0 %v2226
        %2246 = vmatprep.subr.mxu0 0.0
        %2247 = vmatpush1.msra.mxu0 %v2227
        %2248 = vmatprep.subr.mxu0 0.0
        %2249 = vmatpush1.msra.mxu0 %v2228
        %2250 = vmatprep.subr.mxu0 0.0
        %2251 = vmatpush1.msra.mxu0 %v2229
        %2252 = vmatprep.subr.mxu0 0.0
        %2253 = vmatpush1.msra.mxu0 %v2230
        %2254 = vmatprep.subr.mxu0 0.0
        %2255 = vmatpush1.msra.mxu0 %v2231
        %2256 = vmatprep.subr.mxu0 0.0
        %2257 = vmatpush1.msra.mxu0 %v2232
        %2258 = vmatprep.subr.mxu0 0.0
        %2259 = vmatpush1.msra.mxu0 %v2233
        %2260 = vmatprep.subr.mxu0 0.0
        %2261 = vmatpush1.msra.mxu0 %v2234
        %2262 = vmatprep.subr.mxu0 0.0
        %2263 = vmatpush1.msra.mxu0 %v2235
        %2264 = vmatprep.subr.mxu0 0.0
        %2265 = vmatpush1.msra.mxu0 %v2236
        %2266 = vmatprep.subr.mxu0 0.0
        %2267 = vmatpush1.msra.mxu0 %v2237
        %2268 = vmatprep.subr.mxu0 0.0
        %2269 = vmatpush1.msra.mxu0 %v2238
        %2270 = vmatprep.subr.mxu0 0.0
        %2271 = vmatpush1.msra.mxu0 %v2239
        %2272 = vmatprep.subr.mxu0 0.0
        %2273 = vmatpush1.msra.mxu0 0.0
        %2274 = vmatprep.subr.mxu0 0.0
        %2275 = vmatpush1.msra.mxu0 0.0
        %2276 = vmatprep.subr.mxu0 0.0
        %2277 = vmatpush1.msra.mxu0 0.0
        %2278 = vmatprep.subr.mxu0 0.0
        %2279 = vmatpush1.msra.mxu0 0.0
        %2280 = vmatprep.subr.mxu0 0.0
        %2281 = vmatpush1.msra.mxu0 0.0
        %2282 = vmatprep.subr.mxu0 0.0
        %2283 = vmatpush1.msra.mxu0 0.0
        %2284 = vmatprep.subr.mxu0 0.0
        %2285 = vmatpush1.msra.mxu0 0.0
        %2286 = vmatprep.subr.mxu0 0.0
        %2287 = vmatpush1.msra.mxu0 0.0
        %2288 = vmatprep.subr.mxu0 0.0
        %2289 = vmatpush1.msra.mxu0 0.0
        %2290 = vmatprep.subr.mxu0 0.0
        %2291 = vmatpush1.msra.mxu0 0.0
        %2292 = vmatprep.subr.mxu0 0.0
        %2293 = vmatpush1.msra.mxu0 0.0
        %2294 = vmatprep.subr.mxu0 0.0
        %2295 = vmatpush1.msra.mxu0 0.0
        %2296 = vmatprep.subr.mxu0 0.0
        %2297 = vmatpush1.msra.mxu0 0.0
        %2298 = vmatprep.subr.mxu0 0.0
        %2299 = vmatpush1.msra.mxu0 0.0
        %2300 = vmatprep.subr.mxu0 0.0
        %2301 = vmatpush1.msra.mxu0 0.0
        %2302 = vmatprep.subr.mxu0 0.0
        %2303 = vmatpush1.msra.mxu0 0.0
        %2304 = vmatprep.mubr.f32.mxu0 0.0
        %2305 = vmatmul.mubr.f32.gmra.mrb[0].mxu0 %v2221
        %v2306 = vpop.f32.mrb[0].mxu0
        %v2307 = vadd.f32 0.0, %v2306
        %v2308 = vpop.f32.mrb[0].mxu0
        %2309 = vmatprep.mubr.f32.mxu0 0.0
        %2310 = vmatmul.mubr.f32.gmra.mrb[0].mxu0 %v2222
        %v2311 = vpop.f32.mrb[0].mxu0
        %v2312 = vadd.f32 0.0, %v2311
        %v2313 = vpop.f32.mrb[0].mxu0
        %2314 = vdwg.mxu0
        %v2315 = vadd.f32 %v2213, %v2307
        %v2316 = vadd.f32 %v2218, %v2312
        %2317 = vst [vmem:[#allocation2 + $0x8] sm:$0xff] %v2315
        %2318 = vst [vmem:[#allocation2 + $0x10] sm:$0xff] %v2316
        %v2319 = vld [vmem:[#allocation2] sm:$0xff]
        %v2320 = vld [vmem:[#allocation2 + $0x8] sm:$0xff]
        %s2321 = scalar_lea.vmem [#allocation3], 2816
        %v2322 = vld [vmem:[%s2321] sm:$0xff]
        %v2323 = vld [vmem:[%s2321 + $0x8] sm:$0xff]
        %v2324 = vld [vmem:[%s2321 + $0x10] sm:$0xff]
        %v2325 = vld [vmem:[%s2321 + $0x18] sm:$0xff]
        %v2326 = vld [vmem:[%s2321 + $0x20] sm:$0xff]
        %v2327 = vld [vmem:[%s2321 + $0x28] sm:$0xff]
        %v2328 = vld [vmem:[%s2321 + $0x30] sm:$0xff]
        %v2329 = vld [vmem:[%s2321 + $0x38] sm:$0xff]
        %v2330 = vld [vmem:[%s2321 + $0x40] sm:$0xff]
        %v2331 = vld [vmem:[%s2321 + $0x48] sm:$0xff]
        %v2332 = vld [vmem:[%s2321 + $0x50] sm:$0xff]
        %v2333 = vld [vmem:[%s2321 + $0x58] sm:$0xff]
        %v2334 = vld [vmem:[%s2321 + $0x60] sm:$0xff]
        %v2335 = vld [vmem:[%s2321 + $0x68] sm:$0xff]
        %v2336 = vld [vmem:[%s2321 + $0x70] sm:$0xff]
        %v2337 = vld [vmem:[%s2321 + $0x78] sm:$0xff]
        %v2338 = vld [vmem:[#allocation2 + $0x10] sm:$0xff]
        %s2339 = scalar_lea.vmem [#allocation3], 2944
        %v2340 = vld [vmem:[%s2339] sm:$0xff]
        %v2341 = vld [vmem:[%s2339 + $0x8] sm:$0xff]
        %v2342 = vld [vmem:[%s2339 + $0x10] sm:$0xff]
        %v2343 = vld [vmem:[%s2339 + $0x18] sm:$0xff]
        %v2344 = vld [vmem:[%s2339 + $0x20] sm:$0xff]
        %v2345 = vld [vmem:[%s2339 + $0x28] sm:$0xff]
        %v2346 = vld [vmem:[%s2339 + $0x30] sm:$0xff]
        %v2347 = vld [vmem:[%s2339 + $0x38] sm:$0xff]
        %v2348 = vld [vmem:[%s2339 + $0x40] sm:$0xff]
        %v2349 = vld [vmem:[%s2339 + $0x48] sm:$0xff]
        %v2350 = vld [vmem:[%s2339 + $0x50] sm:$0xff]
        %v2351 = vld [vmem:[%s2339 + $0x58] sm:$0xff]
        %v2352 = vld [vmem:[%s2339 + $0x60] sm:$0xff]
        %v2353 = vld [vmem:[%s2339 + $0x68] sm:$0xff]
        %v2354 = vld [vmem:[%s2339 + $0x70] sm:$0xff]
        %v2355 = vld [vmem:[%s2339 + $0x78] sm:$0xff]
        %2356 = vmatprep.subr.mxu0 0.0
        %2357 = vmatpush1.msra.mxu0 %v2340
        %2358 = vmatprep.subr.mxu0 0.0
        %2359 = vmatpush1.msra.mxu0 %v2341
        %2360 = vmatprep.subr.mxu0 0.0
        %2361 = vmatpush1.msra.mxu0 %v2342
        %2362 = vmatprep.subr.mxu0 0.0
        %2363 = vmatpush1.msra.mxu0 %v2343
        %2364 = vmatprep.subr.mxu0 0.0
        %2365 = vmatpush1.msra.mxu0 %v2344
        %2366 = vmatprep.subr.mxu0 0.0
        %2367 = vmatpush1.msra.mxu0 %v2345
        %2368 = vmatprep.subr.mxu0 0.0
        %2369 = vmatpush1.msra.mxu0 %v2346
        %2370 = vmatprep.subr.mxu0 0.0
        %2371 = vmatpush1.msra.mxu0 %v2347
        %2372 = vmatprep.subr.mxu0 0.0
        %2373 = vmatpush1.msra.mxu0 %v2348
        %2374 = vmatprep.subr.mxu0 0.0
        %2375 = vmatpush1.msra.mxu0 %v2349
        %2376 = vmatprep.subr.mxu0 0.0
        %2377 = vmatpush1.msra.mxu0 %v2350
        %2378 = vmatprep.subr.mxu0 0.0
        %2379 = vmatpush1.msra.mxu0 %v2351
        %2380 = vmatprep.subr.mxu0 0.0
        %2381 = vmatpush1.msra.mxu0 %v2352
        %2382 = vmatprep.subr.mxu0 0.0
        %2383 = vmatpush1.msra.mxu0 %v2353
        %2384 = vmatprep.subr.mxu0 0.0
        %2385 = vmatpush1.msra.mxu0 %v2354
        %2386 = vmatprep.subr.mxu0 0.0
        %2387 = vmatpush1.msra.mxu0 %v2355
        %2388 = vmatprep.subr.mxu0 0.0
        %2389 = vmatpush1.msra.mxu0 0.0
        %2390 = vmatprep.subr.mxu0 0.0
        %2391 = vmatpush1.msra.mxu0 0.0
        %2392 = vmatprep.subr.mxu0 0.0
        %2393 = vmatpush1.msra.mxu0 0.0
        %2394 = vmatprep.subr.mxu0 0.0
        %2395 = vmatpush1.msra.mxu0 0.0
        %2396 = vmatprep.subr.mxu0 0.0
        %2397 = vmatpush1.msra.mxu0 0.0
        %2398 = vmatprep.subr.mxu0 0.0
        %2399 = vmatpush1.msra.mxu0 0.0
        %2400 = vmatprep.subr.mxu0 0.0
        %2401 = vmatpush1.msra.mxu0 0.0
        %2402 = vmatprep.subr.mxu0 0.0
        %2403 = vmatpush1.msra.mxu0 0.0
        %2404 = vmatprep.subr.mxu0 0.0
        %2405 = vmatpush1.msra.mxu0 0.0
        %2406 = vmatprep.subr.mxu0 0.0
        %2407 = vmatpush1.msra.mxu0 0.0
        %2408 = vmatprep.subr.mxu0 0.0
        %2409 = vmatpush1.msra.mxu0 0.0
        %2410 = vmatprep.subr.mxu0 0.0
        %2411 = vmatpush1.msra.mxu0 0.0
        %2412 = vmatprep.subr.mxu0 0.0
        %2413 = vmatpush1.msra.mxu0 0.0
        %2414 = vmatprep.subr.mxu0 0.0
        %2415 = vmatpush1.msra.mxu0 0.0
        %2416 = vmatprep.subr.mxu0 0.0
        %2417 = vmatpush1.msra.mxu0 0.0
        %2418 = vmatprep.subr.mxu0 0.0
        %2419 = vmatpush1.msra.mxu0 0.0
        %2420 = vmatprep.mubr.f32.mxu0 0.0
        %2421 = vmatmul.mubr.f32.gmra.mrb[0].mxu0 %v2320
        %v2422 = vpop.f32.mrb[0].mxu0
        %v2423 = vadd.f32 0.0, %v2422
        %v2424 = vpop.f32.mrb[0].mxu0
        %2425 = vmatprep.mubr.f32.mxu0 0.0
        %2426 = vmatmul.mubr.f32.gmra.mrb[0].mxu0 %v2338
        %v2427 = vpop.f32.mrb[0].mxu0
        %v2428 = vadd.f32 0.0, %v2427
        %v2429 = vpop.f32.mrb[0].mxu0
        %2430 = vdwg.mxu0
        %2431 = vmatprep.subr.mxu0 0.0
        %2432 = vmatpush1.msra.mxu0 %v2322
        %2433 = vmatprep.subr.mxu0 0.0
        %2434 = vmatpush1.msra.mxu0 %v2323
        %2435 = vmatprep.subr.mxu0 0.0
        %2436 = vmatpush1.msra.mxu0 %v2324
        %2437 = vmatprep.subr.mxu0 0.0
        %2438 = vmatpush1.msra.mxu0 %v2325
        %2439 = vmatprep.subr.mxu0 0.0
        %2440 = vmatpush1.msra.mxu0 %v2326
        %2441 = vmatprep.subr.mxu0 0.0
        %2442 = vmatpush1.msra.mxu0 %v2327
        %2443 = vmatprep.subr.mxu0 0.0
        %2444 = vmatpush1.msra.mxu0 %v2328
        %2445 = vmatprep.subr.mxu0 0.0
        %2446 = vmatpush1.msra.mxu0 %v2329
        %2447 = vmatprep.subr.mxu0 0.0
        %2448 = vmatpush1.msra.mxu0 %v2330
        %2449 = vmatprep.subr.mxu0 0.0
        %2450 = vmatpush1.msra.mxu0 %v2331
        %2451 = vmatprep.subr.mxu0 0.0
        %2452 = vmatpush1.msra.mxu0 %v2332
        %2453 = vmatprep.subr.mxu0 0.0
        %2454 = vmatpush1.msra.mxu0 %v2333
        %2455 = vmatprep.subr.mxu0 0.0
        %2456 = vmatpush1.msra.mxu0 %v2334
        %2457 = vmatprep.subr.mxu0 0.0
        %2458 = vmatpush1.msra.mxu0 %v2335
        %2459 = vmatprep.subr.mxu0 0.0
        %2460 = vmatpush1.msra.mxu0 %v2336
        %2461 = vmatprep.subr.mxu0 0.0
        %2462 = vmatpush1.msra.mxu0 %v2337
        %2463 = vmatprep.subr.mxu0 0.0
        %2464 = vmatpush1.msra.mxu0 0.0
        %2465 = vmatprep.subr.mxu0 0.0
        %2466 = vmatpush1.msra.mxu0 0.0
        %2467 = vmatprep.subr.mxu0 0.0
        %2468 = vmatpush1.msra.mxu0 0.0
        %2469 = vmatprep.subr.mxu0 0.0
        %2470 = vmatpush1.msra.mxu0 0.0
        %2471 = vmatprep.subr.mxu0 0.0
        %2472 = vmatpush1.msra.mxu0 0.0
        %2473 = vmatprep.subr.mxu0 0.0
        %2474 = vmatpush1.msra.mxu0 0.0
        %2475 = vmatprep.subr.mxu0 0.0
        %2476 = vmatpush1.msra.mxu0 0.0
        %2477 = vmatprep.subr.mxu0 0.0
        %2478 = vmatpush1.msra.mxu0 0.0
        %2479 = vmatprep.subr.mxu0 0.0
        %2480 = vmatpush1.msra.mxu0 0.0
        %2481 = vmatprep.subr.mxu0 0.0
        %2482 = vmatpush1.msra.mxu0 0.0
        %2483 = vmatprep.subr.mxu0 0.0
        %2484 = vmatpush1.msra.mxu0 0.0
        %2485 = vmatprep.subr.mxu0 0.0
        %2486 = vmatpush1.msra.mxu0 0.0
        %2487 = vmatprep.subr.mxu0 0.0
        %2488 = vmatpush1.msra.mxu0 0.0
        %2489 = vmatprep.subr.mxu0 0.0
        %2490 = vmatpush1.msra.mxu0 0.0
        %2491 = vmatprep.subr.mxu0 0.0
        %2492 = vmatpush1.msra.mxu0 0.0
        %2493 = vmatprep.subr.mxu0 0.0
        %2494 = vmatpush1.msra.mxu0 0.0
        %2495 = vmatprep.mubr.f32.mxu0 0.0
        %2496 = vmatmul.mubr.f32.gmra.mrb[0].mxu0 %v2319
        %v2497 = vpop.f32.mrb[0].mxu0
        %v2498 = vadd.f32 %v2423, %v2497
        %v2499 = vpop.f32.mrb[0].mxu0
        %2500 = vmatprep.mubr.f32.mxu0 0.0
        %2501 = vmatmul.mubr.f32.gmra.mrb[0].mxu0 %v2320
        %v2502 = vpop.f32.mrb[0].mxu0
        %v2503 = vadd.f32 %v2428, %v2502
        %v2504 = vpop.f32.mrb[0].mxu0
        %2505 = vdwg.mxu0
        %v2506 = vld [vmem:[#allocation2 + $0x10] sm:$0xff]
        %v2507 = vld [vmem:[#allocation2 + $0x18] sm:$0xff]
        %s2508 = scalar_lea.vmem [#allocation3], 3072
        %v2509 = vld [vmem:[%s2508] sm:$0xff]
        %v2510 = vld [vmem:[%s2508 + $0x8] sm:$0xff]
        %v2511 = vld [vmem:[%s2508 + $0x10] sm:$0xff]
        %v2512 = vld [vmem:[%s2508 + $0x18] sm:$0xff]
        %v2513 = vld [vmem:[%s2508 + $0x20] sm:$0xff]
        %v2514 = vld [vmem:[%s2508 + $0x28] sm:$0xff]
        %v2515 = vld [vmem:[%s2508 + $0x30] sm:$0xff]
        %v2516 = vld [vmem:[%s2508 + $0x38] sm:$0xff]
        %v2517 = vld [vmem:[%s2508 + $0x40] sm:$0xff]
        %v2518 = vld [vmem:[%s2508 + $0x48] sm:$0xff]
        %v2519 = vld [vmem:[%s2508 + $0x50] sm:$0xff]
        %v2520 = vld [vmem:[%s2508 + $0x58] sm:$0xff]
        %v2521 = vld [vmem:[%s2508 + $0x60] sm:$0xff]
        %v2522 = vld [vmem:[%s2508 + $0x68] sm:$0xff]
        %v2523 = vld [vmem:[%s2508 + $0x70] sm:$0xff]
        %v2524 = vld [vmem:[%s2508 + $0x78] sm:$0xff]
        %2525 = vmatprep.subr.mxu0 0.0
        %2526 = vmatpush1.msra.mxu0 %v2509
        %2527 = vmatprep.subr.mxu0 0.0
        %2528 = vmatpush1.msra.mxu0 %v2510
        %2529 = vmatprep.subr.mxu0 0.0
        %2530 = vmatpush1.msra.mxu0 %v2511
        %2531 = vmatprep.subr.mxu0 0.0
        %2532 = vmatpush1.msra.mxu0 %v2512
        %2533 = vmatprep.subr.mxu0 0.0
        %2534 = vmatpush1.msra.mxu0 %v2513
        %2535 = vmatprep.subr.mxu0 0.0
        %2536 = vmatpush1.msra.mxu0 %v2514
        %2537 = vmatprep.subr.mxu0 0.0
        %2538 = vmatpush1.msra.mxu0 %v2515
        %2539 = vmatprep.subr.mxu0 0.0
        %2540 = vmatpush1.msra.mxu0 %v2516
        %2541 = vmatprep.subr.mxu0 0.0
        %2542 = vmatpush1.msra.mxu0 %v2517
        %2543 = vmatprep.subr.mxu0 0.0
        %2544 = vmatpush1.msra.mxu0 %v2518
        %2545 = vmatprep.subr.mxu0 0.0
        %2546 = vmatpush1.msra.mxu0 %v2519
        %2547 = vmatprep.subr.mxu0 0.0
        %2548 = vmatpush1.msra.mxu0 %v2520
        %2549 = vmatprep.subr.mxu0 0.0
        %2550 = vmatpush1.msra.mxu0 %v2521
        %2551 = vmatprep.subr.mxu0 0.0
        %2552 = vmatpush1.msra.mxu0 %v2522
        %2553 = vmatprep.subr.mxu0 0.0
        %2554 = vmatpush1.msra.mxu0 %v2523
        %2555 = vmatprep.subr.mxu0 0.0
        %2556 = vmatpush1.msra.mxu0 %v2524
        %2557 = vmatprep.subr.mxu0 0.0
        %2558 = vmatpush1.msra.mxu0 0.0
        %2559 = vmatprep.subr.mxu0 0.0
        %2560 = vmatpush1.msra.mxu0 0.0
        %2561 = vmatprep.subr.mxu0 0.0
        %2562 = vmatpush1.msra.mxu0 0.0
        %2563 = vmatprep.subr.mxu0 0.0
        %2564 = vmatpush1.msra.mxu0 0.0
        %2565 = vmatprep.subr.mxu0 0.0
        %2566 = vmatpush1.msra.mxu0 0.0
        %2567 = vmatprep.subr.mxu0 0.0
        %2568 = vmatpush1.msra.mxu0 0.0
        %2569 = vmatprep.subr.mxu0 0.0
        %2570 = vmatpush1.msra.mxu0 0.0
        %2571 = vmatprep.subr.mxu0 0.0
        %2572 = vmatpush1.msra.mxu0 0.0
        %2573 = vmatprep.subr.mxu0 0.0
        %2574 = vmatpush1.msra.mxu0 0.0
        %2575 = vmatprep.subr.mxu0 0.0
        %2576 = vmatpush1.msra.mxu0 0.0
        %2577 = vmatprep.subr.mxu0 0.0
        %2578 = vmatpush1.msra.mxu0 0.0
        %2579 = vmatprep.subr.mxu0 0.0
        %2580 = vmatpush1.msra.mxu0 0.0
        %2581 = vmatprep.subr.mxu0 0.0
        %2582 = vmatpush1.msra.mxu0 0.0
        %2583 = vmatprep.subr.mxu0 0.0
        %2584 = vmatpush1.msra.mxu0 0.0
        %2585 = vmatprep.subr.mxu0 0.0
        %2586 = vmatpush1.msra.mxu0 0.0
        %2587 = vmatprep.subr.mxu0 0.0
        %2588 = vmatpush1.msra.mxu0 0.0
        %2589 = vmatprep.mubr.f32.mxu0 0.0
        %2590 = vmatmul.mubr.f32.gmra.mrb[0].mxu0 %v2506
        %v2591 = vpop.f32.mrb[0].mxu0
        %v2592 = vadd.f32 0.0, %v2591
        %v2593 = vpop.f32.mrb[0].mxu0
        %2594 = vmatprep.mubr.f32.mxu0 0.0
        %2595 = vmatmul.mubr.f32.gmra.mrb[0].mxu0 %v2507
        %v2596 = vpop.f32.mrb[0].mxu0
        %v2597 = vadd.f32 0.0, %v2596
        %v2598 = vpop.f32.mrb[0].mxu0
        %2599 = vdwg.mxu0
        %v2600 = vadd.f32 %v2498, %v2592
        %v2601 = vadd.f32 %v2503, %v2597
        %s2602 = scalar_lea.vmem [#allocation5], 128
        %v2603 = vld [vmem:[%s2602] sm:$0xff]
        %v2604 = vld [vmem:[%s2602 + $0x8] sm:$0xff]
        %v2605 = vld [vmem:[%s2602 + $0x10] sm:$0xff]
        %v2606 = vld [vmem:[%s2602 + $0x18] sm:$0xff]
        %v2607 = vld [vmem:[%s2602 + $0x20] sm:$0xff]
        %v2608 = vld [vmem:[%s2602 + $0x28] sm:$0xff]
        %v2609 = vld [vmem:[%s2602 + $0x30] sm:$0xff]
        %v2610 = vld [vmem:[%s2602 + $0x38] sm:$0xff]
        %v2611 = vld [vmem:[%s2602 + $0x40] sm:$0xff]
        %v2612 = vld [vmem:[%s2602 + $0x48] sm:$0xff]
        %v2613 = vld [vmem:[%s2602 + $0x50] sm:$0xff]
        %v2614 = vld [vmem:[%s2602 + $0x58] sm:$0xff]
        %v2615 = vld [vmem:[%s2602 + $0x60] sm:$0xff]
        %v2616 = vld [vmem:[%s2602 + $0x68] sm:$0xff]
        %v2617 = vld [vmem:[%s2602 + $0x70] sm:$0xff]
        %v2618 = vld [vmem:[%s2602 + $0x78] sm:$0xff]
        %2619 = vmatprep.subr.mxu0 0.0
        %2620 = vmatpush1.msra.mxu0 %v2603
        %2621 = vmatprep.subr.mxu0 0.0
        %2622 = vmatpush1.msra.mxu0 %v2604
        %2623 = vmatprep.subr.mxu0 0.0
        %2624 = vmatpush1.msra.mxu0 %v2605
        %2625 = vmatprep.subr.mxu0 0.0
        %2626 = vmatpush1.msra.mxu0 %v2606
        %2627 = vmatprep.subr.mxu0 0.0
        %2628 = vmatpush1.msra.mxu0 %v2607
        %2629 = vmatprep.subr.mxu0 0.0
        %2630 = vmatpush1.msra.mxu0 %v2608
        %2631 = vmatprep.subr.mxu0 0.0
        %2632 = vmatpush1.msra.mxu0 %v2609
        %2633 = vmatprep.subr.mxu0 0.0
        %2634 = vmatpush1.msra.mxu0 %v2610
        %2635 = vmatprep.subr.mxu0 0.0
        %2636 = vmatpush1.msra.mxu0 %v2611
        %2637 = vmatprep.subr.mxu0 0.0
        %2638 = vmatpush1.msra.mxu0 %v2612
        %2639 = vmatprep.subr.mxu0 0.0
        %2640 = vmatpush1.msra.mxu0 %v2613
        %2641 = vmatprep.subr.mxu0 0.0
        %2642 = vmatpush1.msra.mxu0 %v2614
        %2643 = vmatprep.subr.mxu0 0.0
        %2644 = vmatpush1.msra.mxu0 %v2615
        %2645 = vmatprep.subr.mxu0 0.0
        %2646 = vmatpush1.msra.mxu0 %v2616
        %2647 = vmatprep.subr.mxu0 0.0
        %2648 = vmatpush1.msra.mxu0 %v2617
        %2649 = vmatprep.subr.mxu0 0.0
        %2650 = vmatpush1.msra.mxu0 %v2618
        %2651 = vmatprep.subr.mxu0 0.0
        %2652 = vmatpush1.msra.mxu0 0.0
        %2653 = vmatprep.subr.mxu0 0.0
        %2654 = vmatpush1.msra.mxu0 0.0
        %2655 = vmatprep.subr.mxu0 0.0
        %2656 = vmatpush1.msra.mxu0 0.0
        %2657 = vmatprep.subr.mxu0 0.0
        %2658 = vmatpush1.msra.mxu0 0.0
        %2659 = vmatprep.subr.mxu0 0.0
        %2660 = vmatpush1.msra.mxu0 0.0
        %2661 = vmatprep.subr.mxu0 0.0
        %2662 = vmatpush1.msra.mxu0 0.0
        %2663 = vmatprep.subr.mxu0 0.0
        %2664 = vmatpush1.msra.mxu0 0.0
        %2665 = vmatprep.subr.mxu0 0.0
        %2666 = vmatpush1.msra.mxu0 0.0
        %2667 = vmatprep.subr.mxu0 0.0
        %2668 = vmatpush1.msra.mxu0 0.0
        %2669 = vmatprep.subr.mxu0 0.0
        %2670 = vmatpush1.msra.mxu0 0.0
        %2671 = vmatprep.subr.mxu0 0.0
        %2672 = vmatpush1.msra.mxu0 0.0
        %2673 = vmatprep.subr.mxu0 0.0
        %2674 = vmatpush1.msra.mxu0 0.0
        %2675 = vmatprep.subr.mxu0 0.0
        %2676 = vmatpush1.msra.mxu0 0.0
        %2677 = vmatprep.subr.mxu0 0.0
        %2678 = vmatpush1.msra.mxu0 0.0
        %2679 = vmatprep.subr.mxu0 0.0
        %2680 = vmatpush1.msra.mxu0 0.0
        %2681 = vmatprep.subr.mxu0 0.0
        %2682 = vmatpush1.msra.mxu0 0.0
        %2683 = vmatprep.mubr.f32.mxu0 0.0
        %2684 = vmatmul.mubr.f32.gmra.mrb[0].mxu0 %v2600
        %v2685 = vpop.f32.mrb[0].mxu0
        %v2686 = vadd.f32 0.0, %v2685
        %v2687 = vpop.f32.mrb[0].mxu0
        %2688 = vmatprep.mubr.f32.mxu0 0.0
        %2689 = vmatmul.mubr.f32.gmra.mrb[0].mxu0 %v2601
        %v2690 = vpop.f32.mrb[0].mxu0
        %v2691 = vadd.f32 0.0, %v2690
        %v2692 = vpop.f32.mrb[0].mxu0
        %2693 = vdwg.mxu0
        %2694 = vmatprep.subr.mxu0 0.0
        %2695 = vmatpush1.msra.mxu0 %v1443
        %2696 = vmatprep.subr.mxu0 0.0
        %2697 = vmatpush1.msra.mxu0 %v1444
        %2698 = vmatprep.subr.mxu0 0.0
        %2699 = vmatpush1.msra.mxu0 %v1445
        %2700 = vmatprep.subr.mxu0 0.0
        %2701 = vmatpush1.msra.mxu0 %v1446
        %2702 = vmatprep.subr.mxu0 0.0
        %2703 = vmatpush1.msra.mxu0 %v1447
        %2704 = vmatprep.subr.mxu0 0.0
        %2705 = vmatpush1.msra.mxu0 %v1448
        %2706 = vmatprep.subr.mxu0 0.0
        %2707 = vmatpush1.msra.mxu0 %v1449
        %2708 = vmatprep.subr.mxu0 0.0
        %2709 = vmatpush1.msra.mxu0 %v1450
        %2710 = vmatprep.subr.mxu0 0.0
        %2711 = vmatpush1.msra.mxu0 %v1451
        %2712 = vmatprep.subr.mxu0 0.0
        %2713 = vmatpush1.msra.mxu0 %v1452
        %2714 = vmatprep.subr.mxu0 0.0
        %2715 = vmatpush1.msra.mxu0 %v1453
        %2716 = vmatprep.subr.mxu0 0.0
        %2717 = vmatpush1.msra.mxu0 %v1454
        %2718 = vmatprep.subr.mxu0 0.0
        %2719 = vmatpush1.msra.mxu0 %v1455
        %2720 = vmatprep.subr.mxu0 0.0
        %2721 = vmatpush1.msra.mxu0 %v1456
        %2722 = vmatprep.subr.mxu0 0.0
        %2723 = vmatpush1.msra.mxu0 %v1457
        %2724 = vmatprep.subr.mxu0 0.0
        %2725 = vmatpush1.msra.mxu0 %v1458
        %2726 = vmatprep.subr.mxu0 0.0
        %2727 = vmatpush1.msra.mxu0 0.0
        %2728 = vmatprep.subr.mxu0 0.0
        %2729 = vmatpush1.msra.mxu0 0.0
        %2730 = vmatprep.subr.mxu0 0.0
        %2731 = vmatpush1.msra.mxu0 0.0
        %2732 = vmatprep.subr.mxu0 0.0
        %2733 = vmatpush1.msra.mxu0 0.0
        %2734 = vmatprep.subr.mxu0 0.0
        %2735 = vmatpush1.msra.mxu0 0.0
        %2736 = vmatprep.subr.mxu0 0.0
        %2737 = vmatpush1.msra.mxu0 0.0
        %2738 = vmatprep.subr.mxu0 0.0
        %2739 = vmatpush1.msra.mxu0 0.0
        %2740 = vmatprep.subr.mxu0 0.0
        %2741 = vmatpush1.msra.mxu0 0.0
        %2742 = vmatprep.subr.mxu0 0.0
        %2743 = vmatpush1.msra.mxu0 0.0
        %2744 = vmatprep.subr.mxu0 0.0
        %2745 = vmatpush1.msra.mxu0 0.0
        %2746 = vmatprep.subr.mxu0 0.0
        %2747 = vmatpush1.msra.mxu0 0.0
        %2748 = vmatprep.subr.mxu0 0.0
        %2749 = vmatpush1.msra.mxu0 0.0
        %2750 = vmatprep.subr.mxu0 0.0
        %2751 = vmatpush1.msra.mxu0 0.0
        %2752 = vmatprep.subr.mxu0 0.0
        %2753 = vmatpush1.msra.mxu0 0.0
        %2754 = vmatprep.subr.mxu0 0.0
        %2755 = vmatpush1.msra.mxu0 0.0
        %2756 = vmatprep.subr.mxu0 0.0
        %2757 = vmatpush1.msra.mxu0 0.0
        %2758 = vmatprep.mubr.f32.mxu0 0.0
        %2759 = vmatmul.mubr.f32.gmra.mrb[0].mxu0 %v1435
        %v2760 = vpop.f32.mrb[0].mxu0
        %v2761 = vadd.f32 %v2686, %v2760
        %v2762 = vpop.f32.mrb[0].mxu0
        %2763 = vmatprep.mubr.f32.mxu0 0.0
        %2764 = vmatmul.mubr.f32.gmra.mrb[0].mxu0 %v1440
        %v2765 = vpop.f32.mrb[0].mxu0
        %v2766 = vadd.f32 %v2691, %v2765
        %v2767 = vpop.f32.mrb[0].mxu0
        %2768 = vdwg.mxu0
        %2769 = vst [vmem:[#allocation2 + $0x8] sm:$0xff] %v203
        %2770 = vst [vmem:[#allocation2 + $0x10] sm:$0xff] %v204
        %v2771 = vld [vmem:[#allocation2 + $0x7] sm:$0xff]
        %v2772 = vld [vmem:[#allocation2 + $0xf] sm:$0xff]
        %s2773 = scalar_lea.vmem [#allocation3], 3200
        %v2774 = vld [vmem:[%s2773] sm:$0xff]
        %v2775 = vld [vmem:[%s2773 + $0x8] sm:$0xff]
        %v2776 = vld [vmem:[%s2773 + $0x10] sm:$0xff]
        %v2777 = vld [vmem:[%s2773 + $0x18] sm:$0xff]
        %v2778 = vld [vmem:[%s2773 + $0x20] sm:$0xff]
        %v2779 = vld [vmem:[%s2773 + $0x28] sm:$0xff]
        %v2780 = vld [vmem:[%s2773 + $0x30] sm:$0xff]
        %v2781 = vld [vmem:[%s2773 + $0x38] sm:$0xff]
        %v2782 = vld [vmem:[%s2773 + $0x40] sm:$0xff]
        %v2783 = vld [vmem:[%s2773 + $0x48] sm:$0xff]
        %v2784 = vld [vmem:[%s2773 + $0x50] sm:$0xff]
        %v2785 = vld [vmem:[%s2773 + $0x58] sm:$0xff]
        %v2786 = vld [vmem:[%s2773 + $0x60] sm:$0xff]
        %v2787 = vld [vmem:[%s2773 + $0x68] sm:$0xff]
        %v2788 = vld [vmem:[%s2773 + $0x70] sm:$0xff]
        %v2789 = vld [vmem:[%s2773 + $0x78] sm:$0xff]
        %v2790 = vld [vmem:[#allocation2 + $0x8] sm:$0xff]
        %v2791 = vld [vmem:[#allocation2 + $0x10] sm:$0xff]
        %s2792 = scalar_lea.vmem [#allocation3], 3328
        %v2793 = vld [vmem:[%s2792] sm:$0xff]
        %v2794 = vld [vmem:[%s2792 + $0x8] sm:$0xff]
        %v2795 = vld [vmem:[%s2792 + $0x10] sm:$0xff]
        %v2796 = vld [vmem:[%s2792 + $0x18] sm:$0xff]
        %v2797 = vld [vmem:[%s2792 + $0x20] sm:$0xff]
        %v2798 = vld [vmem:[%s2792 + $0x28] sm:$0xff]
        %v2799 = vld [vmem:[%s2792 + $0x30] sm:$0xff]
        %v2800 = vld [vmem:[%s2792 + $0x38] sm:$0xff]
        %v2801 = vld [vmem:[%s2792 + $0x40] sm:$0xff]
        %v2802 = vld [vmem:[%s2792 + $0x48] sm:$0xff]
        %v2803 = vld [vmem:[%s2792 + $0x50] sm:$0xff]
        %v2804 = vld [vmem:[%s2792 + $0x58] sm:$0xff]
        %v2805 = vld [vmem:[%s2792 + $0x60] sm:$0xff]
        %v2806 = vld [vmem:[%s2792 + $0x68] sm:$0xff]
        %v2807 = vld [vmem:[%s2792 + $0x70] sm:$0xff]
        %v2808 = vld [vmem:[%s2792 + $0x78] sm:$0xff]
        %2809 = vmatprep.subr.mxu0 0.0
        %2810 = vmatpush1.msra.mxu0 %v2793
        %2811 = vmatprep.subr.mxu0 0.0
        %2812 = vmatpush1.msra.mxu0 %v2794
        %2813 = vmatprep.subr.mxu0 0.0
        %2814 = vmatpush1.msra.mxu0 %v2795
        %2815 = vmatprep.subr.mxu0 0.0
        %2816 = vmatpush1.msra.mxu0 %v2796
        %2817 = vmatprep.subr.mxu0 0.0
        %2818 = vmatpush1.msra.mxu0 %v2797
        %2819 = vmatprep.subr.mxu0 0.0
        %2820 = vmatpush1.msra.mxu0 %v2798
        %2821 = vmatprep.subr.mxu0 0.0
        %2822 = vmatpush1.msra.mxu0 %v2799
        %2823 = vmatprep.subr.mxu0 0.0
        %2824 = vmatpush1.msra.mxu0 %v2800
        %2825 = vmatprep.subr.mxu0 0.0
        %2826 = vmatpush1.msra.mxu0 %v2801
        %2827 = vmatprep.subr.mxu0 0.0
        %2828 = vmatpush1.msra.mxu0 %v2802
        %2829 = vmatprep.subr.mxu0 0.0
        %2830 = vmatpush1.msra.mxu0 %v2803
        %2831 = vmatprep.subr.mxu0 0.0
        %2832 = vmatpush1.msra.mxu0 %v2804
        %2833 = vmatprep.subr.mxu0 0.0
        %2834 = vmatpush1.msra.mxu0 %v2805
        %2835 = vmatprep.subr.mxu0 0.0
        %2836 = vmatpush1.msra.mxu0 %v2806
        %2837 = vmatprep.subr.mxu0 0.0
        %2838 = vmatpush1.msra.mxu0 %v2807
        %2839 = vmatprep.subr.mxu0 0.0
        %2840 = vmatpush1.msra.mxu0 %v2808
        %2841 = vmatprep.subr.mxu0 0.0
        %2842 = vmatpush1.msra.mxu0 0.0
        %2843 = vmatprep.subr.mxu0 0.0
        %2844 = vmatpush1.msra.mxu0 0.0
        %2845 = vmatprep.subr.mxu0 0.0
        %2846 = vmatpush1.msra.mxu0 0.0
        %2847 = vmatprep.subr.mxu0 0.0
        %2848 = vmatpush1.msra.mxu0 0.0
        %2849 = vmatprep.subr.mxu0 0.0
        %2850 = vmatpush1.msra.mxu0 0.0
        %2851 = vmatprep.subr.mxu0 0.0
        %2852 = vmatpush1.msra.mxu0 0.0
        %2853 = vmatprep.subr.mxu0 0.0
        %2854 = vmatpush1.msra.mxu0 0.0
        %2855 = vmatprep.subr.mxu0 0.0
        %2856 = vmatpush1.msra.mxu0 0.0
        %2857 = vmatprep.subr.mxu0 0.0
        %2858 = vmatpush1.msra.mxu0 0.0
        %2859 = vmatprep.subr.mxu0 0.0
        %2860 = vmatpush1.msra.mxu0 0.0
        %2861 = vmatprep.subr.mxu0 0.0
        %2862 = vmatpush1.msra.mxu0 0.0
        %2863 = vmatprep.subr.mxu0 0.0
        %2864 = vmatpush1.msra.mxu0 0.0
        %2865 = vmatprep.subr.mxu0 0.0
        %2866 = vmatpush1.msra.mxu0 0.0
        %2867 = vmatprep.subr.mxu0 0.0
        %2868 = vmatpush1.msra.mxu0 0.0
        %2869 = vmatprep.subr.mxu0 0.0
        %2870 = vmatpush1.msra.mxu0 0.0
        %2871 = vmatprep.subr.mxu0 0.0
        %2872 = vmatpush1.msra.mxu0 0.0
        %2873 = vmatprep.mubr.f32.mxu0 0.0
        %2874 = vmatmul.mubr.f32.gmra.mrb[0].mxu0 %v2790
        %v2875 = vpop.f32.mrb[0].mxu0
        %v2876 = vadd.f32 0.0, %v2875
        %v2877 = vpop.f32.mrb[0].mxu0
        %2878 = vmatprep.mubr.f32.mxu0 0.0
        %2879 = vmatmul.mubr.f32.gmra.mrb[0].mxu0 %v2791
        %v2880 = vpop.f32.mrb[0].mxu0
        %v2881 = vadd.f32 0.0, %v2880
        %v2882 = vpop.f32.mrb[0].mxu0
        %2883 = vdwg.mxu0
        %2884 = vmatprep.subr.mxu0 0.0
        %2885 = vmatpush1.msra.mxu0 %v2774
        %2886 = vmatprep.subr.mxu0 0.0
        %2887 = vmatpush1.msra.mxu0 %v2775
        %2888 = vmatprep.subr.mxu0 0.0
        %2889 = vmatpush1.msra.mxu0 %v2776
        %2890 = vmatprep.subr.mxu0 0.0
        %2891 = vmatpush1.msra.mxu0 %v2777
        %2892 = vmatprep.subr.mxu0 0.0
        %2893 = vmatpush1.msra.mxu0 %v2778
        %2894 = vmatprep.subr.mxu0 0.0
        %2895 = vmatpush1.msra.mxu0 %v2779
        %2896 = vmatprep.subr.mxu0 0.0
        %2897 = vmatpush1.msra.mxu0 %v2780
        %2898 = vmatprep.subr.mxu0 0.0
        %2899 = vmatpush1.msra.mxu0 %v2781
        %2900 = vmatprep.subr.mxu0 0.0
        %2901 = vmatpush1.msra.mxu0 %v2782
        %2902 = vmatprep.subr.mxu0 0.0
        %2903 = vmatpush1.msra.mxu0 %v2783
        %2904 = vmatprep.subr.mxu0 0.0
        %2905 = vmatpush1.msra.mxu0 %v2784
        %2906 = vmatprep.subr.mxu0 0.0
        %2907 = vmatpush1.msra.mxu0 %v2785
        %2908 = vmatprep.subr.mxu0 0.0
        %2909 = vmatpush1.msra.mxu0 %v2786
        %2910 = vmatprep.subr.mxu0 0.0
        %2911 = vmatpush1.msra.mxu0 %v2787
        %2912 = vmatprep.subr.mxu0 0.0
        %2913 = vmatpush1.msra.mxu0 %v2788
        %2914 = vmatprep.subr.mxu0 0.0
        %2915 = vmatpush1.msra.mxu0 %v2789
        %2916 = vmatprep.subr.mxu0 0.0
        %2917 = vmatpush1.msra.mxu0 0.0
        %2918 = vmatprep.subr.mxu0 0.0
        %2919 = vmatpush1.msra.mxu0 0.0
        %2920 = vmatprep.subr.mxu0 0.0
        %2921 = vmatpush1.msra.mxu0 0.0
        %2922 = vmatprep.subr.mxu0 0.0
        %2923 = vmatpush1.msra.mxu0 0.0
        %2924 = vmatprep.subr.mxu0 0.0
        %2925 = vmatpush1.msra.mxu0 0.0
        %2926 = vmatprep.subr.mxu0 0.0
        %2927 = vmatpush1.msra.mxu0 0.0
        %2928 = vmatprep.subr.mxu0 0.0
        %2929 = vmatpush1.msra.mxu0 0.0
        %2930 = vmatprep.subr.mxu0 0.0
        %2931 = vmatpush1.msra.mxu0 0.0
        %2932 = vmatprep.subr.mxu0 0.0
        %2933 = vmatpush1.msra.mxu0 0.0
        %2934 = vmatprep.subr.mxu0 0.0
        %2935 = vmatpush1.msra.mxu0 0.0
        %2936 = vmatprep.subr.mxu0 0.0
        %2937 = vmatpush1.msra.mxu0 0.0
        %2938 = vmatprep.subr.mxu0 0.0
        %2939 = vmatpush1.msra.mxu0 0.0
        %2940 = vmatprep.subr.mxu0 0.0
        %2941 = vmatpush1.msra.mxu0 0.0
        %2942 = vmatprep.subr.mxu0 0.0
        %2943 = vmatpush1.msra.mxu0 0.0
        %2944 = vmatprep.subr.mxu0 0.0
        %2945 = vmatpush1.msra.mxu0 0.0
        %2946 = vmatprep.subr.mxu0 0.0
        %2947 = vmatpush1.msra.mxu0 0.0
        %2948 = vmatprep.mubr.f32.mxu0 0.0
        %2949 = vmatmul.mubr.f32.gmra.mrb[0].mxu0 %v2771
        %v2950 = vpop.f32.mrb[0].mxu0
        %v2951 = vadd.f32 %v2876, %v2950
        %v2952 = vpop.f32.mrb[0].mxu0
        %2953 = vmatprep.mubr.f32.mxu0 0.0
        %2954 = vmatmul.mubr.f32.gmra.mrb[0].mxu0 %v2772
        %v2955 = vpop.f32.mrb[0].mxu0
        %v2956 = vadd.f32 %v2881, %v2955
        %v2957 = vpop.f32.mrb[0].mxu0
        %2958 = vdwg.mxu0
        %v2959 = vld [vmem:[#allocation2 + $0x9] sm:$0xff]
        %v2960 = vld [vmem:[#allocation2 + $0x11] sm:$0xff]
        %s2961 = scalar_lea.vmem [#allocation3], 3456
        %v2962 = vld [vmem:[%s2961] sm:$0xff]
        %v2963 = vld [vmem:[%s2961 + $0x8] sm:$0xff]
        %v2964 = vld [vmem:[%s2961 + $0x10] sm:$0xff]
        %v2965 = vld [vmem:[%s2961 + $0x18] sm:$0xff]
        %v2966 = vld [vmem:[%s2961 + $0x20] sm:$0xff]
        %v2967 = vld [vmem:[%s2961 + $0x28] sm:$0xff]
        %v2968 = vld [vmem:[%s2961 + $0x30] sm:$0xff]
        %v2969 = vld [vmem:[%s2961 + $0x38] sm:$0xff]
        %v2970 = vld [vmem:[%s2961 + $0x40] sm:$0xff]
        %v2971 = vld [vmem:[%s2961 + $0x48] sm:$0xff]
        %v2972 = vld [vmem:[%s2961 + $0x50] sm:$0xff]
        %v2973 = vld [vmem:[%s2961 + $0x58] sm:$0xff]
        %v2974 = vld [vmem:[%s2961 + $0x60] sm:$0xff]
        %v2975 = vld [vmem:[%s2961 + $0x68] sm:$0xff]
        %v2976 = vld [vmem:[%s2961 + $0x70] sm:$0xff]
        %v2977 = vld [vmem:[%s2961 + $0x78] sm:$0xff]
        %2978 = vmatprep.subr.mxu0 0.0
        %2979 = vmatpush1.msra.mxu0 %v2962
        %2980 = vmatprep.subr.mxu0 0.0
        %2981 = vmatpush1.msra.mxu0 %v2963
        %2982 = vmatprep.subr.mxu0 0.0
        %2983 = vmatpush1.msra.mxu0 %v2964
        %2984 = vmatprep.subr.mxu0 0.0
        %2985 = vmatpush1.msra.mxu0 %v2965
        %2986 = vmatprep.subr.mxu0 0.0
        %2987 = vmatpush1.msra.mxu0 %v2966
        %2988 = vmatprep.subr.mxu0 0.0
        %2989 = vmatpush1.msra.mxu0 %v2967
        %2990 = vmatprep.subr.mxu0 0.0
        %2991 = vmatpush1.msra.mxu0 %v2968
        %2992 = vmatprep.subr.mxu0 0.0
        %2993 = vmatpush1.msra.mxu0 %v2969
        %2994 = vmatprep.subr.mxu0 0.0
        %2995 = vmatpush1.msra.mxu0 %v2970
        %2996 = vmatprep.subr.mxu0 0.0
        %2997 = vmatpush1.msra.mxu0 %v2971
        %2998 = vmatprep.subr.mxu0 0.0
        %2999 = vmatpush1.msra.mxu0 %v2972
        %3000 = vmatprep.subr.mxu0 0.0
        %3001 = vmatpush1.msra.mxu0 %v2973
        %3002 = vmatprep.subr.mxu0 0.0
        %3003 = vmatpush1.msra.mxu0 %v2974
        %3004 = vmatprep.subr.mxu0 0.0
        %3005 = vmatpush1.msra.mxu0 %v2975
        %3006 = vmatprep.subr.mxu0 0.0
        %3007 = vmatpush1.msra.mxu0 %v2976
        %3008 = vmatprep.subr.mxu0 0.0
        %3009 = vmatpush1.msra.mxu0 %v2977
        %3010 = vmatprep.subr.mxu0 0.0
        %3011 = vmatpush1.msra.mxu0 0.0
        %3012 = vmatprep.subr.mxu0 0.0
        %3013 = vmatpush1.msra.mxu0 0.0
        %3014 = vmatprep.subr.mxu0 0.0
        %3015 = vmatpush1.msra.mxu0 0.0
        %3016 = vmatprep.subr.mxu0 0.0
        %3017 = vmatpush1.msra.mxu0 0.0
        %3018 = vmatprep.subr.mxu0 0.0
        %3019 = vmatpush1.msra.mxu0 0.0
        %3020 = vmatprep.subr.mxu0 0.0
        %3021 = vmatpush1.msra.mxu0 0.0
        %3022 = vmatprep.subr.mxu0 0.0
        %3023 = vmatpush1.msra.mxu0 0.0
        %3024 = vmatprep.subr.mxu0 0.0
        %3025 = vmatpush1.msra.mxu0 0.0
        %3026 = vmatprep.subr.mxu0 0.0
        %3027 = vmatpush1.msra.mxu0 0.0
        %3028 = vmatprep.subr.mxu0 0.0
        %3029 = vmatpush1.msra.mxu0 0.0
        %3030 = vmatprep.subr.mxu0 0.0
        %3031 = vmatpush1.msra.mxu0 0.0
        %3032 = vmatprep.subr.mxu0 0.0
        %3033 = vmatpush1.msra.mxu0 0.0
        %3034 = vmatprep.subr.mxu0 0.0
        %3035 = vmatpush1.msra.mxu0 0.0
        %3036 = vmatprep.subr.mxu0 0.0
        %3037 = vmatpush1.msra.mxu0 0.0
        %3038 = vmatprep.subr.mxu0 0.0
        %3039 = vmatpush1.msra.mxu0 0.0
        %3040 = vmatprep.subr.mxu0 0.0
        %3041 = vmatpush1.msra.mxu0 0.0
        %3042 = vmatprep.mubr.f32.mxu0 0.0
        %3043 = vmatmul.mubr.f32.gmra.mrb[0].mxu0 %v2959
        %v3044 = vpop.f32.mrb[0].mxu0
        %v3045 = vadd.f32 0.0, %v3044
        %v3046 = vpop.f32.mrb[0].mxu0
        %3047 = vmatprep.mubr.f32.mxu0 0.0
        %3048 = vmatmul.mubr.f32.gmra.mrb[0].mxu0 %v2960
        %v3049 = vpop.f32.mrb[0].mxu0
        %v3050 = vadd.f32 0.0, %v3049
        %v3051 = vpop.f32.mrb[0].mxu0
        %3052 = vdwg.mxu0
        %v3053 = vadd.f32 %v2951, %v3045
        %v3054 = vadd.f32 %v2956, %v3050
        %3055 = vst [vmem:[#allocation2 + $0x8] sm:$0xff] %v3053
        %3056 = vst [vmem:[#allocation2 + $0x10] sm:$0xff] %v3054
        %v3057 = vld [vmem:[#allocation2 + $0x6] sm:$0xff]
        %v3058 = vld [vmem:[#allocation2 + $0xe] sm:$0xff]
        %s3059 = scalar_lea.vmem [#allocation3], 3584
        %v3060 = vld [vmem:[%s3059] sm:$0xff]
        %v3061 = vld [vmem:[%s3059 + $0x8] sm:$0xff]
        %v3062 = vld [vmem:[%s3059 + $0x10] sm:$0xff]
        %v3063 = vld [vmem:[%s3059 + $0x18] sm:$0xff]
        %v3064 = vld [vmem:[%s3059 + $0x20] sm:$0xff]
        %v3065 = vld [vmem:[%s3059 + $0x28] sm:$0xff]
        %v3066 = vld [vmem:[%s3059 + $0x30] sm:$0xff]
        %v3067 = vld [vmem:[%s3059 + $0x38] sm:$0xff]
        %v3068 = vld [vmem:[%s3059 + $0x40] sm:$0xff]
        %v3069 = vld [vmem:[%s3059 + $0x48] sm:$0xff]
        %v3070 = vld [vmem:[%s3059 + $0x50] sm:$0xff]
        %v3071 = vld [vmem:[%s3059 + $0x58] sm:$0xff]
        %v3072 = vld [vmem:[%s3059 + $0x60] sm:$0xff]
        %v3073 = vld [vmem:[%s3059 + $0x68] sm:$0xff]
        %v3074 = vld [vmem:[%s3059 + $0x70] sm:$0xff]
        %v3075 = vld [vmem:[%s3059 + $0x78] sm:$0xff]
        %v3076 = vld [vmem:[#allocation2 + $0x8] sm:$0xff]
        %v3077 = vld [vmem:[#allocation2 + $0x10] sm:$0xff]
        %s3078 = scalar_lea.vmem [#allocation3], 3712
        %v3079 = vld [vmem:[%s3078] sm:$0xff]
        %v3080 = vld [vmem:[%s3078 + $0x8] sm:$0xff]
        %v3081 = vld [vmem:[%s3078 + $0x10] sm:$0xff]
        %v3082 = vld [vmem:[%s3078 + $0x18] sm:$0xff]
        %v3083 = vld [vmem:[%s3078 + $0x20] sm:$0xff]
        %v3084 = vld [vmem:[%s3078 + $0x28] sm:$0xff]
        %v3085 = vld [vmem:[%s3078 + $0x30] sm:$0xff]
        %v3086 = vld [vmem:[%s3078 + $0x38] sm:$0xff]
        %v3087 = vld [vmem:[%s3078 + $0x40] sm:$0xff]
        %v3088 = vld [vmem:[%s3078 + $0x48] sm:$0xff]
        %v3089 = vld [vmem:[%s3078 + $0x50] sm:$0xff]
        %v3090 = vld [vmem:[%s3078 + $0x58] sm:$0xff]
        %v3091 = vld [vmem:[%s3078 + $0x60] sm:$0xff]
        %v3092 = vld [vmem:[%s3078 + $0x68] sm:$0xff]
        %v3093 = vld [vmem:[%s3078 + $0x70] sm:$0xff]
        %v3094 = vld [vmem:[%s3078 + $0x78] sm:$0xff]
        %3095 = vmatprep.subr.mxu0 0.0
        %3096 = vmatpush1.msra.mxu0 %v3079
        %3097 = vmatprep.subr.mxu0 0.0
        %3098 = vmatpush1.msra.mxu0 %v3080
        %3099 = vmatprep.subr.mxu0 0.0
        %3100 = vmatpush1.msra.mxu0 %v3081
        %3101 = vmatprep.subr.mxu0 0.0
        %3102 = vmatpush1.msra.mxu0 %v3082
        %3103 = vmatprep.subr.mxu0 0.0
        %3104 = vmatpush1.msra.mxu0 %v3083
        %3105 = vmatprep.subr.mxu0 0.0
        %3106 = vmatpush1.msra.mxu0 %v3084
        %3107 = vmatprep.subr.mxu0 0.0
        %3108 = vmatpush1.msra.mxu0 %v3085
        %3109 = vmatprep.subr.mxu0 0.0
        %3110 = vmatpush1.msra.mxu0 %v3086
        %3111 = vmatprep.subr.mxu0 0.0
        %3112 = vmatpush1.msra.mxu0 %v3087
        %3113 = vmatprep.subr.mxu0 0.0
        %3114 = vmatpush1.msra.mxu0 %v3088
        %3115 = vmatprep.subr.mxu0 0.0
        %3116 = vmatpush1.msra.mxu0 %v3089
        %3117 = vmatprep.subr.mxu0 0.0
        %3118 = vmatpush1.msra.mxu0 %v3090
        %3119 = vmatprep.subr.mxu0 0.0
        %3120 = vmatpush1.msra.mxu0 %v3091
        %3121 = vmatprep.subr.mxu0 0.0
        %3122 = vmatpush1.msra.mxu0 %v3092
        %3123 = vmatprep.subr.mxu0 0.0
        %3124 = vmatpush1.msra.mxu0 %v3093
        %3125 = vmatprep.subr.mxu0 0.0
        %3126 = vmatpush1.msra.mxu0 %v3094
        %3127 = vmatprep.subr.mxu0 0.0
        %3128 = vmatpush1.msra.mxu0 0.0
        %3129 = vmatprep.subr.mxu0 0.0
        %3130 = vmatpush1.msra.mxu0 0.0
        %3131 = vmatprep.subr.mxu0 0.0
        %3132 = vmatpush1.msra.mxu0 0.0
        %3133 = vmatprep.subr.mxu0 0.0
        %3134 = vmatpush1.msra.mxu0 0.0
        %3135 = vmatprep.subr.mxu0 0.0
        %3136 = vmatpush1.msra.mxu0 0.0
        %3137 = vmatprep.subr.mxu0 0.0
        %3138 = vmatpush1.msra.mxu0 0.0
        %3139 = vmatprep.subr.mxu0 0.0
        %3140 = vmatpush1.msra.mxu0 0.0
        %3141 = vmatprep.subr.mxu0 0.0
        %3142 = vmatpush1.msra.mxu0 0.0
        %3143 = vmatprep.subr.mxu0 0.0
        %3144 = vmatpush1.msra.mxu0 0.0
        %3145 = vmatprep.subr.mxu0 0.0
        %3146 = vmatpush1.msra.mxu0 0.0
        %3147 = vmatprep.subr.mxu0 0.0
        %3148 = vmatpush1.msra.mxu0 0.0
        %3149 = vmatprep.subr.mxu0 0.0
        %3150 = vmatpush1.msra.mxu0 0.0
        %3151 = vmatprep.subr.mxu0 0.0
        %3152 = vmatpush1.msra.mxu0 0.0
        %3153 = vmatprep.subr.mxu0 0.0
        %3154 = vmatpush1.msra.mxu0 0.0
        %3155 = vmatprep.subr.mxu0 0.0
        %3156 = vmatpush1.msra.mxu0 0.0
        %3157 = vmatprep.subr.mxu0 0.0
        %3158 = vmatpush1.msra.mxu0 0.0
        %3159 = vmatprep.mubr.f32.mxu0 0.0
        %3160 = vmatmul.mubr.f32.gmra.mrb[0].mxu0 %v3076
        %v3161 = vpop.f32.mrb[0].mxu0
        %v3162 = vadd.f32 0.0, %v3161
        %v3163 = vpop.f32.mrb[0].mxu0
        %3164 = vmatprep.mubr.f32.mxu0 0.0
        %3165 = vmatmul.mubr.f32.gmra.mrb[0].mxu0 %v3077
        %v3166 = vpop.f32.mrb[0].mxu0
        %v3167 = vadd.f32 0.0, %v3166
        %v3168 = vpop.f32.mrb[0].mxu0
        %3169 = vdwg.mxu0
        %3170 = vmatprep.subr.mxu0 0.0
        %3171 = vmatpush1.msra.mxu0 %v3060
        %3172 = vmatprep.subr.mxu0 0.0
        %3173 = vmatpush1.msra.mxu0 %v3061
        %3174 = vmatprep.subr.mxu0 0.0
        %3175 = vmatpush1.msra.mxu0 %v3062
        %3176 = vmatprep.subr.mxu0 0.0
        %3177 = vmatpush1.msra.mxu0 %v3063
        %3178 = vmatprep.subr.mxu0 0.0
        %3179 = vmatpush1.msra.mxu0 %v3064
        %3180 = vmatprep.subr.mxu0 0.0
        %3181 = vmatpush1.msra.mxu0 %v3065
        %3182 = vmatprep.subr.mxu0 0.0
        %3183 = vmatpush1.msra.mxu0 %v3066
        %3184 = vmatprep.subr.mxu0 0.0
        %3185 = vmatpush1.msra.mxu0 %v3067
        %3186 = vmatprep.subr.mxu0 0.0
        %3187 = vmatpush1.msra.mxu0 %v3068
        %3188 = vmatprep.subr.mxu0 0.0
        %3189 = vmatpush1.msra.mxu0 %v3069
        %3190 = vmatprep.subr.mxu0 0.0
        %3191 = vmatpush1.msra.mxu0 %v3070
        %3192 = vmatprep.subr.mxu0 0.0
        %3193 = vmatpush1.msra.mxu0 %v3071
        %3194 = vmatprep.subr.mxu0 0.0
        %3195 = vmatpush1.msra.mxu0 %v3072
        %3196 = vmatprep.subr.mxu0 0.0
        %3197 = vmatpush1.msra.mxu0 %v3073
        %3198 = vmatprep.subr.mxu0 0.0
        %3199 = vmatpush1.msra.mxu0 %v3074
        %3200 = vmatprep.subr.mxu0 0.0
        %3201 = vmatpush1.msra.mxu0 %v3075
        %3202 = vmatprep.subr.mxu0 0.0
        %3203 = vmatpush1.msra.mxu0 0.0
        %3204 = vmatprep.subr.mxu0 0.0
        %3205 = vmatpush1.msra.mxu0 0.0
        %3206 = vmatprep.subr.mxu0 0.0
        %3207 = vmatpush1.msra.mxu0 0.0
        %3208 = vmatprep.subr.mxu0 0.0
        %3209 = vmatpush1.msra.mxu0 0.0
        %3210 = vmatprep.subr.mxu0 0.0
        %3211 = vmatpush1.msra.mxu0 0.0
        %3212 = vmatprep.subr.mxu0 0.0
        %3213 = vmatpush1.msra.mxu0 0.0
        %3214 = vmatprep.subr.mxu0 0.0
        %3215 = vmatpush1.msra.mxu0 0.0
        %3216 = vmatprep.subr.mxu0 0.0
        %3217 = vmatpush1.msra.mxu0 0.0
        %3218 = vmatprep.subr.mxu0 0.0
        %3219 = vmatpush1.msra.mxu0 0.0
        %3220 = vmatprep.subr.mxu0 0.0
        %3221 = vmatpush1.msra.mxu0 0.0
        %3222 = vmatprep.subr.mxu0 0.0
        %3223 = vmatpush1.msra.mxu0 0.0
        %3224 = vmatprep.subr.mxu0 0.0
        %3225 = vmatpush1.msra.mxu0 0.0
        %3226 = vmatprep.subr.mxu0 0.0
        %3227 = vmatpush1.msra.mxu0 0.0
        %3228 = vmatprep.subr.mxu0 0.0
        %3229 = vmatpush1.msra.mxu0 0.0
        %3230 = vmatprep.subr.mxu0 0.0
        %3231 = vmatpush1.msra.mxu0 0.0
        %3232 = vmatprep.subr.mxu0 0.0
        %3233 = vmatpush1.msra.mxu0 0.0
        %3234 = vmatprep.mubr.f32.mxu0 0.0
        %3235 = vmatmul.mubr.f32.gmra.mrb[0].mxu0 %v3057
        %v3236 = vpop.f32.mrb[0].mxu0
        %v3237 = vadd.f32 %v3162, %v3236
        %v3238 = vpop.f32.mrb[0].mxu0
        %3239 = vmatprep.mubr.f32.mxu0 0.0
        %3240 = vmatmul.mubr.f32.gmra.mrb[0].mxu0 %v3058
        %v3241 = vpop.f32.mrb[0].mxu0
        %v3242 = vadd.f32 %v3167, %v3241
        %v3243 = vpop.f32.mrb[0].mxu0
        %3244 = vdwg.mxu0
        %v3245 = vld [vmem:[#allocation2 + $0xa] sm:$0xff]
        %v3246 = vld [vmem:[#allocation2 + $0x12] sm:$0xff]
        %s3247 = scalar_lea.vmem [#allocation3], 3840
        %v3248 = vld [vmem:[%s3247] sm:$0xff]
        %v3249 = vld [vmem:[%s3247 + $0x8] sm:$0xff]
        %v3250 = vld [vmem:[%s3247 + $0x10] sm:$0xff]
        %v3251 = vld [vmem:[%s3247 + $0x18] sm:$0xff]
        %v3252 = vld [vmem:[%s3247 + $0x20] sm:$0xff]
        %v3253 = vld [vmem:[%s3247 + $0x28] sm:$0xff]
        %v3254 = vld [vmem:[%s3247 + $0x30] sm:$0xff]
        %v3255 = vld [vmem:[%s3247 + $0x38] sm:$0xff]
        %v3256 = vld [vmem:[%s3247 + $0x40] sm:$0xff]
        %v3257 = vld [vmem:[%s3247 + $0x48] sm:$0xff]
        %v3258 = vld [vmem:[%s3247 + $0x50] sm:$0xff]
        %v3259 = vld [vmem:[%s3247 + $0x58] sm:$0xff]
        %v3260 = vld [vmem:[%s3247 + $0x60] sm:$0xff]
        %v3261 = vld [vmem:[%s3247 + $0x68] sm:$0xff]
        %v3262 = vld [vmem:[%s3247 + $0x70] sm:$0xff]
        %v3263 = vld [vmem:[%s3247 + $0x78] sm:$0xff]
        %3264 = vmatprep.subr.mxu0 0.0
        %3265 = vmatpush1.msra.mxu0 %v3248
        %3266 = vmatprep.subr.mxu0 0.0
        %3267 = vmatpush1.msra.mxu0 %v3249
        %3268 = vmatprep.subr.mxu0 0.0
        %3269 = vmatpush1.msra.mxu0 %v3250
        %3270 = vmatprep.subr.mxu0 0.0
        %3271 = vmatpush1.msra.mxu0 %v3251
        %3272 = vmatprep.subr.mxu0 0.0
        %3273 = vmatpush1.msra.mxu0 %v3252
        %3274 = vmatprep.subr.mxu0 0.0
        %3275 = vmatpush1.msra.mxu0 %v3253
        %3276 = vmatprep.subr.mxu0 0.0
        %3277 = vmatpush1.msra.mxu0 %v3254
        %3278 = vmatprep.subr.mxu0 0.0
        %3279 = vmatpush1.msra.mxu0 %v3255
        %3280 = vmatprep.subr.mxu0 0.0
        %3281 = vmatpush1.msra.mxu0 %v3256
        %3282 = vmatprep.subr.mxu0 0.0
        %3283 = vmatpush1.msra.mxu0 %v3257
        %3284 = vmatprep.subr.mxu0 0.0
        %3285 = vmatpush1.msra.mxu0 %v3258
        %3286 = vmatprep.subr.mxu0 0.0
        %3287 = vmatpush1.msra.mxu0 %v3259
        %3288 = vmatprep.subr.mxu0 0.0
        %3289 = vmatpush1.msra.mxu0 %v3260
        %3290 = vmatprep.subr.mxu0 0.0
        %3291 = vmatpush1.msra.mxu0 %v3261
        %3292 = vmatprep.subr.mxu0 0.0
        %3293 = vmatpush1.msra.mxu0 %v3262
        %3294 = vmatprep.subr.mxu0 0.0
        %3295 = vmatpush1.msra.mxu0 %v3263
        %3296 = vmatprep.subr.mxu0 0.0
        %3297 = vmatpush1.msra.mxu0 0.0
        %3298 = vmatprep.subr.mxu0 0.0
        %3299 = vmatpush1.msra.mxu0 0.0
        %3300 = vmatprep.subr.mxu0 0.0
        %3301 = vmatpush1.msra.mxu0 0.0
        %3302 = vmatprep.subr.mxu0 0.0
        %3303 = vmatpush1.msra.mxu0 0.0
        %3304 = vmatprep.subr.mxu0 0.0
        %3305 = vmatpush1.msra.mxu0 0.0
        %3306 = vmatprep.subr.mxu0 0.0
        %3307 = vmatpush1.msra.mxu0 0.0
        %3308 = vmatprep.subr.mxu0 0.0
        %3309 = vmatpush1.msra.mxu0 0.0
        %3310 = vmatprep.subr.mxu0 0.0
        %3311 = vmatpush1.msra.mxu0 0.0
        %3312 = vmatprep.subr.mxu0 0.0
        %3313 = vmatpush1.msra.mxu0 0.0
        %3314 = vmatprep.subr.mxu0 0.0
        %3315 = vmatpush1.msra.mxu0 0.0
        %3316 = vmatprep.subr.mxu0 0.0
        %3317 = vmatpush1.msra.mxu0 0.0
        %3318 = vmatprep.subr.mxu0 0.0
        %3319 = vmatpush1.msra.mxu0 0.0
        %3320 = vmatprep.subr.mxu0 0.0
        %3321 = vmatpush1.msra.mxu0 0.0
        %3322 = vmatprep.subr.mxu0 0.0
        %3323 = vmatpush1.msra.mxu0 0.0
        %3324 = vmatprep.subr.mxu0 0.0
        %3325 = vmatpush1.msra.mxu0 0.0
        %3326 = vmatprep.subr.mxu0 0.0
        %3327 = vmatpush1.msra.mxu0 0.0
        %3328 = vmatprep.mubr.f32.mxu0 0.0
        %3329 = vmatmul.mubr.f32.gmra.mrb[0].mxu0 %v3245
        %v3330 = vpop.f32.mrb[0].mxu0
        %v3331 = vadd.f32 0.0, %v3330
        %v3332 = vpop.f32.mrb[0].mxu0
        %3333 = vmatprep.mubr.f32.mxu0 0.0
        %3334 = vmatmul.mubr.f32.gmra.mrb[0].mxu0 %v3246
        %v3335 = vpop.f32.mrb[0].mxu0
        %v3336 = vadd.f32 0.0, %v3335
        %v3337 = vpop.f32.mrb[0].mxu0
        %3338 = vdwg.mxu0
        %v3339 = vadd.f32 %v3237, %v3331
        %v3340 = vadd.f32 %v3242, %v3336
        %3341 = vst [vmem:[#allocation2 + $0x8] sm:$0xff] %v3339
        %3342 = vst [vmem:[#allocation2 + $0x10] sm:$0xff] %v3340
        %v3343 = vld [vmem:[#allocation2 + $0x4] sm:$0xff]
        %v3344 = vld [vmem:[#allocation2 + $0xc] sm:$0xff]
        %s3345 = scalar_lea.vmem [#allocation3], 3968
        %v3346 = vld [vmem:[%s3345] sm:$0xff]
        %v3347 = vld [vmem:[%s3345 + $0x8] sm:$0xff]
        %v3348 = vld [vmem:[%s3345 + $0x10] sm:$0xff]
        %v3349 = vld [vmem:[%s3345 + $0x18] sm:$0xff]
        %v3350 = vld [vmem:[%s3345 + $0x20] sm:$0xff]
        %v3351 = vld [vmem:[%s3345 + $0x28] sm:$0xff]
        %v3352 = vld [vmem:[%s3345 + $0x30] sm:$0xff]
        %v3353 = vld [vmem:[%s3345 + $0x38] sm:$0xff]
        %v3354 = vld [vmem:[%s3345 + $0x40] sm:$0xff]
        %v3355 = vld [vmem:[%s3345 + $0x48] sm:$0xff]
        %v3356 = vld [vmem:[%s3345 + $0x50] sm:$0xff]
        %v3357 = vld [vmem:[%s3345 + $0x58] sm:$0xff]
        %v3358 = vld [vmem:[%s3345 + $0x60] sm:$0xff]
        %v3359 = vld [vmem:[%s3345 + $0x68] sm:$0xff]
        %v3360 = vld [vmem:[%s3345 + $0x70] sm:$0xff]
        %v3361 = vld [vmem:[%s3345 + $0x78] sm:$0xff]
        %v3362 = vld [vmem:[#allocation2 + $0x8] sm:$0xff]
        %v3363 = vld [vmem:[#allocation2 + $0x10] sm:$0xff]
        %s3364 = scalar_lea.vmem [#allocation3], 4096
        %v3365 = vld [vmem:[%s3364] sm:$0xff]
        %v3366 = vld [vmem:[%s3364 + $0x8] sm:$0xff]
        %v3367 = vld [vmem:[%s3364 + $0x10] sm:$0xff]
        %v3368 = vld [vmem:[%s3364 + $0x18] sm:$0xff]
        %v3369 = vld [vmem:[%s3364 + $0x20] sm:$0xff]
        %v3370 = vld [vmem:[%s3364 + $0x28] sm:$0xff]
        %v3371 = vld [vmem:[%s3364 + $0x30] sm:$0xff]
        %v3372 = vld [vmem:[%s3364 + $0x38] sm:$0xff]
        %v3373 = vld [vmem:[%s3364 + $0x40] sm:$0xff]
        %v3374 = vld [vmem:[%s3364 + $0x48] sm:$0xff]
        %v3375 = vld [vmem:[%s3364 + $0x50] sm:$0xff]
        %v3376 = vld [vmem:[%s3364 + $0x58] sm:$0xff]
        %v3377 = vld [vmem:[%s3364 + $0x60] sm:$0xff]
        %v3378 = vld [vmem:[%s3364 + $0x68] sm:$0xff]
        %v3379 = vld [vmem:[%s3364 + $0x70] sm:$0xff]
        %v3380 = vld [vmem:[%s3364 + $0x78] sm:$0xff]
        %3381 = vmatprep.subr.mxu0 0.0
        %3382 = vmatpush1.msra.mxu0 %v3365
        %3383 = vmatprep.subr.mxu0 0.0
        %3384 = vmatpush1.msra.mxu0 %v3366
        %3385 = vmatprep.subr.mxu0 0.0
        %3386 = vmatpush1.msra.mxu0 %v3367
        %3387 = vmatprep.subr.mxu0 0.0
        %3388 = vmatpush1.msra.mxu0 %v3368
        %3389 = vmatprep.subr.mxu0 0.0
        %3390 = vmatpush1.msra.mxu0 %v3369
        %3391 = vmatprep.subr.mxu0 0.0
        %3392 = vmatpush1.msra.mxu0 %v3370
        %3393 = vmatprep.subr.mxu0 0.0
        %3394 = vmatpush1.msra.mxu0 %v3371
        %3395 = vmatprep.subr.mxu0 0.0
        %3396 = vmatpush1.msra.mxu0 %v3372
        %3397 = vmatprep.subr.mxu0 0.0
        %3398 = vmatpush1.msra.mxu0 %v3373
        %3399 = vmatprep.subr.mxu0 0.0
        %3400 = vmatpush1.msra.mxu0 %v3374
        %3401 = vmatprep.subr.mxu0 0.0
        %3402 = vmatpush1.msra.mxu0 %v3375
        %3403 = vmatprep.subr.mxu0 0.0
        %3404 = vmatpush1.msra.mxu0 %v3376
        %3405 = vmatprep.subr.mxu0 0.0
        %3406 = vmatpush1.msra.mxu0 %v3377
        %3407 = vmatprep.subr.mxu0 0.0
        %3408 = vmatpush1.msra.mxu0 %v3378
        %3409 = vmatprep.subr.mxu0 0.0
        %3410 = vmatpush1.msra.mxu0 %v3379
        %3411 = vmatprep.subr.mxu0 0.0
        %3412 = vmatpush1.msra.mxu0 %v3380
        %3413 = vmatprep.subr.mxu0 0.0
        %3414 = vmatpush1.msra.mxu0 0.0
        %3415 = vmatprep.subr.mxu0 0.0
        %3416 = vmatpush1.msra.mxu0 0.0
        %3417 = vmatprep.subr.mxu0 0.0
        %3418 = vmatpush1.msra.mxu0 0.0
        %3419 = vmatprep.subr.mxu0 0.0
        %3420 = vmatpush1.msra.mxu0 0.0
        %3421 = vmatprep.subr.mxu0 0.0
        %3422 = vmatpush1.msra.mxu0 0.0
        %3423 = vmatprep.subr.mxu0 0.0
        %3424 = vmatpush1.msra.mxu0 0.0
        %3425 = vmatprep.subr.mxu0 0.0
        %3426 = vmatpush1.msra.mxu0 0.0
        %3427 = vmatprep.subr.mxu0 0.0
        %3428 = vmatpush1.msra.mxu0 0.0
        %3429 = vmatprep.subr.mxu0 0.0
        %3430 = vmatpush1.msra.mxu0 0.0
        %3431 = vmatprep.subr.mxu0 0.0
        %3432 = vmatpush1.msra.mxu0 0.0
        %3433 = vmatprep.subr.mxu0 0.0
        %3434 = vmatpush1.msra.mxu0 0.0
        %3435 = vmatprep.subr.mxu0 0.0
        %3436 = vmatpush1.msra.mxu0 0.0
        %3437 = vmatprep.subr.mxu0 0.0
        %3438 = vmatpush1.msra.mxu0 0.0
        %3439 = vmatprep.subr.mxu0 0.0
        %3440 = vmatpush1.msra.mxu0 0.0
        %3441 = vmatprep.subr.mxu0 0.0
        %3442 = vmatpush1.msra.mxu0 0.0
        %3443 = vmatprep.subr.mxu0 0.0
        %3444 = vmatpush1.msra.mxu0 0.0
        %3445 = vmatprep.mubr.f32.mxu0 0.0
        %3446 = vmatmul.mubr.f32.gmra.mrb[0].mxu0 %v3362
        %v3447 = vpop.f32.mrb[0].mxu0
        %v3448 = vadd.f32 0.0, %v3447
        %v3449 = vpop.f32.mrb[0].mxu0
        %3450 = vmatprep.mubr.f32.mxu0 0.0
        %3451 = vmatmul.mubr.f32.gmra.mrb[0].mxu0 %v3363
        %v3452 = vpop.f32.mrb[0].mxu0
        %v3453 = vadd.f32 0.0, %v3452
        %v3454 = vpop.f32.mrb[0].mxu0
        %3455 = vdwg.mxu0
        %3456 = vmatprep.subr.mxu0 0.0
        %3457 = vmatpush1.msra.mxu0 %v3346
        %3458 = vmatprep.subr.mxu0 0.0
        %3459 = vmatpush1.msra.mxu0 %v3347
        %3460 = vmatprep.subr.mxu0 0.0
        %3461 = vmatpush1.msra.mxu0 %v3348
        %3462 = vmatprep.subr.mxu0 0.0
        %3463 = vmatpush1.msra.mxu0 %v3349
        %3464 = vmatprep.subr.mxu0 0.0
        %3465 = vmatpush1.msra.mxu0 %v3350
        %3466 = vmatprep.subr.mxu0 0.0
        %3467 = vmatpush1.msra.mxu0 %v3351
        %3468 = vmatprep.subr.mxu0 0.0
        %3469 = vmatpush1.msra.mxu0 %v3352
        %3470 = vmatprep.subr.mxu0 0.0
        %3471 = vmatpush1.msra.mxu0 %v3353
        %3472 = vmatprep.subr.mxu0 0.0
        %3473 = vmatpush1.msra.mxu0 %v3354
        %3474 = vmatprep.subr.mxu0 0.0
        %3475 = vmatpush1.msra.mxu0 %v3355
        %3476 = vmatprep.subr.mxu0 0.0
        %3477 = vmatpush1.msra.mxu0 %v3356
        %3478 = vmatprep.subr.mxu0 0.0
        %3479 = vmatpush1.msra.mxu0 %v3357
        %3480 = vmatprep.subr.mxu0 0.0
        %3481 = vmatpush1.msra.mxu0 %v3358
        %3482 = vmatprep.subr.mxu0 0.0
        %3483 = vmatpush1.msra.mxu0 %v3359
        %3484 = vmatprep.subr.mxu0 0.0
        %3485 = vmatpush1.msra.mxu0 %v3360
        %3486 = vmatprep.subr.mxu0 0.0
        %3487 = vmatpush1.msra.mxu0 %v3361
        %3488 = vmatprep.subr.mxu0 0.0
        %3489 = vmatpush1.msra.mxu0 0.0
        %3490 = vmatprep.subr.mxu0 0.0
        %3491 = vmatpush1.msra.mxu0 0.0
        %3492 = vmatprep.subr.mxu0 0.0
        %3493 = vmatpush1.msra.mxu0 0.0
        %3494 = vmatprep.subr.mxu0 0.0
        %3495 = vmatpush1.msra.mxu0 0.0
        %3496 = vmatprep.subr.mxu0 0.0
        %3497 = vmatpush1.msra.mxu0 0.0
        %3498 = vmatprep.subr.mxu0 0.0
        %3499 = vmatpush1.msra.mxu0 0.0
        %3500 = vmatprep.subr.mxu0 0.0
        %3501 = vmatpush1.msra.mxu0 0.0
        %3502 = vmatprep.subr.mxu0 0.0
        %3503 = vmatpush1.msra.mxu0 0.0
        %3504 = vmatprep.subr.mxu0 0.0
        %3505 = vmatpush1.msra.mxu0 0.0
        %3506 = vmatprep.subr.mxu0 0.0
        %3507 = vmatpush1.msra.mxu0 0.0
        %3508 = vmatprep.subr.mxu0 0.0
        %3509 = vmatpush1.msra.mxu0 0.0
        %3510 = vmatprep.subr.mxu0 0.0
        %3511 = vmatpush1.msra.mxu0 0.0
        %3512 = vmatprep.subr.mxu0 0.0
        %3513 = vmatpush1.msra.mxu0 0.0
        %3514 = vmatprep.subr.mxu0 0.0
        %3515 = vmatpush1.msra.mxu0 0.0
        %3516 = vmatprep.subr.mxu0 0.0
        %3517 = vmatpush1.msra.mxu0 0.0
        %3518 = vmatprep.subr.mxu0 0.0
        %3519 = vmatpush1.msra.mxu0 0.0
        %3520 = vmatprep.mubr.f32.mxu0 0.0
        %3521 = vmatmul.mubr.f32.gmra.mrb[0].mxu0 %v3343
        %v3522 = vpop.f32.mrb[0].mxu0
        %v3523 = vadd.f32 %v3448, %v3522
        %v3524 = vpop.f32.mrb[0].mxu0
        %3525 = vmatprep.mubr.f32.mxu0 0.0
        %3526 = vmatmul.mubr.f32.gmra.mrb[0].mxu0 %v3344
        %v3527 = vpop.f32.mrb[0].mxu0
        %v3528 = vadd.f32 %v3453, %v3527
        %v3529 = vpop.f32.mrb[0].mxu0
        %3530 = vdwg.mxu0
        %v3531 = vld [vmem:[#allocation2 + $0xc] sm:$0xff]
        %v3532 = vld [vmem:[#allocation2 + $0x14] sm:$0xff]
        %s3533 = scalar_lea.vmem [#allocation3], 4224
        %v3534 = vld [vmem:[%s3533] sm:$0xff]
        %v3535 = vld [vmem:[%s3533 + $0x8] sm:$0xff]
        %v3536 = vld [vmem:[%s3533 + $0x10] sm:$0xff]
        %v3537 = vld [vmem:[%s3533 + $0x18] sm:$0xff]
        %v3538 = vld [vmem:[%s3533 + $0x20] sm:$0xff]
        %v3539 = vld [vmem:[%s3533 + $0x28] sm:$0xff]
        %v3540 = vld [vmem:[%s3533 + $0x30] sm:$0xff]
        %v3541 = vld [vmem:[%s3533 + $0x38] sm:$0xff]
        %v3542 = vld [vmem:[%s3533 + $0x40] sm:$0xff]
        %v3543 = vld [vmem:[%s3533 + $0x48] sm:$0xff]
        %v3544 = vld [vmem:[%s3533 + $0x50] sm:$0xff]
        %v3545 = vld [vmem:[%s3533 + $0x58] sm:$0xff]
        %v3546 = vld [vmem:[%s3533 + $0x60] sm:$0xff]
        %v3547 = vld [vmem:[%s3533 + $0x68] sm:$0xff]
        %v3548 = vld [vmem:[%s3533 + $0x70] sm:$0xff]
        %v3549 = vld [vmem:[%s3533 + $0x78] sm:$0xff]
        %3550 = vmatprep.subr.mxu0 0.0
        %3551 = vmatpush1.msra.mxu0 %v3534
        %3552 = vmatprep.subr.mxu0 0.0
        %3553 = vmatpush1.msra.mxu0 %v3535
        %3554 = vmatprep.subr.mxu0 0.0
        %3555 = vmatpush1.msra.mxu0 %v3536
        %3556 = vmatprep.subr.mxu0 0.0
        %3557 = vmatpush1.msra.mxu0 %v3537
        %3558 = vmatprep.subr.mxu0 0.0
        %3559 = vmatpush1.msra.mxu0 %v3538
        %3560 = vmatprep.subr.mxu0 0.0
        %3561 = vmatpush1.msra.mxu0 %v3539
        %3562 = vmatprep.subr.mxu0 0.0
        %3563 = vmatpush1.msra.mxu0 %v3540
        %3564 = vmatprep.subr.mxu0 0.0
        %3565 = vmatpush1.msra.mxu0 %v3541
        %3566 = vmatprep.subr.mxu0 0.0
        %3567 = vmatpush1.msra.mxu0 %v3542
        %3568 = vmatprep.subr.mxu0 0.0
        %3569 = vmatpush1.msra.mxu0 %v3543
        %3570 = vmatprep.subr.mxu0 0.0
        %3571 = vmatpush1.msra.mxu0 %v3544
        %3572 = vmatprep.subr.mxu0 0.0
        %3573 = vmatpush1.msra.mxu0 %v3545
        %3574 = vmatprep.subr.mxu0 0.0
        %3575 = vmatpush1.msra.mxu0 %v3546
        %3576 = vmatprep.subr.mxu0 0.0
        %3577 = vmatpush1.msra.mxu0 %v3547
        %3578 = vmatprep.subr.mxu0 0.0
        %3579 = vmatpush1.msra.mxu0 %v3548
        %3580 = vmatprep.subr.mxu0 0.0
        %3581 = vmatpush1.msra.mxu0 %v3549
        %3582 = vmatprep.subr.mxu0 0.0
        %3583 = vmatpush1.msra.mxu0 0.0
        %3584 = vmatprep.subr.mxu0 0.0
        %3585 = vmatpush1.msra.mxu0 0.0
        %3586 = vmatprep.subr.mxu0 0.0
        %3587 = vmatpush1.msra.mxu0 0.0
        %3588 = vmatprep.subr.mxu0 0.0
        %3589 = vmatpush1.msra.mxu0 0.0
        %3590 = vmatprep.subr.mxu0 0.0
        %3591 = vmatpush1.msra.mxu0 0.0
        %3592 = vmatprep.subr.mxu0 0.0
        %3593 = vmatpush1.msra.mxu0 0.0
        %3594 = vmatprep.subr.mxu0 0.0
        %3595 = vmatpush1.msra.mxu0 0.0
        %3596 = vmatprep.subr.mxu0 0.0
        %3597 = vmatpush1.msra.mxu0 0.0
        %3598 = vmatprep.subr.mxu0 0.0
        %3599 = vmatpush1.msra.mxu0 0.0
        %3600 = vmatprep.subr.mxu0 0.0
        %3601 = vmatpush1.msra.mxu0 0.0
        %3602 = vmatprep.subr.mxu0 0.0
        %3603 = vmatpush1.msra.mxu0 0.0
        %3604 = vmatprep.subr.mxu0 0.0
        %3605 = vmatpush1.msra.mxu0 0.0
        %3606 = vmatprep.subr.mxu0 0.0
        %3607 = vmatpush1.msra.mxu0 0.0
        %3608 = vmatprep.subr.mxu0 0.0
        %3609 = vmatpush1.msra.mxu0 0.0
        %3610 = vmatprep.subr.mxu0 0.0
        %3611 = vmatpush1.msra.mxu0 0.0
        %3612 = vmatprep.subr.mxu0 0.0
        %3613 = vmatpush1.msra.mxu0 0.0
        %3614 = vmatprep.mubr.f32.mxu0 0.0
        %3615 = vmatmul.mubr.f32.gmra.mrb[0].mxu0 %v3531
        %v3616 = vpop.f32.mrb[0].mxu0
        %v3617 = vadd.f32 0.0, %v3616
        %v3618 = vpop.f32.mrb[0].mxu0
        %3619 = vmatprep.mubr.f32.mxu0 0.0
        %3620 = vmatmul.mubr.f32.gmra.mrb[0].mxu0 %v3532
        %v3621 = vpop.f32.mrb[0].mxu0
        %v3622 = vadd.f32 0.0, %v3621
        %v3623 = vpop.f32.mrb[0].mxu0
        %3624 = vdwg.mxu0
        %v3625 = vadd.f32 %v3523, %v3617
        %v3626 = vadd.f32 %v3528, %v3622
        %s3627 = scalar_lea.vmem [#allocation5], 256
        %v3628 = vld [vmem:[%s3627] sm:$0xff]
        %v3629 = vld [vmem:[%s3627 + $0x8] sm:$0xff]
        %v3630 = vld [vmem:[%s3627 + $0x10] sm:$0xff]
        %v3631 = vld [vmem:[%s3627 + $0x18] sm:$0xff]
        %v3632 = vld [vmem:[%s3627 + $0x20] sm:$0xff]
        %v3633 = vld [vmem:[%s3627 + $0x28] sm:$0xff]
        %v3634 = vld [vmem:[%s3627 + $0x30] sm:$0xff]
        %v3635 = vld [vmem:[%s3627 + $0x38] sm:$0xff]
        %v3636 = vld [vmem:[%s3627 + $0x40] sm:$0xff]
        %v3637 = vld [vmem:[%s3627 + $0x48] sm:$0xff]
        %v3638 = vld [vmem:[%s3627 + $0x50] sm:$0xff]
        %v3639 = vld [vmem:[%s3627 + $0x58] sm:$0xff]
        %v3640 = vld [vmem:[%s3627 + $0x60] sm:$0xff]
        %v3641 = vld [vmem:[%s3627 + $0x68] sm:$0xff]
        %v3642 = vld [vmem:[%s3627 + $0x70] sm:$0xff]
        %v3643 = vld [vmem:[%s3627 + $0x78] sm:$0xff]
        %3644 = vmatprep.subr.mxu0 0.0
        %3645 = vmatpush1.msra.mxu0 %v3628
        %3646 = vmatprep.subr.mxu0 0.0
        %3647 = vmatpush1.msra.mxu0 %v3629
        %3648 = vmatprep.subr.mxu0 0.0
        %3649 = vmatpush1.msra.mxu0 %v3630
        %3650 = vmatprep.subr.mxu0 0.0
        %3651 = vmatpush1.msra.mxu0 %v3631
        %3652 = vmatprep.subr.mxu0 0.0
        %3653 = vmatpush1.msra.mxu0 %v3632
        %3654 = vmatprep.subr.mxu0 0.0
        %3655 = vmatpush1.msra.mxu0 %v3633
        %3656 = vmatprep.subr.mxu0 0.0
        %3657 = vmatpush1.msra.mxu0 %v3634
        %3658 = vmatprep.subr.mxu0 0.0
        %3659 = vmatpush1.msra.mxu0 %v3635
        %3660 = vmatprep.subr.mxu0 0.0
        %3661 = vmatpush1.msra.mxu0 %v3636
        %3662 = vmatprep.subr.mxu0 0.0
        %3663 = vmatpush1.msra.mxu0 %v3637
        %3664 = vmatprep.subr.mxu0 0.0
        %3665 = vmatpush1.msra.mxu0 %v3638
        %3666 = vmatprep.subr.mxu0 0.0
        %3667 = vmatpush1.msra.mxu0 %v3639
        %3668 = vmatprep.subr.mxu0 0.0
        %3669 = vmatpush1.msra.mxu0 %v3640
        %3670 = vmatprep.subr.mxu0 0.0
        %3671 = vmatpush1.msra.mxu0 %v3641
        %3672 = vmatprep.subr.mxu0 0.0
        %3673 = vmatpush1.msra.mxu0 %v3642
        %3674 = vmatprep.subr.mxu0 0.0
        %3675 = vmatpush1.msra.mxu0 %v3643
        %3676 = vmatprep.subr.mxu0 0.0
        %3677 = vmatpush1.msra.mxu0 0.0
        %3678 = vmatprep.subr.mxu0 0.0
        %3679 = vmatpush1.msra.mxu0 0.0
        %3680 = vmatprep.subr.mxu0 0.0
        %3681 = vmatpush1.msra.mxu0 0.0
        %3682 = vmatprep.subr.mxu0 0.0
        %3683 = vmatpush1.msra.mxu0 0.0
        %3684 = vmatprep.subr.mxu0 0.0
        %3685 = vmatpush1.msra.mxu0 0.0
        %3686 = vmatprep.subr.mxu0 0.0
        %3687 = vmatpush1.msra.mxu0 0.0
        %3688 = vmatprep.subr.mxu0 0.0
        %3689 = vmatpush1.msra.mxu0 0.0
        %3690 = vmatprep.subr.mxu0 0.0
        %3691 = vmatpush1.msra.mxu0 0.0
        %3692 = vmatprep.subr.mxu0 0.0
        %3693 = vmatpush1.msra.mxu0 0.0
        %3694 = vmatprep.subr.mxu0 0.0
        %3695 = vmatpush1.msra.mxu0 0.0
        %3696 = vmatprep.subr.mxu0 0.0
        %3697 = vmatpush1.msra.mxu0 0.0
        %3698 = vmatprep.subr.mxu0 0.0
        %3699 = vmatpush1.msra.mxu0 0.0
        %3700 = vmatprep.subr.mxu0 0.0
        %3701 = vmatpush1.msra.mxu0 0.0
        %3702 = vmatprep.subr.mxu0 0.0
        %3703 = vmatpush1.msra.mxu0 0.0
        %3704 = vmatprep.subr.mxu0 0.0
        %3705 = vmatpush1.msra.mxu0 0.0
        %3706 = vmatprep.subr.mxu0 0.0
        %3707 = vmatpush1.msra.mxu0 0.0
        %3708 = vmatprep.mubr.f32.mxu0 0.0
        %3709 = vmatmul.mubr.f32.gmra.mrb[0].mxu0 %v3625
        %v3710 = vpop.f32.mrb[0].mxu0
        %v3711 = vadd.f32 0.0, %v3710
        %v3712 = vpop.f32.mrb[0].mxu0
        %3713 = vmatprep.mubr.f32.mxu0 0.0
        %3714 = vmatmul.mubr.f32.gmra.mrb[0].mxu0 %v3626
        %v3715 = vpop.f32.mrb[0].mxu0
        %v3716 = vadd.f32 0.0, %v3715
        %v3717 = vpop.f32.mrb[0].mxu0
        %3718 = vdwg.mxu0
        %v3719 = vadd.f32 %v2761, %v3711
        %v3720 = vadd.f32 %v2766, %v3716
        %3721 = vst [vmem:[#allocation2 + $0x8] sm:$0xff] %v203
        %3722 = vst [vmem:[#allocation2 + $0x10] sm:$0xff] %v204
        %v3723 = vld [vmem:[#allocation2 + $0x7] sm:$0xff]
        %v3724 = vld [vmem:[#allocation2 + $0xf] sm:$0xff]
        %s3725 = scalar_lea.vmem [#allocation3], 4352
        %v3726 = vld [vmem:[%s3725] sm:$0xff]
        %v3727 = vld [vmem:[%s3725 + $0x8] sm:$0xff]
        %v3728 = vld [vmem:[%s3725 + $0x10] sm:$0xff]
        %v3729 = vld [vmem:[%s3725 + $0x18] sm:$0xff]
        %v3730 = vld [vmem:[%s3725 + $0x20] sm:$0xff]
        %v3731 = vld [vmem:[%s3725 + $0x28] sm:$0xff]
        %v3732 = vld [vmem:[%s3725 + $0x30] sm:$0xff]
        %v3733 = vld [vmem:[%s3725 + $0x38] sm:$0xff]
        %v3734 = vld [vmem:[%s3725 + $0x40] sm:$0xff]
        %v3735 = vld [vmem:[%s3725 + $0x48] sm:$0xff]
        %v3736 = vld [vmem:[%s3725 + $0x50] sm:$0xff]
        %v3737 = vld [vmem:[%s3725 + $0x58] sm:$0xff]
        %v3738 = vld [vmem:[%s3725 + $0x60] sm:$0xff]
        %v3739 = vld [vmem:[%s3725 + $0x68] sm:$0xff]
        %v3740 = vld [vmem:[%s3725 + $0x70] sm:$0xff]
        %v3741 = vld [vmem:[%s3725 + $0x78] sm:$0xff]
        %v3742 = vld [vmem:[#allocation2 + $0x8] sm:$0xff]
        %v3743 = vld [vmem:[#allocation2 + $0x10] sm:$0xff]
        %s3744 = scalar_lea.vmem [#allocation3], 4480
        %v3745 = vld [vmem:[%s3744] sm:$0xff]
        %v3746 = vld [vmem:[%s3744 + $0x8] sm:$0xff]
        %v3747 = vld [vmem:[%s3744 + $0x10] sm:$0xff]
        %v3748 = vld [vmem:[%s3744 + $0x18] sm:$0xff]
        %v3749 = vld [vmem:[%s3744 + $0x20] sm:$0xff]
        %v3750 = vld [vmem:[%s3744 + $0x28] sm:$0xff]
        %v3751 = vld [vmem:[%s3744 + $0x30] sm:$0xff]
        %v3752 = vld [vmem:[%s3744 + $0x38] sm:$0xff]
        %v3753 = vld [vmem:[%s3744 + $0x40] sm:$0xff]
        %v3754 = vld [vmem:[%s3744 + $0x48] sm:$0xff]
        %v3755 = vld [vmem:[%s3744 + $0x50] sm:$0xff]
        %v3756 = vld [vmem:[%s3744 + $0x58] sm:$0xff]
        %v3757 = vld [vmem:[%s3744 + $0x60] sm:$0xff]
        %v3758 = vld [vmem:[%s3744 + $0x68] sm:$0xff]
        %v3759 = vld [vmem:[%s3744 + $0x70] sm:$0xff]
        %v3760 = vld [vmem:[%s3744 + $0x78] sm:$0xff]
        %3761 = vmatprep.subr.mxu0 0.0
        %3762 = vmatpush1.msra.mxu0 %v3745
        %3763 = vmatprep.subr.mxu0 0.0
        %3764 = vmatpush1.msra.mxu0 %v3746
        %3765 = vmatprep.subr.mxu0 0.0
        %3766 = vmatpush1.msra.mxu0 %v3747
        %3767 = vmatprep.subr.mxu0 0.0
        %3768 = vmatpush1.msra.mxu0 %v3748
        %3769 = vmatprep.subr.mxu0 0.0
        %3770 = vmatpush1.msra.mxu0 %v3749
        %3771 = vmatprep.subr.mxu0 0.0
        %3772 = vmatpush1.msra.mxu0 %v3750
        %3773 = vmatprep.subr.mxu0 0.0
        %3774 = vmatpush1.msra.mxu0 %v3751
        %3775 = vmatprep.subr.mxu0 0.0
        %3776 = vmatpush1.msra.mxu0 %v3752
        %3777 = vmatprep.subr.mxu0 0.0
        %3778 = vmatpush1.msra.mxu0 %v3753
        %3779 = vmatprep.subr.mxu0 0.0
        %3780 = vmatpush1.msra.mxu0 %v3754
        %3781 = vmatprep.subr.mxu0 0.0
        %3782 = vmatpush1.msra.mxu0 %v3755
        %3783 = vmatprep.subr.mxu0 0.0
        %3784 = vmatpush1.msra.mxu0 %v3756
        %3785 = vmatprep.subr.mxu0 0.0
        %3786 = vmatpush1.msra.mxu0 %v3757
        %3787 = vmatprep.subr.mxu0 0.0
        %3788 = vmatpush1.msra.mxu0 %v3758
        %3789 = vmatprep.subr.mxu0 0.0
        %3790 = vmatpush1.msra.mxu0 %v3759
        %3791 = vmatprep.subr.mxu0 0.0
        %3792 = vmatpush1.msra.mxu0 %v3760
        %3793 = vmatprep.subr.mxu0 0.0
        %3794 = vmatpush1.msra.mxu0 0.0
        %3795 = vmatprep.subr.mxu0 0.0
        %3796 = vmatpush1.msra.mxu0 0.0
        %3797 = vmatprep.subr.mxu0 0.0
        %3798 = vmatpush1.msra.mxu0 0.0
        %3799 = vmatprep.subr.mxu0 0.0
        %3800 = vmatpush1.msra.mxu0 0.0
        %3801 = vmatprep.subr.mxu0 0.0
        %3802 = vmatpush1.msra.mxu0 0.0
        %3803 = vmatprep.subr.mxu0 0.0
        %3804 = vmatpush1.msra.mxu0 0.0
        %3805 = vmatprep.subr.mxu0 0.0
        %3806 = vmatpush1.msra.mxu0 0.0
        %3807 = vmatprep.subr.mxu0 0.0
        %3808 = vmatpush1.msra.mxu0 0.0
        %3809 = vmatprep.subr.mxu0 0.0
        %3810 = vmatpush1.msra.mxu0 0.0
        %3811 = vmatprep.subr.mxu0 0.0
        %3812 = vmatpush1.msra.mxu0 0.0
        %3813 = vmatprep.subr.mxu0 0.0
        %3814 = vmatpush1.msra.mxu0 0.0
        %3815 = vmatprep.subr.mxu0 0.0
        %3816 = vmatpush1.msra.mxu0 0.0
        %3817 = vmatprep.subr.mxu0 0.0
        %3818 = vmatpush1.msra.mxu0 0.0
        %3819 = vmatprep.subr.mxu0 0.0
        %3820 = vmatpush1.msra.mxu0 0.0
        %3821 = vmatprep.subr.mxu0 0.0
        %3822 = vmatpush1.msra.mxu0 0.0
        %3823 = vmatprep.subr.mxu0 0.0
        %3824 = vmatpush1.msra.mxu0 0.0
        %3825 = vmatprep.mubr.f32.mxu0 0.0
        %3826 = vmatmul.mubr.f32.gmra.mrb[0].mxu0 %v3742
        %v3827 = vpop.f32.mrb[0].mxu0
        %v3828 = vadd.f32 0.0, %v3827
        %v3829 = vpop.f32.mrb[0].mxu0
        %3830 = vmatprep.mubr.f32.mxu0 0.0
        %3831 = vmatmul.mubr.f32.gmra.mrb[0].mxu0 %v3743
        %v3832 = vpop.f32.mrb[0].mxu0
        %v3833 = vadd.f32 0.0, %v3832
        %v3834 = vpop.f32.mrb[0].mxu0
        %3835 = vdwg.mxu0
        %3836 = vmatprep.subr.mxu0 0.0
        %3837 = vmatpush1.msra.mxu0 %v3726
        %3838 = vmatprep.subr.mxu0 0.0
        %3839 = vmatpush1.msra.mxu0 %v3727
        %3840 = vmatprep.subr.mxu0 0.0
        %3841 = vmatpush1.msra.mxu0 %v3728
        %3842 = vmatprep.subr.mxu0 0.0
        %3843 = vmatpush1.msra.mxu0 %v3729
        %3844 = vmatprep.subr.mxu0 0.0
        %3845 = vmatpush1.msra.mxu0 %v3730
        %3846 = vmatprep.subr.mxu0 0.0
        %3847 = vmatpush1.msra.mxu0 %v3731
        %3848 = vmatprep.subr.mxu0 0.0
        %3849 = vmatpush1.msra.mxu0 %v3732
        %3850 = vmatprep.subr.mxu0 0.0
        %3851 = vmatpush1.msra.mxu0 %v3733
        %3852 = vmatprep.subr.mxu0 0.0
        %3853 = vmatpush1.msra.mxu0 %v3734
        %3854 = vmatprep.subr.mxu0 0.0
        %3855 = vmatpush1.msra.mxu0 %v3735
        %3856 = vmatprep.subr.mxu0 0.0
        %3857 = vmatpush1.msra.mxu0 %v3736
        %3858 = vmatprep.subr.mxu0 0.0
        %3859 = vmatpush1.msra.mxu0 %v3737
        %3860 = vmatprep.subr.mxu0 0.0
        %3861 = vmatpush1.msra.mxu0 %v3738
        %3862 = vmatprep.subr.mxu0 0.0
        %3863 = vmatpush1.msra.mxu0 %v3739
        %3864 = vmatprep.subr.mxu0 0.0
        %3865 = vmatpush1.msra.mxu0 %v3740
        %3866 = vmatprep.subr.mxu0 0.0
        %3867 = vmatpush1.msra.mxu0 %v3741
        %3868 = vmatprep.subr.mxu0 0.0
        %3869 = vmatpush1.msra.mxu0 0.0
        %3870 = vmatprep.subr.mxu0 0.0
        %3871 = vmatpush1.msra.mxu0 0.0
        %3872 = vmatprep.subr.mxu0 0.0
        %3873 = vmatpush1.msra.mxu0 0.0
        %3874 = vmatprep.subr.mxu0 0.0
        %3875 = vmatpush1.msra.mxu0 0.0
        %3876 = vmatprep.subr.mxu0 0.0
        %3877 = vmatpush1.msra.mxu0 0.0
        %3878 = vmatprep.subr.mxu0 0.0
        %3879 = vmatpush1.msra.mxu0 0.0
        %3880 = vmatprep.subr.mxu0 0.0
        %3881 = vmatpush1.msra.mxu0 0.0
        %3882 = vmatprep.subr.mxu0 0.0
        %3883 = vmatpush1.msra.mxu0 0.0
        %3884 = vmatprep.subr.mxu0 0.0
        %3885 = vmatpush1.msra.mxu0 0.0
        %3886 = vmatprep.subr.mxu0 0.0
        %3887 = vmatpush1.msra.mxu0 0.0
        %3888 = vmatprep.subr.mxu0 0.0
        %3889 = vmatpush1.msra.mxu0 0.0
        %3890 = vmatprep.subr.mxu0 0.0
        %3891 = vmatpush1.msra.mxu0 0.0
        %3892 = vmatprep.subr.mxu0 0.0
        %3893 = vmatpush1.msra.mxu0 0.0
        %3894 = vmatprep.subr.mxu0 0.0
        %3895 = vmatpush1.msra.mxu0 0.0
        %3896 = vmatprep.subr.mxu0 0.0
        %3897 = vmatpush1.msra.mxu0 0.0
        %3898 = vmatprep.subr.mxu0 0.0
        %3899 = vmatpush1.msra.mxu0 0.0
        %3900 = vmatprep.mubr.f32.mxu0 0.0
        %3901 = vmatmul.mubr.f32.gmra.mrb[0].mxu0 %v3723
        %v3902 = vpop.f32.mrb[0].mxu0
        %v3903 = vadd.f32 %v3828, %v3902
        %v3904 = vpop.f32.mrb[0].mxu0
        %3905 = vmatprep.mubr.f32.mxu0 0.0
        %3906 = vmatmul.mubr.f32.gmra.mrb[0].mxu0 %v3724
        %v3907 = vpop.f32.mrb[0].mxu0
        %v3908 = vadd.f32 %v3833, %v3907
        %v3909 = vpop.f32.mrb[0].mxu0
        %3910 = vdwg.mxu0
        %v3911 = vld [vmem:[#allocation2 + $0x9] sm:$0xff]
        %v3912 = vld [vmem:[#allocation2 + $0x11] sm:$0xff]
        %s3913 = scalar_lea.vmem [#allocation3], 4608
        %v3914 = vld [vmem:[%s3913] sm:$0xff]
        %v3915 = vld [vmem:[%s3913 + $0x8] sm:$0xff]
        %v3916 = vld [vmem:[%s3913 + $0x10] sm:$0xff]
        %v3917 = vld [vmem:[%s3913 + $0x18] sm:$0xff]
        %v3918 = vld [vmem:[%s3913 + $0x20] sm:$0xff]
        %v3919 = vld [vmem:[%s3913 + $0x28] sm:$0xff]
        %v3920 = vld [vmem:[%s3913 + $0x30] sm:$0xff]
        %v3921 = vld [vmem:[%s3913 + $0x38] sm:$0xff]
        %v3922 = vld [vmem:[%s3913 + $0x40] sm:$0xff]
        %v3923 = vld [vmem:[%s3913 + $0x48] sm:$0xff]
        %v3924 = vld [vmem:[%s3913 + $0x50] sm:$0xff]
        %v3925 = vld [vmem:[%s3913 + $0x58] sm:$0xff]
        %v3926 = vld [vmem:[%s3913 + $0x60] sm:$0xff]
        %v3927 = vld [vmem:[%s3913 + $0x68] sm:$0xff]
        %v3928 = vld [vmem:[%s3913 + $0x70] sm:$0xff]
        %v3929 = vld [vmem:[%s3913 + $0x78] sm:$0xff]
        %3930 = vmatprep.subr.mxu0 0.0
        %3931 = vmatpush1.msra.mxu0 %v3914
        %3932 = vmatprep.subr.mxu0 0.0
        %3933 = vmatpush1.msra.mxu0 %v3915
        %3934 = vmatprep.subr.mxu0 0.0
        %3935 = vmatpush1.msra.mxu0 %v3916
        %3936 = vmatprep.subr.mxu0 0.0
        %3937 = vmatpush1.msra.mxu0 %v3917
        %3938 = vmatprep.subr.mxu0 0.0
        %3939 = vmatpush1.msra.mxu0 %v3918
        %3940 = vmatprep.subr.mxu0 0.0
        %3941 = vmatpush1.msra.mxu0 %v3919
        %3942 = vmatprep.subr.mxu0 0.0
        %3943 = vmatpush1.msra.mxu0 %v3920
        %3944 = vmatprep.subr.mxu0 0.0
        %3945 = vmatpush1.msra.mxu0 %v3921
        %3946 = vmatprep.subr.mxu0 0.0
        %3947 = vmatpush1.msra.mxu0 %v3922
        %3948 = vmatprep.subr.mxu0 0.0
        %3949 = vmatpush1.msra.mxu0 %v3923
        %3950 = vmatprep.subr.mxu0 0.0
        %3951 = vmatpush1.msra.mxu0 %v3924
        %3952 = vmatprep.subr.mxu0 0.0
        %3953 = vmatpush1.msra.mxu0 %v3925
        %3954 = vmatprep.subr.mxu0 0.0
        %3955 = vmatpush1.msra.mxu0 %v3926
        %3956 = vmatprep.subr.mxu0 0.0
        %3957 = vmatpush1.msra.mxu0 %v3927
        %3958 = vmatprep.subr.mxu0 0.0
        %3959 = vmatpush1.msra.mxu0 %v3928
        %3960 = vmatprep.subr.mxu0 0.0
        %3961 = vmatpush1.msra.mxu0 %v3929
        %3962 = vmatprep.subr.mxu0 0.0
        %3963 = vmatpush1.msra.mxu0 0.0
        %3964 = vmatprep.subr.mxu0 0.0
        %3965 = vmatpush1.msra.mxu0 0.0
        %3966 = vmatprep.subr.mxu0 0.0
        %3967 = vmatpush1.msra.mxu0 0.0
        %3968 = vmatprep.subr.mxu0 0.0
        %3969 = vmatpush1.msra.mxu0 0.0
        %3970 = vmatprep.subr.mxu0 0.0
        %3971 = vmatpush1.msra.mxu0 0.0
        %3972 = vmatprep.subr.mxu0 0.0
        %3973 = vmatpush1.msra.mxu0 0.0
        %3974 = vmatprep.subr.mxu0 0.0
        %3975 = vmatpush1.msra.mxu0 0.0
        %3976 = vmatprep.subr.mxu0 0.0
        %3977 = vmatpush1.msra.mxu0 0.0
        %3978 = vmatprep.subr.mxu0 0.0
        %3979 = vmatpush1.msra.mxu0 0.0
        %3980 = vmatprep.subr.mxu0 0.0
        %3981 = vmatpush1.msra.mxu0 0.0
        %3982 = vmatprep.subr.mxu0 0.0
        %3983 = vmatpush1.msra.mxu0 0.0
        %3984 = vmatprep.subr.mxu0 0.0
        %3985 = vmatpush1.msra.mxu0 0.0
        %3986 = vmatprep.subr.mxu0 0.0
        %3987 = vmatpush1.msra.mxu0 0.0
        %3988 = vmatprep.subr.mxu0 0.0
        %3989 = vmatpush1.msra.mxu0 0.0
        %3990 = vmatprep.subr.mxu0 0.0
        %3991 = vmatpush1.msra.mxu0 0.0
        %3992 = vmatprep.subr.mxu0 0.0
        %3993 = vmatpush1.msra.mxu0 0.0
        %3994 = vmatprep.mubr.f32.mxu0 0.0
        %3995 = vmatmul.mubr.f32.gmra.mrb[0].mxu0 %v3911
        %v3996 = vpop.f32.mrb[0].mxu0
        %v3997 = vadd.f32 0.0, %v3996
        %v3998 = vpop.f32.mrb[0].mxu0
        %3999 = vmatprep.mubr.f32.mxu0 0.0
        %4000 = vmatmul.mubr.f32.gmra.mrb[0].mxu0 %v3912
        %v4001 = vpop.f32.mrb[0].mxu0
        %v4002 = vadd.f32 0.0, %v4001
        %v4003 = vpop.f32.mrb[0].mxu0
        %4004 = vdwg.mxu0
        %v4005 = vadd.f32 %v3903, %v3997
        %v4006 = vadd.f32 %v3908, %v4002
        %4007 = vst [vmem:[#allocation2 + $0x8] sm:$0xff] %v4005
        %4008 = vst [vmem:[#allocation2 + $0x10] sm:$0xff] %v4006
        %v4009 = vld [vmem:[#allocation2 + $0x6] sm:$0xff]
        %v4010 = vld [vmem:[#allocation2 + $0xe] sm:$0xff]
        %s4011 = scalar_lea.vmem [#allocation3], 4736
        %v4012 = vld [vmem:[%s4011] sm:$0xff]
        %v4013 = vld [vmem:[%s4011 + $0x8] sm:$0xff]
        %v4014 = vld [vmem:[%s4011 + $0x10] sm:$0xff]
        %v4015 = vld [vmem:[%s4011 + $0x18] sm:$0xff]
        %v4016 = vld [vmem:[%s4011 + $0x20] sm:$0xff]
        %v4017 = vld [vmem:[%s4011 + $0x28] sm:$0xff]
        %v4018 = vld [vmem:[%s4011 + $0x30] sm:$0xff]
        %v4019 = vld [vmem:[%s4011 + $0x38] sm:$0xff]
        %v4020 = vld [vmem:[%s4011 + $0x40] sm:$0xff]
        %v4021 = vld [vmem:[%s4011 + $0x48] sm:$0xff]
        %v4022 = vld [vmem:[%s4011 + $0x50] sm:$0xff]
        %v4023 = vld [vmem:[%s4011 + $0x58] sm:$0xff]
        %v4024 = vld [vmem:[%s4011 + $0x60] sm:$0xff]
        %v4025 = vld [vmem:[%s4011 + $0x68] sm:$0xff]
        %v4026 = vld [vmem:[%s4011 + $0x70] sm:$0xff]
        %v4027 = vld [vmem:[%s4011 + $0x78] sm:$0xff]
        %v4028 = vld [vmem:[#allocation2 + $0x8] sm:$0xff]
        %v4029 = vld [vmem:[#allocation2 + $0x10] sm:$0xff]
        %s4030 = scalar_lea.vmem [#allocation3], 4864
        %v4031 = vld [vmem:[%s4030] sm:$0xff]
        %v4032 = vld [vmem:[%s4030 + $0x8] sm:$0xff]
        %v4033 = vld [vmem:[%s4030 + $0x10] sm:$0xff]
        %v4034 = vld [vmem:[%s4030 + $0x18] sm:$0xff]
        %v4035 = vld [vmem:[%s4030 + $0x20] sm:$0xff]
        %v4036 = vld [vmem:[%s4030 + $0x28] sm:$0xff]
        %v4037 = vld [vmem:[%s4030 + $0x30] sm:$0xff]
        %v4038 = vld [vmem:[%s4030 + $0x38] sm:$0xff]
        %v4039 = vld [vmem:[%s4030 + $0x40] sm:$0xff]
        %v4040 = vld [vmem:[%s4030 + $0x48] sm:$0xff]
        %v4041 = vld [vmem:[%s4030 + $0x50] sm:$0xff]
        %v4042 = vld [vmem:[%s4030 + $0x58] sm:$0xff]
        %v4043 = vld [vmem:[%s4030 + $0x60] sm:$0xff]
        %v4044 = vld [vmem:[%s4030 + $0x68] sm:$0xff]
        %v4045 = vld [vmem:[%s4030 + $0x70] sm:$0xff]
        %v4046 = vld [vmem:[%s4030 + $0x78] sm:$0xff]
        %4047 = vmatprep.subr.mxu0 0.0
        %4048 = vmatpush1.msra.mxu0 %v4031
        %4049 = vmatprep.subr.mxu0 0.0
        %4050 = vmatpush1.msra.mxu0 %v4032
        %4051 = vmatprep.subr.mxu0 0.0
        %4052 = vmatpush1.msra.mxu0 %v4033
        %4053 = vmatprep.subr.mxu0 0.0
        %4054 = vmatpush1.msra.mxu0 %v4034
        %4055 = vmatprep.subr.mxu0 0.0
        %4056 = vmatpush1.msra.mxu0 %v4035
        %4057 = vmatprep.subr.mxu0 0.0
        %4058 = vmatpush1.msra.mxu0 %v4036
        %4059 = vmatprep.subr.mxu0 0.0
        %4060 = vmatpush1.msra.mxu0 %v4037
        %4061 = vmatprep.subr.mxu0 0.0
        %4062 = vmatpush1.msra.mxu0 %v4038
        %4063 = vmatprep.subr.mxu0 0.0
        %4064 = vmatpush1.msra.mxu0 %v4039
        %4065 = vmatprep.subr.mxu0 0.0
        %4066 = vmatpush1.msra.mxu0 %v4040
        %4067 = vmatprep.subr.mxu0 0.0
        %4068 = vmatpush1.msra.mxu0 %v4041
        %4069 = vmatprep.subr.mxu0 0.0
        %4070 = vmatpush1.msra.mxu0 %v4042
        %4071 = vmatprep.subr.mxu0 0.0
        %4072 = vmatpush1.msra.mxu0 %v4043
        %4073 = vmatprep.subr.mxu0 0.0
        %4074 = vmatpush1.msra.mxu0 %v4044
        %4075 = vmatprep.subr.mxu0 0.0
        %4076 = vmatpush1.msra.mxu0 %v4045
        %4077 = vmatprep.subr.mxu0 0.0
        %4078 = vmatpush1.msra.mxu0 %v4046
        %4079 = vmatprep.subr.mxu0 0.0
        %4080 = vmatpush1.msra.mxu0 0.0
        %4081 = vmatprep.subr.mxu0 0.0
        %4082 = vmatpush1.msra.mxu0 0.0
        %4083 = vmatprep.subr.mxu0 0.0
        %4084 = vmatpush1.msra.mxu0 0.0
        %4085 = vmatprep.subr.mxu0 0.0
        %4086 = vmatpush1.msra.mxu0 0.0
        %4087 = vmatprep.subr.mxu0 0.0
        %4088 = vmatpush1.msra.mxu0 0.0
        %4089 = vmatprep.subr.mxu0 0.0
        %4090 = vmatpush1.msra.mxu0 0.0
        %4091 = vmatprep.subr.mxu0 0.0
        %4092 = vmatpush1.msra.mxu0 0.0
        %4093 = vmatprep.subr.mxu0 0.0
        %4094 = vmatpush1.msra.mxu0 0.0
        %4095 = vmatprep.subr.mxu0 0.0
        %4096 = vmatpush1.msra.mxu0 0.0
        %4097 = vmatprep.subr.mxu0 0.0
        %4098 = vmatpush1.msra.mxu0 0.0
        %4099 = vmatprep.subr.mxu0 0.0
        %4100 = vmatpush1.msra.mxu0 0.0
        %4101 = vmatprep.subr.mxu0 0.0
        %4102 = vmatpush1.msra.mxu0 0.0
        %4103 = vmatprep.subr.mxu0 0.0
        %4104 = vmatpush1.msra.mxu0 0.0
        %4105 = vmatprep.subr.mxu0 0.0
        %4106 = vmatpush1.msra.mxu0 0.0
        %4107 = vmatprep.subr.mxu0 0.0
        %4108 = vmatpush1.msra.mxu0 0.0
        %4109 = vmatprep.subr.mxu0 0.0
        %4110 = vmatpush1.msra.mxu0 0.0
        %4111 = vmatprep.mubr.f32.mxu0 0.0
        %4112 = vmatmul.mubr.f32.gmra.mrb[0].mxu0 %v4028
        %v4113 = vpop.f32.mrb[0].mxu0
        %v4114 = vadd.f32 0.0, %v4113
        %v4115 = vpop.f32.mrb[0].mxu0
        %4116 = vmatprep.mubr.f32.mxu0 0.0
        %4117 = vmatmul.mubr.f32.gmra.mrb[0].mxu0 %v4029
        %v4118 = vpop.f32.mrb[0].mxu0
        %v4119 = vadd.f32 0.0, %v4118
        %v4120 = vpop.f32.mrb[0].mxu0
        %4121 = vdwg.mxu0
        %4122 = vmatprep.subr.mxu0 0.0
        %4123 = vmatpush1.msra.mxu0 %v4012
        %4124 = vmatprep.subr.mxu0 0.0
        %4125 = vmatpush1.msra.mxu0 %v4013
        %4126 = vmatprep.subr.mxu0 0.0
        %4127 = vmatpush1.msra.mxu0 %v4014
        %4128 = vmatprep.subr.mxu0 0.0
        %4129 = vmatpush1.msra.mxu0 %v4015
        %4130 = vmatprep.subr.mxu0 0.0
        %4131 = vmatpush1.msra.mxu0 %v4016
        %4132 = vmatprep.subr.mxu0 0.0
        %4133 = vmatpush1.msra.mxu0 %v4017
        %4134 = vmatprep.subr.mxu0 0.0
        %4135 = vmatpush1.msra.mxu0 %v4018
        %4136 = vmatprep.subr.mxu0 0.0
        %4137 = vmatpush1.msra.mxu0 %v4019
        %4138 = vmatprep.subr.mxu0 0.0
        %4139 = vmatpush1.msra.mxu0 %v4020
        %4140 = vmatprep.subr.mxu0 0.0
        %4141 = vmatpush1.msra.mxu0 %v4021
        %4142 = vmatprep.subr.mxu0 0.0
        %4143 = vmatpush1.msra.mxu0 %v4022
        %4144 = vmatprep.subr.mxu0 0.0
        %4145 = vmatpush1.msra.mxu0 %v4023
        %4146 = vmatprep.subr.mxu0 0.0
        %4147 = vmatpush1.msra.mxu0 %v4024
        %4148 = vmatprep.subr.mxu0 0.0
        %4149 = vmatpush1.msra.mxu0 %v4025
        %4150 = vmatprep.subr.mxu0 0.0
        %4151 = vmatpush1.msra.mxu0 %v4026
        %4152 = vmatprep.subr.mxu0 0.0
        %4153 = vmatpush1.msra.mxu0 %v4027
        %4154 = vmatprep.subr.mxu0 0.0
        %4155 = vmatpush1.msra.mxu0 0.0
        %4156 = vmatprep.subr.mxu0 0.0
        %4157 = vmatpush1.msra.mxu0 0.0
        %4158 = vmatprep.subr.mxu0 0.0
        %4159 = vmatpush1.msra.mxu0 0.0
        %4160 = vmatprep.subr.mxu0 0.0
        %4161 = vmatpush1.msra.mxu0 0.0
        %4162 = vmatprep.subr.mxu0 0.0
        %4163 = vmatpush1.msra.mxu0 0.0
        %4164 = vmatprep.subr.mxu0 0.0
        %4165 = vmatpush1.msra.mxu0 0.0
        %4166 = vmatprep.subr.mxu0 0.0
        %4167 = vmatpush1.msra.mxu0 0.0
        %4168 = vmatprep.subr.mxu0 0.0
        %4169 = vmatpush1.msra.mxu0 0.0
        %4170 = vmatprep.subr.mxu0 0.0
        %4171 = vmatpush1.msra.mxu0 0.0
        %4172 = vmatprep.subr.mxu0 0.0
        %4173 = vmatpush1.msra.mxu0 0.0
        %4174 = vmatprep.subr.mxu0 0.0
        %4175 = vmatpush1.msra.mxu0 0.0
        %4176 = vmatprep.subr.mxu0 0.0
        %4177 = vmatpush1.msra.mxu0 0.0
        %4178 = vmatprep.subr.mxu0 0.0
        %4179 = vmatpush1.msra.mxu0 0.0
        %4180 = vmatprep.subr.mxu0 0.0
        %4181 = vmatpush1.msra.mxu0 0.0
        %4182 = vmatprep.subr.mxu0 0.0
        %4183 = vmatpush1.msra.mxu0 0.0
        %4184 = vmatprep.subr.mxu0 0.0
        %4185 = vmatpush1.msra.mxu0 0.0
        %4186 = vmatprep.mubr.f32.mxu0 0.0
        %4187 = vmatmul.mubr.f32.gmra.mrb[0].mxu0 %v4009
        %v4188 = vpop.f32.mrb[0].mxu0
        %v4189 = vadd.f32 %v4114, %v4188
        %v4190 = vpop.f32.mrb[0].mxu0
        %4191 = vmatprep.mubr.f32.mxu0 0.0
        %4192 = vmatmul.mubr.f32.gmra.mrb[0].mxu0 %v4010
        %v4193 = vpop.f32.mrb[0].mxu0
        %v4194 = vadd.f32 %v4119, %v4193
        %v4195 = vpop.f32.mrb[0].mxu0
        %4196 = vdwg.mxu0
        %v4197 = vld [vmem:[#allocation2 + $0xa] sm:$0xff]
        %v4198 = vld [vmem:[#allocation2 + $0x12] sm:$0xff]
        %s4199 = scalar_lea.vmem [#allocation3], 4992
        %v4200 = vld [vmem:[%s4199] sm:$0xff]
        %v4201 = vld [vmem:[%s4199 + $0x8] sm:$0xff]
        %v4202 = vld [vmem:[%s4199 + $0x10] sm:$0xff]
        %v4203 = vld [vmem:[%s4199 + $0x18] sm:$0xff]
        %v4204 = vld [vmem:[%s4199 + $0x20] sm:$0xff]
        %v4205 = vld [vmem:[%s4199 + $0x28] sm:$0xff]
        %v4206 = vld [vmem:[%s4199 + $0x30] sm:$0xff]
        %v4207 = vld [vmem:[%s4199 + $0x38] sm:$0xff]
        %v4208 = vld [vmem:[%s4199 + $0x40] sm:$0xff]
        %v4209 = vld [vmem:[%s4199 + $0x48] sm:$0xff]
        %v4210 = vld [vmem:[%s4199 + $0x50] sm:$0xff]
        %v4211 = vld [vmem:[%s4199 + $0x58] sm:$0xff]
        %v4212 = vld [vmem:[%s4199 + $0x60] sm:$0xff]
        %v4213 = vld [vmem:[%s4199 + $0x68] sm:$0xff]
        %v4214 = vld [vmem:[%s4199 + $0x70] sm:$0xff]
        %v4215 = vld [vmem:[%s4199 + $0x78] sm:$0xff]
        %4216 = vmatprep.subr.mxu0 0.0
        %4217 = vmatpush1.msra.mxu0 %v4200
        %4218 = vmatprep.subr.mxu0 0.0
        %4219 = vmatpush1.msra.mxu0 %v4201
        %4220 = vmatprep.subr.mxu0 0.0
        %4221 = vmatpush1.msra.mxu0 %v4202
        %4222 = vmatprep.subr.mxu0 0.0
        %4223 = vmatpush1.msra.mxu0 %v4203
        %4224 = vmatprep.subr.mxu0 0.0
        %4225 = vmatpush1.msra.mxu0 %v4204
        %4226 = vmatprep.subr.mxu0 0.0
        %4227 = vmatpush1.msra.mxu0 %v4205
        %4228 = vmatprep.subr.mxu0 0.0
        %4229 = vmatpush1.msra.mxu0 %v4206
        %4230 = vmatprep.subr.mxu0 0.0
        %4231 = vmatpush1.msra.mxu0 %v4207
        %4232 = vmatprep.subr.mxu0 0.0
        %4233 = vmatpush1.msra.mxu0 %v4208
        %4234 = vmatprep.subr.mxu0 0.0
        %4235 = vmatpush1.msra.mxu0 %v4209
        %4236 = vmatprep.subr.mxu0 0.0
        %4237 = vmatpush1.msra.mxu0 %v4210
        %4238 = vmatprep.subr.mxu0 0.0
        %4239 = vmatpush1.msra.mxu0 %v4211
        %4240 = vmatprep.subr.mxu0 0.0
        %4241 = vmatpush1.msra.mxu0 %v4212
        %4242 = vmatprep.subr.mxu0 0.0
        %4243 = vmatpush1.msra.mxu0 %v4213
        %4244 = vmatprep.subr.mxu0 0.0
        %4245 = vmatpush1.msra.mxu0 %v4214
        %4246 = vmatprep.subr.mxu0 0.0
        %4247 = vmatpush1.msra.mxu0 %v4215
        %4248 = vmatprep.subr.mxu0 0.0
        %4249 = vmatpush1.msra.mxu0 0.0
        %4250 = vmatprep.subr.mxu0 0.0
        %4251 = vmatpush1.msra.mxu0 0.0
        %4252 = vmatprep.subr.mxu0 0.0
        %4253 = vmatpush1.msra.mxu0 0.0
        %4254 = vmatprep.subr.mxu0 0.0
        %4255 = vmatpush1.msra.mxu0 0.0
        %4256 = vmatprep.subr.mxu0 0.0
        %4257 = vmatpush1.msra.mxu0 0.0
        %4258 = vmatprep.subr.mxu0 0.0
        %4259 = vmatpush1.msra.mxu0 0.0
        %4260 = vmatprep.subr.mxu0 0.0
        %4261 = vmatpush1.msra.mxu0 0.0
        %4262 = vmatprep.subr.mxu0 0.0
        %4263 = vmatpush1.msra.mxu0 0.0
        %4264 = vmatprep.subr.mxu0 0.0
        %4265 = vmatpush1.msra.mxu0 0.0
        %4266 = vmatprep.subr.mxu0 0.0
        %4267 = vmatpush1.msra.mxu0 0.0
        %4268 = vmatprep.subr.mxu0 0.0
        %4269 = vmatpush1.msra.mxu0 0.0
        %4270 = vmatprep.subr.mxu0 0.0
        %4271 = vmatpush1.msra.mxu0 0.0
        %4272 = vmatprep.subr.mxu0 0.0
        %4273 = vmatpush1.msra.mxu0 0.0
        %4274 = vmatprep.subr.mxu0 0.0
        %4275 = vmatpush1.msra.mxu0 0.0
        %4276 = vmatprep.subr.mxu0 0.0
        %4277 = vmatpush1.msra.mxu0 0.0
        %4278 = vmatprep.subr.mxu0 0.0
        %4279 = vmatpush1.msra.mxu0 0.0
        %4280 = vmatprep.mubr.f32.mxu0 0.0
        %4281 = vmatmul.mubr.f32.gmra.mrb[0].mxu0 %v4197
        %v4282 = vpop.f32.mrb[0].mxu0
        %v4283 = vadd.f32 0.0, %v4282
        %v4284 = vpop.f32.mrb[0].mxu0
        %4285 = vmatprep.mubr.f32.mxu0 0.0
        %4286 = vmatmul.mubr.f32.gmra.mrb[0].mxu0 %v4198
        %v4287 = vpop.f32.mrb[0].mxu0
        %v4288 = vadd.f32 0.0, %v4287
        %v4289 = vpop.f32.mrb[0].mxu0
        %4290 = vdwg.mxu0
        %v4291 = vadd.f32 %v4189, %v4283
        %v4292 = vadd.f32 %v4194, %v4288
        %s4293 = scalar_lea.vmem [#allocation5], 384
        %v4294 = vld [vmem:[%s4293] sm:$0xff]
        %v4295 = vld [vmem:[%s4293 + $0x8] sm:$0xff]
        %v4296 = vld [vmem:[%s4293 + $0x10] sm:$0xff]
        %v4297 = vld [vmem:[%s4293 + $0x18] sm:$0xff]
        %v4298 = vld [vmem:[%s4293 + $0x20] sm:$0xff]
        %v4299 = vld [vmem:[%s4293 + $0x28] sm:$0xff]
        %v4300 = vld [vmem:[%s4293 + $0x30] sm:$0xff]
        %v4301 = vld [vmem:[%s4293 + $0x38] sm:$0xff]
        %v4302 = vld [vmem:[%s4293 + $0x40] sm:$0xff]
        %v4303 = vld [vmem:[%s4293 + $0x48] sm:$0xff]
        %v4304 = vld [vmem:[%s4293 + $0x50] sm:$0xff]
        %v4305 = vld [vmem:[%s4293 + $0x58] sm:$0xff]
        %v4306 = vld [vmem:[%s4293 + $0x60] sm:$0xff]
        %v4307 = vld [vmem:[%s4293 + $0x68] sm:$0xff]
        %v4308 = vld [vmem:[%s4293 + $0x70] sm:$0xff]
        %v4309 = vld [vmem:[%s4293 + $0x78] sm:$0xff]
        %4310 = vmatprep.subr.mxu0 0.0
        %4311 = vmatpush1.msra.mxu0 %v4294
        %4312 = vmatprep.subr.mxu0 0.0
        %4313 = vmatpush1.msra.mxu0 %v4295
        %4314 = vmatprep.subr.mxu0 0.0
        %4315 = vmatpush1.msra.mxu0 %v4296
        %4316 = vmatprep.subr.mxu0 0.0
        %4317 = vmatpush1.msra.mxu0 %v4297
        %4318 = vmatprep.subr.mxu0 0.0
        %4319 = vmatpush1.msra.mxu0 %v4298
        %4320 = vmatprep.subr.mxu0 0.0
        %4321 = vmatpush1.msra.mxu0 %v4299
        %4322 = vmatprep.subr.mxu0 0.0
        %4323 = vmatpush1.msra.mxu0 %v4300
        %4324 = vmatprep.subr.mxu0 0.0
        %4325 = vmatpush1.msra.mxu0 %v4301
        %4326 = vmatprep.subr.mxu0 0.0
        %4327 = vmatpush1.msra.mxu0 %v4302
        %4328 = vmatprep.subr.mxu0 0.0
        %4329 = vmatpush1.msra.mxu0 %v4303
        %4330 = vmatprep.subr.mxu0 0.0
        %4331 = vmatpush1.msra.mxu0 %v4304
        %4332 = vmatprep.subr.mxu0 0.0
        %4333 = vmatpush1.msra.mxu0 %v4305
        %4334 = vmatprep.subr.mxu0 0.0
        %4335 = vmatpush1.msra.mxu0 %v4306
        %4336 = vmatprep.subr.mxu0 0.0
        %4337 = vmatpush1.msra.mxu0 %v4307
        %4338 = vmatprep.subr.mxu0 0.0
        %4339 = vmatpush1.msra.mxu0 %v4308
        %4340 = vmatprep.subr.mxu0 0.0
        %4341 = vmatpush1.msra.mxu0 %v4309
        %4342 = vmatprep.subr.mxu0 0.0
        %4343 = vmatpush1.msra.mxu0 0.0
        %4344 = vmatprep.subr.mxu0 0.0
        %4345 = vmatpush1.msra.mxu0 0.0
        %4346 = vmatprep.subr.mxu0 0.0
        %4347 = vmatpush1.msra.mxu0 0.0
        %4348 = vmatprep.subr.mxu0 0.0
        %4349 = vmatpush1.msra.mxu0 0.0
        %4350 = vmatprep.subr.mxu0 0.0
        %4351 = vmatpush1.msra.mxu0 0.0
        %4352 = vmatprep.subr.mxu0 0.0
        %4353 = vmatpush1.msra.mxu0 0.0
        %4354 = vmatprep.subr.mxu0 0.0
        %4355 = vmatpush1.msra.mxu0 0.0
        %4356 = vmatprep.subr.mxu0 0.0
        %4357 = vmatpush1.msra.mxu0 0.0
        %4358 = vmatprep.subr.mxu0 0.0
        %4359 = vmatpush1.msra.mxu0 0.0
        %4360 = vmatprep.subr.mxu0 0.0
        %4361 = vmatpush1.msra.mxu0 0.0
        %4362 = vmatprep.subr.mxu0 0.0
        %4363 = vmatpush1.msra.mxu0 0.0
        %4364 = vmatprep.subr.mxu0 0.0
        %4365 = vmatpush1.msra.mxu0 0.0
        %4366 = vmatprep.subr.mxu0 0.0
        %4367 = vmatpush1.msra.mxu0 0.0
        %4368 = vmatprep.subr.mxu0 0.0
        %4369 = vmatpush1.msra.mxu0 0.0
        %4370 = vmatprep.subr.mxu0 0.0
        %4371 = vmatpush1.msra.mxu0 0.0
        %4372 = vmatprep.subr.mxu0 0.0
        %4373 = vmatpush1.msra.mxu0 0.0
        %4374 = vmatprep.mubr.f32.mxu0 0.0
        %4375 = vmatmul.mubr.f32.gmra.mrb[0].mxu0 %v4291
        %v4376 = vpop.f32.mrb[0].mxu0
        %v4377 = vadd.f32 0.0, %v4376
        %v4378 = vpop.f32.mrb[0].mxu0
        %4379 = vmatprep.mubr.f32.mxu0 0.0
        %4380 = vmatmul.mubr.f32.gmra.mrb[0].mxu0 %v4292
        %v4381 = vpop.f32.mrb[0].mxu0
        %v4382 = vadd.f32 0.0, %v4381
        %v4383 = vpop.f32.mrb[0].mxu0
        %4384 = vdwg.mxu0
        %v4385 = vadd.f32 %v3719, %v4377
        %v4386 = vadd.f32 %v3720, %v4382
        %4387 = vst [vmem:[#allocation2 + $0x8] sm:$0xff] %v203
        %4388 = vst [vmem:[#allocation2 + $0x10] sm:$0xff] %v204
        %v4389 = vld [vmem:[#allocation2 + $0x7] sm:$0xff]
        %v4390 = vld [vmem:[#allocation2 + $0xf] sm:$0xff]
        %s4391 = scalar_lea.vmem [#allocation3], 5120
        %v4392 = vld [vmem:[%s4391] sm:$0xff]
        %v4393 = vld [vmem:[%s4391 + $0x8] sm:$0xff]
        %v4394 = vld [vmem:[%s4391 + $0x10] sm:$0xff]
        %v4395 = vld [vmem:[%s4391 + $0x18] sm:$0xff]
        %v4396 = vld [vmem:[%s4391 + $0x20] sm:$0xff]
        %v4397 = vld [vmem:[%s4391 + $0x28] sm:$0xff]
        %v4398 = vld [vmem:[%s4391 + $0x30] sm:$0xff]
        %v4399 = vld [vmem:[%s4391 + $0x38] sm:$0xff]
        %v4400 = vld [vmem:[%s4391 + $0x40] sm:$0xff]
        %v4401 = vld [vmem:[%s4391 + $0x48] sm:$0xff]
        %v4402 = vld [vmem:[%s4391 + $0x50] sm:$0xff]
        %v4403 = vld [vmem:[%s4391 + $0x58] sm:$0xff]
        %v4404 = vld [vmem:[%s4391 + $0x60] sm:$0xff]
        %v4405 = vld [vmem:[%s4391 + $0x68] sm:$0xff]
        %v4406 = vld [vmem:[%s4391 + $0x70] sm:$0xff]
        %v4407 = vld [vmem:[%s4391 + $0x78] sm:$0xff]
        %v4408 = vld [vmem:[#allocation2 + $0x8] sm:$0xff]
        %v4409 = vld [vmem:[#allocation2 + $0x10] sm:$0xff]
        %s4410 = scalar_lea.vmem [#allocation3], 5248
        %v4411 = vld [vmem:[%s4410] sm:$0xff]
        %v4412 = vld [vmem:[%s4410 + $0x8] sm:$0xff]
        %v4413 = vld [vmem:[%s4410 + $0x10] sm:$0xff]
        %v4414 = vld [vmem:[%s4410 + $0x18] sm:$0xff]
        %v4415 = vld [vmem:[%s4410 + $0x20] sm:$0xff]
        %v4416 = vld [vmem:[%s4410 + $0x28] sm:$0xff]
        %v4417 = vld [vmem:[%s4410 + $0x30] sm:$0xff]
        %v4418 = vld [vmem:[%s4410 + $0x38] sm:$0xff]
        %v4419 = vld [vmem:[%s4410 + $0x40] sm:$0xff]
        %v4420 = vld [vmem:[%s4410 + $0x48] sm:$0xff]
        %v4421 = vld [vmem:[%s4410 + $0x50] sm:$0xff]
        %v4422 = vld [vmem:[%s4410 + $0x58] sm:$0xff]
        %v4423 = vld [vmem:[%s4410 + $0x60] sm:$0xff]
        %v4424 = vld [vmem:[%s4410 + $0x68] sm:$0xff]
        %v4425 = vld [vmem:[%s4410 + $0x70] sm:$0xff]
        %v4426 = vld [vmem:[%s4410 + $0x78] sm:$0xff]
        %4427 = vmatprep.subr.mxu0 0.0
        %4428 = vmatpush1.msra.mxu0 %v4411
        %4429 = vmatprep.subr.mxu0 0.0
        %4430 = vmatpush1.msra.mxu0 %v4412
        %4431 = vmatprep.subr.mxu0 0.0
        %4432 = vmatpush1.msra.mxu0 %v4413
        %4433 = vmatprep.subr.mxu0 0.0
        %4434 = vmatpush1.msra.mxu0 %v4414
        %4435 = vmatprep.subr.mxu0 0.0
        %4436 = vmatpush1.msra.mxu0 %v4415
        %4437 = vmatprep.subr.mxu0 0.0
        %4438 = vmatpush1.msra.mxu0 %v4416
        %4439 = vmatprep.subr.mxu0 0.0
        %4440 = vmatpush1.msra.mxu0 %v4417
        %4441 = vmatprep.subr.mxu0 0.0
        %4442 = vmatpush1.msra.mxu0 %v4418
        %4443 = vmatprep.subr.mxu0 0.0
        %4444 = vmatpush1.msra.mxu0 %v4419
        %4445 = vmatprep.subr.mxu0 0.0
        %4446 = vmatpush1.msra.mxu0 %v4420
        %4447 = vmatprep.subr.mxu0 0.0
        %4448 = vmatpush1.msra.mxu0 %v4421
        %4449 = vmatprep.subr.mxu0 0.0
        %4450 = vmatpush1.msra.mxu0 %v4422
        %4451 = vmatprep.subr.mxu0 0.0
        %4452 = vmatpush1.msra.mxu0 %v4423
        %4453 = vmatprep.subr.mxu0 0.0
        %4454 = vmatpush1.msra.mxu0 %v4424
        %4455 = vmatprep.subr.mxu0 0.0
        %4456 = vmatpush1.msra.mxu0 %v4425
        %4457 = vmatprep.subr.mxu0 0.0
        %4458 = vmatpush1.msra.mxu0 %v4426
        %4459 = vmatprep.subr.mxu0 0.0
        %4460 = vmatpush1.msra.mxu0 0.0
        %4461 = vmatprep.subr.mxu0 0.0
        %4462 = vmatpush1.msra.mxu0 0.0
        %4463 = vmatprep.subr.mxu0 0.0
        %4464 = vmatpush1.msra.mxu0 0.0
        %4465 = vmatprep.subr.mxu0 0.0
        %4466 = vmatpush1.msra.mxu0 0.0
        %4467 = vmatprep.subr.mxu0 0.0
        %4468 = vmatpush1.msra.mxu0 0.0
        %4469 = vmatprep.subr.mxu0 0.0
        %4470 = vmatpush1.msra.mxu0 0.0
        %4471 = vmatprep.subr.mxu0 0.0
        %4472 = vmatpush1.msra.mxu0 0.0
        %4473 = vmatprep.subr.mxu0 0.0
        %4474 = vmatpush1.msra.mxu0 0.0
        %4475 = vmatprep.subr.mxu0 0.0
        %4476 = vmatpush1.msra.mxu0 0.0
        %4477 = vmatprep.subr.mxu0 0.0
        %4478 = vmatpush1.msra.mxu0 0.0
        %4479 = vmatprep.subr.mxu0 0.0
        %4480 = vmatpush1.msra.mxu0 0.0
        %4481 = vmatprep.subr.mxu0 0.0
        %4482 = vmatpush1.msra.mxu0 0.0
        %4483 = vmatprep.subr.mxu0 0.0
        %4484 = vmatpush1.msra.mxu0 0.0
        %4485 = vmatprep.subr.mxu0 0.0
        %4486 = vmatpush1.msra.mxu0 0.0
        %4487 = vmatprep.subr.mxu0 0.0
        %4488 = vmatpush1.msra.mxu0 0.0
        %4489 = vmatprep.subr.mxu0 0.0
        %4490 = vmatpush1.msra.mxu0 0.0
        %4491 = vmatprep.mubr.f32.mxu0 0.0
        %4492 = vmatmul.mubr.f32.gmra.mrb[0].mxu0 %v4408
        %v4493 = vpop.f32.mrb[0].mxu0
        %v4494 = vadd.f32 0.0, %v4493
        %v4495 = vpop.f32.mrb[0].mxu0
        %4496 = vmatprep.mubr.f32.mxu0 0.0
        %4497 = vmatmul.mubr.f32.gmra.mrb[0].mxu0 %v4409
        %v4498 = vpop.f32.mrb[0].mxu0
        %v4499 = vadd.f32 0.0, %v4498
        %v4500 = vpop.f32.mrb[0].mxu0
        %4501 = vdwg.mxu0
        %4502 = vmatprep.subr.mxu0 0.0
        %4503 = vmatpush1.msra.mxu0 %v4392
        %4504 = vmatprep.subr.mxu0 0.0
        %4505 = vmatpush1.msra.mxu0 %v4393
        %4506 = vmatprep.subr.mxu0 0.0
        %4507 = vmatpush1.msra.mxu0 %v4394
        %4508 = vmatprep.subr.mxu0 0.0
        %4509 = vmatpush1.msra.mxu0 %v4395
        %4510 = vmatprep.subr.mxu0 0.0
        %4511 = vmatpush1.msra.mxu0 %v4396
        %4512 = vmatprep.subr.mxu0 0.0
        %4513 = vmatpush1.msra.mxu0 %v4397
        %4514 = vmatprep.subr.mxu0 0.0
        %4515 = vmatpush1.msra.mxu0 %v4398
        %4516 = vmatprep.subr.mxu0 0.0
        %4517 = vmatpush1.msra.mxu0 %v4399
        %4518 = vmatprep.subr.mxu0 0.0
        %4519 = vmatpush1.msra.mxu0 %v4400
        %4520 = vmatprep.subr.mxu0 0.0
        %4521 = vmatpush1.msra.mxu0 %v4401
        %4522 = vmatprep.subr.mxu0 0.0
        %4523 = vmatpush1.msra.mxu0 %v4402
        %4524 = vmatprep.subr.mxu0 0.0
        %4525 = vmatpush1.msra.mxu0 %v4403
        %4526 = vmatprep.subr.mxu0 0.0
        %4527 = vmatpush1.msra.mxu0 %v4404
        %4528 = vmatprep.subr.mxu0 0.0
        %4529 = vmatpush1.msra.mxu0 %v4405
        %4530 = vmatprep.subr.mxu0 0.0
        %4531 = vmatpush1.msra.mxu0 %v4406
        %4532 = vmatprep.subr.mxu0 0.0
        %4533 = vmatpush1.msra.mxu0 %v4407
        %4534 = vmatprep.subr.mxu0 0.0
        %4535 = vmatpush1.msra.mxu0 0.0
        %4536 = vmatprep.subr.mxu0 0.0
        %4537 = vmatpush1.msra.mxu0 0.0
        %4538 = vmatprep.subr.mxu0 0.0
        %4539 = vmatpush1.msra.mxu0 0.0
        %4540 = vmatprep.subr.mxu0 0.0
        %4541 = vmatpush1.msra.mxu0 0.0
        %4542 = vmatprep.subr.mxu0 0.0
        %4543 = vmatpush1.msra.mxu0 0.0
        %4544 = vmatprep.subr.mxu0 0.0
        %4545 = vmatpush1.msra.mxu0 0.0
        %4546 = vmatprep.subr.mxu0 0.0
        %4547 = vmatpush1.msra.mxu0 0.0
        %4548 = vmatprep.subr.mxu0 0.0
        %4549 = vmatpush1.msra.mxu0 0.0
        %4550 = vmatprep.subr.mxu0 0.0
        %4551 = vmatpush1.msra.mxu0 0.0
        %4552 = vmatprep.subr.mxu0 0.0
        %4553 = vmatpush1.msra.mxu0 0.0
        %4554 = vmatprep.subr.mxu0 0.0
        %4555 = vmatpush1.msra.mxu0 0.0
        %4556 = vmatprep.subr.mxu0 0.0
        %4557 = vmatpush1.msra.mxu0 0.0
        %4558 = vmatprep.subr.mxu0 0.0
        %4559 = vmatpush1.msra.mxu0 0.0
        %4560 = vmatprep.subr.mxu0 0.0
        %4561 = vmatpush1.msra.mxu0 0.0
        %4562 = vmatprep.subr.mxu0 0.0
        %4563 = vmatpush1.msra.mxu0 0.0
        %4564 = vmatprep.subr.mxu0 0.0
        %4565 = vmatpush1.msra.mxu0 0.0
        %4566 = vmatprep.mubr.f32.mxu0 0.0
        %4567 = vmatmul.mubr.f32.gmra.mrb[0].mxu0 %v4389
        %v4568 = vpop.f32.mrb[0].mxu0
        %v4569 = vadd.f32 %v4494, %v4568
        %v4570 = vpop.f32.mrb[0].mxu0
        %4571 = vmatprep.mubr.f32.mxu0 0.0
        %4572 = vmatmul.mubr.f32.gmra.mrb[0].mxu0 %v4390
        %v4573 = vpop.f32.mrb[0].mxu0
        %v4574 = vadd.f32 %v4499, %v4573
        %v4575 = vpop.f32.mrb[0].mxu0
        %4576 = vdwg.mxu0
        %v4577 = vld [vmem:[#allocation2 + $0x9] sm:$0xff]
        %v4578 = vld [vmem:[#allocation2 + $0x11] sm:$0xff]
        %s4579 = scalar_lea.vmem [#allocation3], 5376
        %v4580 = vld [vmem:[%s4579] sm:$0xff]
        %v4581 = vld [vmem:[%s4579 + $0x8] sm:$0xff]
        %v4582 = vld [vmem:[%s4579 + $0x10] sm:$0xff]
        %v4583 = vld [vmem:[%s4579 + $0x18] sm:$0xff]
        %v4584 = vld [vmem:[%s4579 + $0x20] sm:$0xff]
        %v4585 = vld [vmem:[%s4579 + $0x28] sm:$0xff]
        %v4586 = vld [vmem:[%s4579 + $0x30] sm:$0xff]
        %v4587 = vld [vmem:[%s4579 + $0x38] sm:$0xff]
        %v4588 = vld [vmem:[%s4579 + $0x40] sm:$0xff]
        %v4589 = vld [vmem:[%s4579 + $0x48] sm:$0xff]
        %v4590 = vld [vmem:[%s4579 + $0x50] sm:$0xff]
        %v4591 = vld [vmem:[%s4579 + $0x58] sm:$0xff]
        %v4592 = vld [vmem:[%s4579 + $0x60] sm:$0xff]
        %v4593 = vld [vmem:[%s4579 + $0x68] sm:$0xff]
        %v4594 = vld [vmem:[%s4579 + $0x70] sm:$0xff]
        %v4595 = vld [vmem:[%s4579 + $0x78] sm:$0xff]
        %4596 = vmatprep.subr.mxu0 0.0
        %4597 = vmatpush1.msra.mxu0 %v4580
        %4598 = vmatprep.subr.mxu0 0.0
        %4599 = vmatpush1.msra.mxu0 %v4581
        %4600 = vmatprep.subr.mxu0 0.0
        %4601 = vmatpush1.msra.mxu0 %v4582
        %4602 = vmatprep.subr.mxu0 0.0
        %4603 = vmatpush1.msra.mxu0 %v4583
        %4604 = vmatprep.subr.mxu0 0.0
        %4605 = vmatpush1.msra.mxu0 %v4584
        %4606 = vmatprep.subr.mxu0 0.0
        %4607 = vmatpush1.msra.mxu0 %v4585
        %4608 = vmatprep.subr.mxu0 0.0
        %4609 = vmatpush1.msra.mxu0 %v4586
        %4610 = vmatprep.subr.mxu0 0.0
        %4611 = vmatpush1.msra.mxu0 %v4587
        %4612 = vmatprep.subr.mxu0 0.0
        %4613 = vmatpush1.msra.mxu0 %v4588
        %4614 = vmatprep.subr.mxu0 0.0
        %4615 = vmatpush1.msra.mxu0 %v4589
        %4616 = vmatprep.subr.mxu0 0.0
        %4617 = vmatpush1.msra.mxu0 %v4590
        %4618 = vmatprep.subr.mxu0 0.0
        %4619 = vmatpush1.msra.mxu0 %v4591
        %4620 = vmatprep.subr.mxu0 0.0
        %4621 = vmatpush1.msra.mxu0 %v4592
        %4622 = vmatprep.subr.mxu0 0.0
        %4623 = vmatpush1.msra.mxu0 %v4593
        %4624 = vmatprep.subr.mxu0 0.0
        %4625 = vmatpush1.msra.mxu0 %v4594
        %4626 = vmatprep.subr.mxu0 0.0
        %4627 = vmatpush1.msra.mxu0 %v4595
        %4628 = vmatprep.subr.mxu0 0.0
        %4629 = vmatpush1.msra.mxu0 0.0
        %4630 = vmatprep.subr.mxu0 0.0
        %4631 = vmatpush1.msra.mxu0 0.0
        %4632 = vmatprep.subr.mxu0 0.0
        %4633 = vmatpush1.msra.mxu0 0.0
        %4634 = vmatprep.subr.mxu0 0.0
        %4635 = vmatpush1.msra.mxu0 0.0
        %4636 = vmatprep.subr.mxu0 0.0
        %4637 = vmatpush1.msra.mxu0 0.0
        %4638 = vmatprep.subr.mxu0 0.0
        %4639 = vmatpush1.msra.mxu0 0.0
        %4640 = vmatprep.subr.mxu0 0.0
        %4641 = vmatpush1.msra.mxu0 0.0
        %4642 = vmatprep.subr.mxu0 0.0
        %4643 = vmatpush1.msra.mxu0 0.0
        %4644 = vmatprep.subr.mxu0 0.0
        %4645 = vmatpush1.msra.mxu0 0.0
        %4646 = vmatprep.subr.mxu0 0.0
        %4647 = vmatpush1.msra.mxu0 0.0
        %4648 = vmatprep.subr.mxu0 0.0
        %4649 = vmatpush1.msra.mxu0 0.0
        %4650 = vmatprep.subr.mxu0 0.0
        %4651 = vmatpush1.msra.mxu0 0.0
        %4652 = vmatprep.subr.mxu0 0.0
        %4653 = vmatpush1.msra.mxu0 0.0
        %4654 = vmatprep.subr.mxu0 0.0
        %4655 = vmatpush1.msra.mxu0 0.0
        %4656 = vmatprep.subr.mxu0 0.0
        %4657 = vmatpush1.msra.mxu0 0.0
        %4658 = vmatprep.subr.mxu0 0.0
        %4659 = vmatpush1.msra.mxu0 0.0
        %4660 = vmatprep.mubr.f32.mxu0 0.0
        %4661 = vmatmul.mubr.f32.gmra.mrb[0].mxu0 %v4577
        %v4662 = vpop.f32.mrb[0].mxu0
        %v4663 = vadd.f32 0.0, %v4662
        %v4664 = vpop.f32.mrb[0].mxu0
        %4665 = vmatprep.mubr.f32.mxu0 0.0
        %4666 = vmatmul.mubr.f32.gmra.mrb[0].mxu0 %v4578
        %v4667 = vpop.f32.mrb[0].mxu0
        %v4668 = vadd.f32 0.0, %v4667
        %v4669 = vpop.f32.mrb[0].mxu0
        %4670 = vdwg.mxu0
        %v4671 = vadd.f32 %v4569, %v4663
        %v4672 = vadd.f32 %v4574, %v4668
        %s4673 = scalar_lea.vmem [#allocation5], 512
        %v4674 = vld [vmem:[%s4673] sm:$0xff]
        %v4675 = vld [vmem:[%s4673 + $0x8] sm:$0xff]
        %v4676 = vld [vmem:[%s4673 + $0x10] sm:$0xff]
        %v4677 = vld [vmem:[%s4673 + $0x18] sm:$0xff]
        %v4678 = vld [vmem:[%s4673 + $0x20] sm:$0xff]
        %v4679 = vld [vmem:[%s4673 + $0x28] sm:$0xff]
        %v4680 = vld [vmem:[%s4673 + $0x30] sm:$0xff]
        %v4681 = vld [vmem:[%s4673 + $0x38] sm:$0xff]
        %v4682 = vld [vmem:[%s4673 + $0x40] sm:$0xff]
        %v4683 = vld [vmem:[%s4673 + $0x48] sm:$0xff]
        %v4684 = vld [vmem:[%s4673 + $0x50] sm:$0xff]
        %v4685 = vld [vmem:[%s4673 + $0x58] sm:$0xff]
        %v4686 = vld [vmem:[%s4673 + $0x60] sm:$0xff]
        %v4687 = vld [vmem:[%s4673 + $0x68] sm:$0xff]
        %v4688 = vld [vmem:[%s4673 + $0x70] sm:$0xff]
        %v4689 = vld [vmem:[%s4673 + $0x78] sm:$0xff]
        %4690 = vmatprep.subr.mxu0 0.0
        %4691 = vmatpush1.msra.mxu0 %v4674
        %4692 = vmatprep.subr.mxu0 0.0
        %4693 = vmatpush1.msra.mxu0 %v4675
        %4694 = vmatprep.subr.mxu0 0.0
        %4695 = vmatpush1.msra.mxu0 %v4676
        %4696 = vmatprep.subr.mxu0 0.0
        %4697 = vmatpush1.msra.mxu0 %v4677
        %4698 = vmatprep.subr.mxu0 0.0
        %4699 = vmatpush1.msra.mxu0 %v4678
        %4700 = vmatprep.subr.mxu0 0.0
        %4701 = vmatpush1.msra.mxu0 %v4679
        %4702 = vmatprep.subr.mxu0 0.0
        %4703 = vmatpush1.msra.mxu0 %v4680
        %4704 = vmatprep.subr.mxu0 0.0
        %4705 = vmatpush1.msra.mxu0 %v4681
        %4706 = vmatprep.subr.mxu0 0.0
        %4707 = vmatpush1.msra.mxu0 %v4682
        %4708 = vmatprep.subr.mxu0 0.0
        %4709 = vmatpush1.msra.mxu0 %v4683
        %4710 = vmatprep.subr.mxu0 0.0
        %4711 = vmatpush1.msra.mxu0 %v4684
        %4712 = vmatprep.subr.mxu0 0.0
        %4713 = vmatpush1.msra.mxu0 %v4685
        %4714 = vmatprep.subr.mxu0 0.0
        %4715 = vmatpush1.msra.mxu0 %v4686
        %4716 = vmatprep.subr.mxu0 0.0
        %4717 = vmatpush1.msra.mxu0 %v4687
        %4718 = vmatprep.subr.mxu0 0.0
        %4719 = vmatpush1.msra.mxu0 %v4688
        %4720 = vmatprep.subr.mxu0 0.0
        %4721 = vmatpush1.msra.mxu0 %v4689
        %4722 = vmatprep.subr.mxu0 0.0
        %4723 = vmatpush1.msra.mxu0 0.0
        %4724 = vmatprep.subr.mxu0 0.0
        %4725 = vmatpush1.msra.mxu0 0.0
        %4726 = vmatprep.subr.mxu0 0.0
        %4727 = vmatpush1.msra.mxu0 0.0
        %4728 = vmatprep.subr.mxu0 0.0
        %4729 = vmatpush1.msra.mxu0 0.0
        %4730 = vmatprep.subr.mxu0 0.0
        %4731 = vmatpush1.msra.mxu0 0.0
        %4732 = vmatprep.subr.mxu0 0.0
        %4733 = vmatpush1.msra.mxu0 0.0
        %4734 = vmatprep.subr.mxu0 0.0
        %4735 = vmatpush1.msra.mxu0 0.0
        %4736 = vmatprep.subr.mxu0 0.0
        %4737 = vmatpush1.msra.mxu0 0.0
        %4738 = vmatprep.subr.mxu0 0.0
        %4739 = vmatpush1.msra.mxu0 0.0
        %4740 = vmatprep.subr.mxu0 0.0
        %4741 = vmatpush1.msra.mxu0 0.0
        %4742 = vmatprep.subr.mxu0 0.0
        %4743 = vmatpush1.msra.mxu0 0.0
        %4744 = vmatprep.subr.mxu0 0.0
        %4745 = vmatpush1.msra.mxu0 0.0
        %4746 = vmatprep.subr.mxu0 0.0
        %4747 = vmatpush1.msra.mxu0 0.0
        %4748 = vmatprep.subr.mxu0 0.0
        %4749 = vmatpush1.msra.mxu0 0.0
        %4750 = vmatprep.subr.mxu0 0.0
        %4751 = vmatpush1.msra.mxu0 0.0
        %4752 = vmatprep.subr.mxu0 0.0
        %4753 = vmatpush1.msra.mxu0 0.0
        %4754 = vmatprep.mubr.f32.mxu0 0.0
        %4755 = vmatmul.mubr.f32.gmra.mrb[0].mxu0 %v4671
        %v4756 = vpop.f32.mrb[0].mxu0
        %v4757 = vadd.f32 0.0, %v4756
        %v4758 = vpop.f32.mrb[0].mxu0
        %4759 = vmatprep.mubr.f32.mxu0 0.0
        %4760 = vmatmul.mubr.f32.gmra.mrb[0].mxu0 %v4672
        %v4761 = vpop.f32.mrb[0].mxu0
        %v4762 = vadd.f32 0.0, %v4761
        %v4763 = vpop.f32.mrb[0].mxu0
        %4764 = vdwg.mxu0
        %v4765 = vadd.f32 %v4385, %v4757
        %v4766 = vadd.f32 %v4386, %v4762
        %4767 = vst [vmem:[%s200] sm:$0xff] %v4765
        %4768 = vst [vmem:[%s200 + $0x8] sm:$0xff] %v4766
        %p4769 = scmp.lt.s32.totalorder %s16, 1
        %s4770 = scalar_select %p4769, %s16, 1
        %s4771 = smul.addr %s4770, 2
        %s4772 = smul.addr %s4771, 8
        %s4773 = scalar_lea.vmem %s3, %s4772
        // Predicated region
        $region41: #{dilated_forward.1} parent=31 // pred_check
          %p4774 = pneg %p102
        $region42: #{dilated_forward.1} parent=31 // pred_check_branch
          %4776 = sbr.rel (%p4774) target = $region44
        $region43: #{dilated_forward.1} parent=31 // pred_region
          _
        $region44: #{dilated_forward.1} parent=31 // pred_fallthru
          _
      $region32: #{dilated_forward.1} parent=5 // pred_fallthru
        _
      %p4777 = scmp.le.s32.totalorder 2, %s11
      // Predicated region
      $region45: #{dilated_forward.1} parent=5 // pred_check
        %p4778 = pneg %p4777
      $region46: #{dilated_forward.1} parent=5 // pred_check_branch
        %4780 = sbr.rel (%p4778) target = $region48
      $region47: #{dilated_forward.1} parent=5 // pred_region
        %s4781 = ssub.s32 %s11, 2
        // Predicated region
        $region49: #{dilated_forward.1} parent=47 // pred_check
          %p4782 = pneg %p108
        $region50: #{dilated_forward.1} parent=47 // pred_check_branch
          %4784 = sbr.rel (%p4782) target = $region52
        $region51: #{dilated_forward.1} parent=47 // pred_region
          %p4785 = scmp.lt.s32.totalorder %s17, 1
          %s4786 = scalar_select %p4785, %s17, 1
          %s4787 = smul.addr %s4786, 2
          %s4788 = smul.addr %s4787, 8
          %s4789 = scalar_lea.vmem %s3, %s4788
        $region52: #{dilated_forward.1} parent=47 // pred_fallthru
          _
      $region48: #{dilated_forward.1} parent=5 // pred_fallthru
        _
    $region6: #{dilated_forward.1} parent=1 // loop_footer
      %s15 = sadd.s32 1, %s11
    $region7: #{dilated_forward.1} parent=1 // loop_footer_branch
      %10 = sbr.rel target = $region3
    $region8: #{dilated_forward.1} parent=1 // loop_exit
      _
    %4790 = vsyncpa [#allocation4], 1
    %s4791 = scalar_lea.sflag [#allocation4], 1
    %4792 = vsyncpa %s4791, 1
    %4793 = vsyncpa [#allocation6], 1

</llo_original>
